<compile_context>
chip_gen: v6e
topology: v6e:2x2x1
jax: 0.10.0
libtpu: 0.0.40
codegen_flags: <defaults>
</compile_context>

<pallas_src>
import functools

import jax
import jax.numpy as jnp
from jax import lax
from jax.experimental import pallas as pl
from jax.experimental.pallas import tpu as pltpu


def _round_up(x, m):
    return ((x + m - 1) // m) * m


def _lstm_fc_kernel(x_ref, wih_ref, whh_ref, b_ref, wfc_ref, bfc_ref,
                    out_ref, seq_ref, pg_ref, h_ref, c_ref,
                    *, seq_len, batch_pad, gate_pad, feat_pad, num_layers):
    """Multi-layer LSTM over time + final FC, fully resident in VMEM.

    All sequence buffers are 2-D: rows = t * Bp + b (time-major, batch padded
    to a sublane multiple), lanes = features / gates padded to 128-lane
    multiples so every slice is vreg aligned.

    x_ref   : (T*Bp, Dpad)    padded input sequence
    wih_ref : (L, Dpad, 4G)   input-hidden weights, gate-major, lane padded
    whh_ref : (L, G, 4G)      hidden-hidden weights, gate-major, lane padded
    b_ref   : (L, 1, 4G)      combined bias (b_ih + b_hh), lane padded
    wfc_ref : (G, O)          fc weight (rows >= H are zero)
    bfc_ref : (1, O)          fc bias
    out_ref : (Bp, O)
    seq_ref : (T*Bp, Dpad)    scratch - inter-layer activation sequence
    pg_ref  : (T*Bp, 4G)      scratch - precomputed x @ W_ih + bias (per layer)
    h_ref   : (Bp, G)         scratch - hidden state
    c_ref   : (Bp, G)         scratch - cell state
    """
    T, Bp, G = seq_len, batch_pad, gate_pad

    # seq scratch is uninitialized VMEM: zero the lane-pad region once so the
    # zero weight rows never multiply stale NaN/Inf bits (NaN*0 = NaN).
    if num_layers > 1 and feat_pad > G:
        seq_ref[:, G:] = jnp.zeros((T * Bp, feat_pad - G), jnp.float32)

    for l in range(num_layers):                       # static layer loop
        whh = whh_ref[l]                              # (G, 4G)

        # Hoisted input-hidden matmul: all timesteps in one MXU op, bias
        # folded in.  Layer 0 reads the input directly (no copy into seq).
        src = x_ref if l == 0 else seq_ref
        pg_ref[...] = (jnp.dot(src[...], wih_ref[l],
                               preferred_element_type=jnp.float32)
                       + b_ref[l])

        h_ref[...] = jnp.zeros_like(h_ref)
        c_ref[...] = jnp.zeros_like(c_ref)

        last_layer = (l == num_layers - 1)

        def step(t, carry, whh=whh, last_layer=last_layer):
            row0 = pl.multiple_of(t * Bp, Bp)          # sublane-aligned rows
            h = h_ref[...]
            gates = (pg_ref[pl.ds(row0, Bp), :]
                     + jnp.dot(h, whh, preferred_element_type=jnp.float32))
            # PyTorch gate order i, f, g, o; each gate occupies a full
            # 128-lane-aligned block of width G.
            i_g = jax.nn.sigmoid(gates[:, 0 * G:1 * G])
            f_g = jax.nn.sigmoid(gates[:, 1 * G:2 * G])
            g_g = jnp.tanh(gates[:, 2 * G:3 * G])
            o_g = jax.nn.sigmoid(gates[:, 3 * G:4 * G])
            c_new = f_g * c_ref[...] + i_g * g_g
            h_new = o_g * jnp.tanh(c_new)
            h_ref[...] = h_new
            c_ref[...] = c_new
            if not last_layer:                         # static: skip on last layer
                seq_ref[pl.ds(row0, Bp), pl.ds(0, G)] = h_new
            return carry

        lax.fori_loop(0, T, step, 0, unroll=True)

    # fc on the final hidden state; pad lanes of h are exactly zero and the
    # matching wfc rows are zero, so the full-width dot is exact.
    out_ref[...] = (jnp.dot(h_ref[...], wfc_ref[...],
                            preferred_element_type=jnp.float32)
                    + bfc_ref[...])


def lstm_predictor_forward(x, params, *, hidden_size, num_layers, output_size):
    """Matches LSTMPredictor.forward: x (B, T, input_size) -> (B, output_size)."""
    B, T, I = x.shape
    H = hidden_size
    G = _round_up(H, 128)                 # per-gate lane-padded width
    Dpad = max(_round_up(I, 128), G)      # padded feature width of seq buffers
    Bp = _round_up(B, 8)                  # sublane-padded batch

    def pack_gate_cols(w_t):              # (rows, 4H) -> (rows, 4G), gate-major
        rows = w_t.shape[0]
        out = jnp.zeros((rows, 4 * G), jnp.float32)
        for k in range(4):
            out = out.at[:, k * G:k * G + H].set(w_t[:, k * H:(k + 1) * H])
        return out

    wih_t = jnp.zeros((num_layers, Dpad, 4 * G), jnp.float32)
    whh_t = jnp.zeros((num_layers, G, 4 * G), jnp.float32)
    bias = jnp.zeros((num_layers, 1, 4 * G), jnp.float32)
    for l in range(num_layers):
        w_ih = params[f"weight_ih_l{l}"].astype(jnp.float32)    # (4H, in_l)
        w_hh = params[f"weight_hh_l{l}"].astype(jnp.float32)    # (4H, H)
        in_l = w_ih.shape[1]
        wih_t = wih_t.at[l, :in_l, :].set(pack_gate_cols(w_ih.T))
        whh_t = whh_t.at[l, :H, :].set(pack_gate_cols(w_hh.T))
        b = (params[f"bias_ih_l{l}"] + params[f"bias_hh_l{l}"]).astype(jnp.float32)
        bias = bias.at[l, 0, :].set(pack_gate_cols(b[None, :])[0])
    wfc = jnp.zeros((G, output_size), jnp.float32).at[:H, :].set(
        params["fc_weight"].T.astype(jnp.float32))
    bfc = params["fc_bias"].astype(jnp.float32)[None, :]

    # (B, T, I) -> time-major, batch/feature padded, flattened to 2-D rows.
    x_tm = jnp.transpose(x, (1, 0, 2)).astype(jnp.float32)      # (T, B, I)
    x2d = jnp.zeros((T, Bp, Dpad), jnp.float32).at[:, :B, :I].set(x_tm)
    x2d = x2d.reshape(T * Bp, Dpad)

    # Inter-layer seq scratch only needed for >1 layers; use a tiny dummy else.
    seq_rows = T * Bp if num_layers > 1 else 8
    seq_cols = Dpad if num_layers > 1 else 128

    kernel = functools.partial(_lstm_fc_kernel, seq_len=T, batch_pad=Bp,
                               gate_pad=G, feat_pad=Dpad, num_layers=num_layers)

    # Explicit VMEM budget (everything resident) + cost hint for XLA.
    buf_elems = (x2d.size + wih_t.size + whh_t.size + bias.size + wfc.size
                 + bfc.size + Bp * output_size + seq_rows * seq_cols
                 + T * Bp * 4 * G + 2 * Bp * G)
    buf_bytes = 4 * buf_elems
    vmem_limit = int(min(max(2 * buf_bytes + (4 << 20), 16 << 20), 32 << 20))

    flops = (num_layers * (2 * T * Bp * Dpad * 4 * G
                           + 2 * T * Bp * G * 4 * G
                           + 12 * T * Bp * G)
             + 2 * Bp * G * output_size)
    cost = pl.CostEstimate(flops=flops,
                           transcendentals=num_layers * T * Bp * 5 * G,
                           bytes_accessed=int(buf_bytes))

    vmem = pl.BlockSpec(memory_space=pltpu.MemorySpace.VMEM)
    out = pl.pallas_call(
        kernel,
        out_shape=jax.ShapeDtypeStruct((Bp, output_size), jnp.float32),
        in_specs=[vmem] * 6,
        out_specs=vmem,
        scratch_shapes=[
            pltpu.VMEM((seq_rows, seq_cols), jnp.float32),   # inter-layer seq
            pltpu.VMEM((T * Bp, 4 * G), jnp.float32),        # pre-gates
            pltpu.VMEM((Bp, G), jnp.float32),                # h
            pltpu.VMEM((Bp, G), jnp.float32),                # c
        ],
        compiler_params=pltpu.CompilerParams(vmem_limit_bytes=vmem_limit),
        cost_estimate=cost,
    )(x2d, wih_t, whh_t, bias, wfc, bfc)
    # TODO(synk): for large B on v7x, add a batch grid axis with
    # dimension_semantics=("parallel",) to use both TensorCores.
    return out[:B]


def _reference_forward(x, params, *, hidden_size, num_layers):
    """Pure-JAX reference matching torch.nn.LSTM + Linear semantics."""
    B, T, _ = x.shape
    H = hidden_size
    seq = x.astype(jnp.float32)
    for l in range(num_layers):
        w_ih = params[f"weight_ih_l{l}"]
        w_hh = params[f"weight_hh_l{l}"]
        b = params[f"bias_ih_l{l}"] + params[f"bias_hh_l{l}"]
        h = jnp.zeros((B, H), jnp.float32)
        c = jnp.zeros((B, H), jnp.float32)
        outs = []
        for t in range(T):
            gates = seq[:, t, :] @ w_ih.T + h @ w_hh.T + b
            i = jax.nn.sigmoid(gates[:, :H])
            f = jax.nn.sigmoid(gates[:, H:2 * H])
            g = jnp.tanh(gates[:, 2 * H:3 * H])
            o = jax.nn.sigmoid(gates[:, 3 * H:])
            c = f * c + i * g
            h = o * jnp.tanh(c)
            outs.append(h)
        seq = jnp.stack(outs, axis=1)
    return seq[:, -1, :] @ params["fc_weight"].T + params["fc_bias"]


def _init_params(key, input_size, hidden_size, num_layers, output_size):
    """Deterministic init mirroring PyTorch shapes (uniform(-1/sqrt(H), 1/sqrt(H)))."""
    k = 1.0 / jnp.sqrt(jnp.float32(hidden_size))
    params = {}
    for l in range(num_layers):
        in_l = input_size if l == 0 else hidden_size
        key, k1, k2, k3, k4 = jax.random.split(key, 5)
        params[f"weight_ih_l{l}"] = jax.random.uniform(
            k1, (4 * hidden_size, in_l), jnp.float32, -k, k)
        params[f"weight_hh_l{l}"] = jax.random.uniform(
            k2, (4 * hidden_size, hidden_size), jnp.float32, -k, k)
        params[f"bias_ih_l{l}"] = jax.random.uniform(
            k3, (4 * hidden_size,), jnp.float32, -k, k)
        params[f"bias_hh_l{l}"] = jax.random.uniform(
            k4, (4 * hidden_size,), jnp.float32, -k, k)
    key, k5, k6 = jax.random.split(key, 3)
    kf = 1.0 / jnp.sqrt(jnp.float32(hidden_size))
    params["fc_weight"] = jax.random.uniform(
        k5, (output_size, hidden_size), jnp.float32, -kf, kf)
    params["fc_bias"] = jax.random.uniform(
        k6, (output_size,), jnp.float32, -kf, kf)
    return params


if __name__ == "__main__":
    B, T = 2, 8
    INPUT_SIZE, HIDDEN_SIZE, NUM_LAYERS, OUTPUT_SIZE = 16, 32, 2, 4

    root = jax.random.PRNGKey(0)
    kx, kp = jax.random.split(root)
    x = jax.random.normal(kx, (B, T, INPUT_SIZE), jnp.float32)
    params = _init_params(kp, INPUT_SIZE, HIDDEN_SIZE, NUM_LAYERS, OUTPUT_SIZE)

    out = lstm_predictor_forward(
        x, params,
        hidden_size=HIDDEN_SIZE, num_layers=NUM_LAYERS, output_size=OUTPUT_SIZE)
    out = jax.block_until_ready(out)

    ref = _reference_forward(x, params,
                             hidden_size=HIDDEN_SIZE, num_layers=NUM_LAYERS)
    assert out.shape == (B, OUTPUT_SIZE)
    assert jnp.allclose(out, ref, rtol=1e-4, atol=1e-4), (out, ref)
    print("KERNEL_OK")
</pallas_src>

<mosaic_0001>
module attributes {stable_mosaic.version = 11 : i64} {
  func.func @_lstm_fc_kernel(%arg0: memref<64x128xf32, #tpu.memory_space<vmem>>, %arg1: memref<2x128x512xf32, #tpu.memory_space<vmem>>, %arg2: memref<2x128x512xf32, #tpu.memory_space<vmem>>, %arg3: memref<2x1x512xf32, #tpu.memory_space<vmem>>, %arg4: memref<128x4xf32, #tpu.memory_space<vmem>>, %arg5: memref<1x4xf32, #tpu.memory_space<vmem>>, %arg6: memref<8x4xf32, #tpu.memory_space<vmem>>, %arg7: memref<64x128xf32, #tpu.memory_space<vmem>>, %arg8: memref<64x512xf32, #tpu.memory_space<vmem>>, %arg9: memref<8x128xf32, #tpu.memory_space<vmem>>, %arg10: memref<8x128xf32, #tpu.memory_space<vmem>>) attributes {dimension_semantics = [], scalar_prefetch = 0 : i64, scratch_operands = 4 : i64, tpu.core_type = #tpu.core_type<tc>} {
    %c0 = arith.constant 0 : index
    %c0_0 = arith.constant 0 : index
    %c0_1 = arith.constant 0 : index
    %0 = vector.load %arg2[%c0, %c0_0, %c0_1] : memref<2x128x512xf32, #tpu.memory_space<vmem>>, vector<1x128x512xf32>
    %1 = vector.shape_cast %0 : vector<1x128x512xf32> to vector<128x512xf32>
    %c0_2 = arith.constant 0 : index
    %c0_3 = arith.constant 0 : index
    %2 = vector.load %arg0[%c0_2, %c0_3] : memref<64x128xf32, #tpu.memory_space<vmem>>, vector<64x128xf32>
    %c0_4 = arith.constant 0 : index
    %c0_5 = arith.constant 0 : index
    %c0_6 = arith.constant 0 : index
    %3 = vector.load %arg1[%c0_4, %c0_5, %c0_6] : memref<2x128x512xf32, #tpu.memory_space<vmem>>, vector<1x128x512xf32>
    %4 = vector.shape_cast %3 : vector<1x128x512xf32> to vector<128x512xf32>
    %cst = arith.constant dense<0.000000e+00> : vector<64x512xf32>
    %5 = tpu.matmul %2, %4, %cst {dimension_numbers = #tpu.dot_dimension_numbers<[1], [0], [0], [1], [0, 0, 1, 1], [], []>} : vector<64x128xf32>, vector<128x512xf32>, vector<64x512xf32> -> vector<64x512xf32>
    %c0_7 = arith.constant 0 : index
    %c0_8 = arith.constant 0 : index
    %c0_9 = arith.constant 0 : index
    %6 = vector.load %arg3[%c0_7, %c0_8, %c0_9] : memref<2x1x512xf32, #tpu.memory_space<vmem>>, vector<1x1x512xf32>
    %7 = vector.shape_cast %6 : vector<1x1x512xf32> to vector<1x512xf32>
    %8 = vector.broadcast %7 : vector<1x512xf32> to vector<64x512xf32>
    %9 = arith.addf %5, %8 : vector<64x512xf32>
    %c0_10 = arith.constant 0 : index
    %c0_11 = arith.constant 0 : index
    %10 = vector.load %arg8[%c0_10, %c0_11] : memref<64x512xf32, #tpu.memory_space<vmem>>, vector<64x512xf32>
    tpu.vector_store %arg8[%c0_10, %c0_11], %9 {strides = array<i32>} : memref<64x512xf32, #tpu.memory_space<vmem>>, vector<64x512xf32>,
    %cst_12 = arith.constant 0.000000e+00 : f32
    %11 = vector.broadcast %cst_12 : f32 to vector<8x128xf32>
    %c0_13 = arith.constant 0 : index
    %c0_14 = arith.constant 0 : index
    %12 = vector.load %arg9[%c0_13, %c0_14] : memref<8x128xf32, #tpu.memory_space<vmem>>, vector<8x128xf32>
    tpu.vector_store %arg9[%c0_13, %c0_14], %11 {strides = array<i32>} : memref<8x128xf32, #tpu.memory_space<vmem>>, vector<8x128xf32>,
    %cst_15 = arith.constant 0.000000e+00 : f32
    %13 = vector.broadcast %cst_15 : f32 to vector<8x128xf32>
    %c0_16 = arith.constant 0 : index
    %c0_17 = arith.constant 0 : index
    %14 = vector.load %arg10[%c0_16, %c0_17] : memref<8x128xf32, #tpu.memory_space<vmem>>, vector<8x128xf32>
    tpu.vector_store %arg10[%c0_16, %c0_17], %13 {strides = array<i32>} : memref<8x128xf32, #tpu.memory_space<vmem>>, vector<8x128xf32>,
    %c0_i32 = arith.constant 0 : i32
    %c8_i32 = arith.constant 8 : i32
    %15 = arith.muli %c0_i32, %c8_i32 : i32
    %16 = tpu.assume_multiple %15, 8 : i32
    %c0_18 = arith.constant 0 : index
    %c0_19 = arith.constant 0 : index
    %17 = vector.load %arg9[%c0_18, %c0_19] : memref<8x128xf32, #tpu.memory_space<vmem>>, vector<8x128xf32>
    %18 = arith.index_cast %16 : i32 to index
    %c0_20 = arith.constant 0 : index
    %19 = vector.load %arg8[%18, %c0_20] : memref<64x512xf32, #tpu.memory_space<vmem>>, vector<8x512xf32>
    %cst_21 = arith.constant dense<0.000000e+00> : vector<8x512xf32>
    %20 = tpu.matmul %17, %1, %cst_21 {dimension_numbers = #tpu.dot_dimension_numbers<[1], [0], [0], [1], [0, 0, 1, 1], [], []>} : vector<8x128xf32>, vector<128x512xf32>, vector<8x512xf32> -> vector<8x512xf32>
    %21 = arith.addf %19, %20 : vector<8x512xf32>
    %22 = vector.extract_strided_slice %21 {offsets = [0, 0], sizes = [8, 128], strides = [1, 1]} : vector<8x512xf32> to vector<8x128xf32>
    %23 = arith.negf %22 : vector<8x128xf32>
    %24 = math.exp %23 : vector<8x128xf32>
    %cst_22 = arith.constant 1.000000e+00 : f32
    %25 = vector.broadcast %cst_22 : f32 to vector<8x128xf32>
    %26 = arith.addf %25, %24 : vector<8x128xf32>
    %27 = arith.divf %25, %26 : vector<8x128xf32>
    %28 = vector.extract_strided_slice %21 {offsets = [0, 128], sizes = [8, 128], strides = [1, 1]} : vector<8x512xf32> to vector<8x128xf32>
    %29 = arith.negf %28 : vector<8x128xf32>
    %30 = math.exp %29 : vector<8x128xf32>
    %cst_23 = arith.constant 1.000000e+00 : f32
    %31 = vector.broadcast %cst_23 : f32 to vector<8x128xf32>
    %32 = arith.addf %31, %30 : vector<8x128xf32>
    %33 = arith.divf %31, %32 : vector<8x128xf32>
    %34 = vector.extract_strided_slice %21 {offsets = [0, 256], sizes = [8, 128], strides = [1, 1]} : vector<8x512xf32> to vector<8x128xf32>
    %35 = math.tanh %34 : vector<8x128xf32>
    %36 = vector.extract_strided_slice %21 {offsets = [0, 384], sizes = [8, 128], strides = [1, 1]} : vector<8x512xf32> to vector<8x128xf32>
    %37 = arith.negf %36 : vector<8x128xf32>
    %38 = math.exp %37 : vector<8x128xf32>
    %cst_24 = arith.constant 1.000000e+00 : f32
    %39 = vector.broadcast %cst_24 : f32 to vector<8x128xf32>
    %40 = arith.addf %39, %38 : vector<8x128xf32>
    %41 = arith.divf %39, %40 : vector<8x128xf32>
    %c0_25 = arith.constant 0 : index
    %c0_26 = arith.constant 0 : index
    %42 = vector.load %arg10[%c0_25, %c0_26] : memref<8x128xf32, #tpu.memory_space<vmem>>, vector<8x128xf32>
    %43 = arith.mulf %33, %42 : vector<8x128xf32>
    %44 = arith.mulf %27, %35 : vector<8x128xf32>
    %45 = arith.addf %43, %44 : vector<8x128xf32>
    %46 = math.tanh %45 : vector<8x128xf32>
    %47 = arith.mulf %41, %46 : vector<8x128xf32>
    %c0_27 = arith.constant 0 : index
    %c0_28 = arith.constant 0 : index
    %48 = vector.load %arg9[%c0_27, %c0_28] : memref<8x128xf32, #tpu.memory_space<vmem>>, vector<8x128xf32>
    tpu.vector_store %arg9[%c0_27, %c0_28], %47 {strides = array<i32>} : memref<8x128xf32, #tpu.memory_space<vmem>>, vector<8x128xf32>,
    %c0_29 = arith.constant 0 : index
    %c0_30 = arith.constant 0 : index
    %49 = vector.load %arg10[%c0_29, %c0_30] : memref<8x128xf32, #tpu.memory_space<vmem>>, vector<8x128xf32>
    tpu.vector_store %arg10[%c0_29, %c0_30], %45 {strides = array<i32>} : memref<8x128xf32, #tpu.memory_space<vmem>>, vector<8x128xf32>,
    %50 = arith.index_cast %16 : i32 to index
    %c0_31 = arith.constant 0 : index
    %51 = vector.load %arg7[%50, %c0_31] : memref<64x128xf32, #tpu.memory_space<vmem>>, vector<8x128xf32>
    tpu.vector_store %arg7[%50, %c0_31], %47 {strides = array<i32>} : memref<64x128xf32, #tpu.memory_space<vmem>>, vector<8x128xf32>,
    %c1_i32 = arith.constant 1 : i32
    %c8_i32_32 = arith.constant 8 : i32
    %52 = arith.muli %c1_i32, %c8_i32_32 : i32
    %53 = tpu.assume_multiple %52, 8 : i32
    %c0_33 = arith.constant 0 : index
    %c0_34 = arith.constant 0 : index
    %54 = vector.load %arg9[%c0_33, %c0_34] : memref<8x128xf32, #tpu.memory_space<vmem>>, vector<8x128xf32>
    %55 = arith.index_cast %53 : i32 to index
    %c0_35 = arith.constant 0 : index
    %56 = vector.load %arg8[%55, %c0_35] : memref<64x512xf32, #tpu.memory_space<vmem>>, vector<8x512xf32>
    %cst_36 = arith.constant dense<0.000000e+00> : vector<8x512xf32>
    %57 = tpu.matmul %54, %1, %cst_36 {dimension_numbers = #tpu.dot_dimension_numbers<[1], [0], [0], [1], [0, 0, 1, 1], [], []>} : vector<8x128xf32>, vector<128x512xf32>, vector<8x512xf32> -> vector<8x512xf32>
    %58 = arith.addf %56, %57 : vector<8x512xf32>
    %59 = vector.extract_strided_slice %58 {offsets = [0, 0], sizes = [8, 128], strides = [1, 1]} : vector<8x512xf32> to vector<8x128xf32>
    %60 = arith.negf %59 : vector<8x128xf32>
    %61 = math.exp %60 : vector<8x128xf32>
    %cst_37 = arith.constant 1.000000e+00 : f32
    %62 = vector.broadcast %cst_37 : f32 to vector<8x128xf32>
    %63 = arith.addf %62, %61 : vector<8x128xf32>
    %64 = arith.divf %62, %63 : vector<8x128xf32>
    %65 = vector.extract_strided_slice %58 {offsets = [0, 128], sizes = [8, 128], strides = [1, 1]} : vector<8x512xf32> to vector<8x128xf32>
    %66 = arith.negf %65 : vector<8x128xf32>
    %67 = math.exp %66 : vector<8x128xf32>
    %cst_38 = arith.constant 1.000000e+00 : f32
    %68 = vector.broadcast %cst_38 : f32 to vector<8x128xf32>
    %69 = arith.addf %68, %67 : vector<8x128xf32>
    %70 = arith.divf %68, %69 : vector<8x128xf32>
    %71 = vector.extract_strided_slice %58 {offsets = [0, 256], sizes = [8, 128], strides = [1, 1]} : vector<8x512xf32> to vector<8x128xf32>
    %72 = math.tanh %71 : vector<8x128xf32>
    %73 = vector.extract_strided_slice %58 {offsets = [0, 384], sizes = [8, 128], strides = [1, 1]} : vector<8x512xf32> to vector<8x128xf32>
    %74 = arith.negf %73 : vector<8x128xf32>
    %75 = math.exp %74 : vector<8x128xf32>
    %cst_39 = arith.constant 1.000000e+00 : f32
    %76 = vector.broadcast %cst_39 : f32 to vector<8x128xf32>
    %77 = arith.addf %76, %75 : vector<8x128xf32>
    %78 = arith.divf %76, %77 : vector<8x128xf32>
    %c0_40 = arith.constant 0 : index
    %c0_41 = arith.constant 0 : index
    %79 = vector.load %arg10[%c0_40, %c0_41] : memref<8x128xf32, #tpu.memory_space<vmem>>, vector<8x128xf32>
    %80 = arith.mulf %70, %79 : vector<8x128xf32>
    %81 = arith.mulf %64, %72 : vector<8x128xf32>
    %82 = arith.addf %80, %81 : vector<8x128xf32>
    %83 = math.tanh %82 : vector<8x128xf32>
    %84 = arith.mulf %78, %83 : vector<8x128xf32>
    %c0_42 = arith.constant 0 : index
    %c0_43 = arith.constant 0 : index
    %85 = vector.load %arg9[%c0_42, %c0_43] : memref<8x128xf32, #tpu.memory_space<vmem>>, vector<8x128xf32>
    tpu.vector_store %arg9[%c0_42, %c0_43], %84 {strides = array<i32>} : memref<8x128xf32, #tpu.memory_space<vmem>>, vector<8x128xf32>,
    %c0_44 = arith.constant 0 : index
    %c0_45 = arith.constant 0 : index
    %86 = vector.load %arg10[%c0_44, %c0_45] : memref<8x128xf32, #tpu.memory_space<vmem>>, vector<8x128xf32>
    tpu.vector_store %arg10[%c0_44, %c0_45], %82 {strides = array<i32>} : memref<8x128xf32, #tpu.memory_space<vmem>>, vector<8x128xf32>,
    %87 = arith.index_cast %53 : i32 to index
    %c0_46 = arith.constant 0 : index
    %88 = vector.load %arg7[%87, %c0_46] : memref<64x128xf32, #tpu.memory_space<vmem>>, vector<8x128xf32>
    tpu.vector_store %arg7[%87, %c0_46], %84 {strides = array<i32>} : memref<64x128xf32, #tpu.memory_space<vmem>>, vector<8x128xf32>,
    %c2_i32 = arith.constant 2 : i32
    %c8_i32_47 = arith.constant 8 : i32
    %89 = arith.muli %c2_i32, %c8_i32_47 : i32
    %90 = tpu.assume_multiple %89, 8 : i32
    %c0_48 = arith.constant 0 : index
    %c0_49 = arith.constant 0 : index
    %91 = vector.load %arg9[%c0_48, %c0_49] : memref<8x128xf32, #tpu.memory_space<vmem>>, vector<8x128xf32>
    %92 = arith.index_cast %90 : i32 to index
    %c0_50 = arith.constant 0 : index
    %93 = vector.load %arg8[%92, %c0_50] : memref<64x512xf32, #tpu.memory_space<vmem>>, vector<8x512xf32>
    %cst_51 = arith.constant dense<0.000000e+00> : vector<8x512xf32>
    %94 = tpu.matmul %91, %1, %cst_51 {dimension_numbers = #tpu.dot_dimension_numbers<[1], [0], [0], [1], [0, 0, 1, 1], [], []>} : vector<8x128xf32>, vector<128x512xf32>, vector<8x512xf32> -> vector<8x512xf32>
    %95 = arith.addf %93, %94 : vector<8x512xf32>
    %96 = vector.extract_strided_slice %95 {offsets = [0, 0], sizes = [8, 128], strides = [1, 1]} : vector<8x512xf32> to vector<8x128xf32>
    %97 = arith.negf %96 : vector<8x128xf32>
    %98 = math.exp %97 : vector<8x128xf32>
    %cst_52 = arith.constant 1.000000e+00 : f32
    %99 = vector.broadcast %cst_52 : f32 to vector<8x128xf32>
    %100 = arith.addf %99, %98 : vector<8x128xf32>
    %101 = arith.divf %99, %100 : vector<8x128xf32>
    %102 = vector.extract_strided_slice %95 {offsets = [0, 128], sizes = [8, 128], strides = [1, 1]} : vector<8x512xf32> to vector<8x128xf32>
    %103 = arith.negf %102 : vector<8x128xf32>
    %104 = math.exp %103 : vector<8x128xf32>
    %cst_53 = arith.constant 1.000000e+00 : f32
    %105 = vector.broadcast %cst_53 : f32 to vector<8x128xf32>
    %106 = arith.addf %105, %104 : vector<8x128xf32>
    %107 = arith.divf %105, %106 : vector<8x128xf32>
    %108 = vector.extract_strided_slice %95 {offsets = [0, 256], sizes = [8, 128], strides = [1, 1]} : vector<8x512xf32> to vector<8x128xf32>
    %109 = math.tanh %108 : vector<8x128xf32>
    %110 = vector.extract_strided_slice %95 {offsets = [0, 384], sizes = [8, 128], strides = [1, 1]} : vector<8x512xf32> to vector<8x128xf32>
    %111 = arith.negf %110 : vector<8x128xf32>
    %112 = math.exp %111 : vector<8x128xf32>
    %cst_54 = arith.constant 1.000000e+00 : f32
    %113 = vector.broadcast %cst_54 : f32 to vector<8x128xf32>
    %114 = arith.addf %113, %112 : vector<8x128xf32>
    %115 = arith.divf %113, %114 : vector<8x128xf32>
    %c0_55 = arith.constant 0 : index
    %c0_56 = arith.constant 0 : index
    %116 = vector.load %arg10[%c0_55, %c0_56] : memref<8x128xf32, #tpu.memory_space<vmem>>, vector<8x128xf32>
    %117 = arith.mulf %107, %116 : vector<8x128xf32>
    %118 = arith.mulf %101, %109 : vector<8x128xf32>
    %119 = arith.addf %117, %118 : vector<8x128xf32>
    %120 = math.tanh %119 : vector<8x128xf32>
    %121 = arith.mulf %115, %120 : vector<8x128xf32>
    %c0_57 = arith.constant 0 : index
    %c0_58 = arith.constant 0 : index
    %122 = vector.load %arg9[%c0_57, %c0_58] : memref<8x128xf32, #tpu.memory_space<vmem>>, vector<8x128xf32>
    tpu.vector_store %arg9[%c0_57, %c0_58], %121 {strides = array<i32>} : memref<8x128xf32, #tpu.memory_space<vmem>>, vector<8x128xf32>,
    %c0_59 = arith.constant 0 : index
    %c0_60 = arith.constant 0 : index
    %123 = vector.load %arg10[%c0_59, %c0_60] : memref<8x128xf32, #tpu.memory_space<vmem>>, vector<8x128xf32>
    tpu.vector_store %arg10[%c0_59, %c0_60], %119 {strides = array<i32>} : memref<8x128xf32, #tpu.memory_space<vmem>>, vector<8x128xf32>,
    %124 = arith.index_cast %90 : i32 to index
    %c0_61 = arith.constant 0 : index
    %125 = vector.load %arg7[%124, %c0_61] : memref<64x128xf32, #tpu.memory_space<vmem>>, vector<8x128xf32>
    tpu.vector_store %arg7[%124, %c0_61], %121 {strides = array<i32>} : memref<64x128xf32, #tpu.memory_space<vmem>>, vector<8x128xf32>,
    %c3_i32 = arith.constant 3 : i32
    %c8_i32_62 = arith.constant 8 : i32
    %126 = arith.muli %c3_i32, %c8_i32_62 : i32
    %127 = tpu.assume_multiple %126, 8 : i32
    %c0_63 = arith.constant 0 : index
    %c0_64 = arith.constant 0 : index
    %128 = vector.load %arg9[%c0_63, %c0_64] : memref<8x128xf32, #tpu.memory_space<vmem>>, vector<8x128xf32>
    %129 = arith.index_cast %127 : i32 to index
    %c0_65 = arith.constant 0 : index
    %130 = vector.load %arg8[%129, %c0_65] : memref<64x512xf32, #tpu.memory_space<vmem>>, vector<8x512xf32>
    %cst_66 = arith.constant dense<0.000000e+00> : vector<8x512xf32>
    %131 = tpu.matmul %128, %1, %cst_66 {dimension_numbers = #tpu.dot_dimension_numbers<[1], [0], [0], [1], [0, 0, 1, 1], [], []>} : vector<8x128xf32>, vector<128x512xf32>, vector<8x512xf32> -> vector<8x512xf32>
    %132 = arith.addf %130, %131 : vector<8x512xf32>
    %133 = vector.extract_strided_slice %132 {offsets = [0, 0], sizes = [8, 128], strides = [1, 1]} : vector<8x512xf32> to vector<8x128xf32>
    %134 = arith.negf %133 : vector<8x128xf32>
    %135 = math.exp %134 : vector<8x128xf32>
    %cst_67 = arith.constant 1.000000e+00 : f32
    %136 = vector.broadcast %cst_67 : f32 to vector<8x128xf32>
    %137 = arith.addf %136, %135 : vector<8x128xf32>
    %138 = arith.divf %136, %137 : vector<8x128xf32>
    %139 = vector.extract_strided_slice %132 {offsets = [0, 128], sizes = [8, 128], strides = [1, 1]} : vector<8x512xf32> to vector<8x128xf32>
    %140 = arith.negf %139 : vector<8x128xf32>
    %141 = math.exp %140 : vector<8x128xf32>
    %cst_68 = arith.constant 1.000000e+00 : f32
    %142 = vector.broadcast %cst_68 : f32 to vector<8x128xf32>
    %143 = arith.addf %142, %141 : vector<8x128xf32>
    %144 = arith.divf %142, %143 : vector<8x128xf32>
    %145 = vector.extract_strided_slice %132 {offsets = [0, 256], sizes = [8, 128], strides = [1, 1]} : vector<8x512xf32> to vector<8x128xf32>
    %146 = math.tanh %145 : vector<8x128xf32>
    %147 = vector.extract_strided_slice %132 {offsets = [0, 384], sizes = [8, 128], strides = [1, 1]} : vector<8x512xf32> to vector<8x128xf32>
    %148 = arith.negf %147 : vector<8x128xf32>
    %149 = math.exp %148 : vector<8x128xf32>
    %cst_69 = arith.constant 1.000000e+00 : f32
    %150 = vector.broadcast %cst_69 : f32 to vector<8x128xf32>
    %151 = arith.addf %150, %149 : vector<8x128xf32>
    %152 = arith.divf %150, %151 : vector<8x128xf32>
    %c0_70 = arith.constant 0 : index
    %c0_71 = arith.constant 0 : index
    %153 = vector.load %arg10[%c0_70, %c0_71] : memref<8x128xf32, #tpu.memory_space<vmem>>, vector<8x128xf32>
    %154 = arith.mulf %144, %153 : vector<8x128xf32>
    %155 = arith.mulf %138, %146 : vector<8x128xf32>
    %156 = arith.addf %154, %155 : vector<8x128xf32>
    %157 = math.tanh %156 : vector<8x128xf32>
    %158 = arith.mulf %152, %157 : vector<8x128xf32>
    %c0_72 = arith.constant 0 : index
    %c0_73 = arith.constant 0 : index
    %159 = vector.load %arg9[%c0_72, %c0_73] : memref<8x128xf32, #tpu.memory_space<vmem>>, vector<8x128xf32>
    tpu.vector_store %arg9[%c0_72, %c0_73], %158 {strides = array<i32>} : memref<8x128xf32, #tpu.memory_space<vmem>>, vector<8x128xf32>,
    %c0_74 = arith.constant 0 : index
    %c0_75 = arith.constant 0 : index
    %160 = vector.load %arg10[%c0_74, %c0_75] : memref<8x128xf32, #tpu.memory_space<vmem>>, vector<8x128xf32>
    tpu.vector_store %arg10[%c0_74, %c0_75], %156 {strides = array<i32>} : memref<8x128xf32, #tpu.memory_space<vmem>>, vector<8x128xf32>,
    %161 = arith.index_cast %127 : i32 to index
    %c0_76 = arith.constant 0 : index
    %162 = vector.load %arg7[%161, %c0_76] : memref<64x128xf32, #tpu.memory_space<vmem>>, vector<8x128xf32>
    tpu.vector_store %arg7[%161, %c0_76], %158 {strides = array<i32>} : memref<64x128xf32, #tpu.memory_space<vmem>>, vector<8x128xf32>,
    %c4_i32 = arith.constant 4 : i32
    %c8_i32_77 = arith.constant 8 : i32
    %163 = arith.muli %c4_i32, %c8_i32_77 : i32
    %164 = tpu.assume_multiple %163, 8 : i32
    %c0_78 = arith.constant 0 : index
    %c0_79 = arith.constant 0 : index
    %165 = vector.load %arg9[%c0_78, %c0_79] : memref<8x128xf32, #tpu.memory_space<vmem>>, vector<8x128xf32>
    %166 = arith.index_cast %164 : i32 to index
    %c0_80 = arith.constant 0 : index
    %167 = vector.load %arg8[%166, %c0_80] : memref<64x512xf32, #tpu.memory_space<vmem>>, vector<8x512xf32>
    %cst_81 = arith.constant dense<0.000000e+00> : vector<8x512xf32>
    %168 = tpu.matmul %165, %1, %cst_81 {dimension_numbers = #tpu.dot_dimension_numbers<[1], [0], [0], [1], [0, 0, 1, 1], [], []>} : vector<8x128xf32>, vector<128x512xf32>, vector<8x512xf32> -> vector<8x512xf32>
    %169 = arith.addf %167, %168 : vector<8x512xf32>
    %170 = vector.extract_strided_slice %169 {offsets = [0, 0], sizes = [8, 128], strides = [1, 1]} : vector<8x512xf32> to vector<8x128xf32>
    %171 = arith.negf %170 : vector<8x128xf32>
    %172 = math.exp %171 : vector<8x128xf32>
    %cst_82 = arith.constant 1.000000e+00 : f32
    %173 = vector.broadcast %cst_82 : f32 to vector<8x128xf32>
    %174 = arith.addf %173, %172 : vector<8x128xf32>
    %175 = arith.divf %173, %174 : vector<8x128xf32>
    %176 = vector.extract_strided_slice %169 {offsets = [0, 128], sizes = [8, 128], strides = [1, 1]} : vector<8x512xf32> to vector<8x128xf32>
    %177 = arith.negf %176 : vector<8x128xf32>
    %178 = math.exp %177 : vector<8x128xf32>
    %cst_83 = arith.constant 1.000000e+00 : f32
    %179 = vector.broadcast %cst_83 : f32 to vector<8x128xf32>
    %180 = arith.addf %179, %178 : vector<8x128xf32>
    %181 = arith.divf %179, %180 : vector<8x128xf32>
    %182 = vector.extract_strided_slice %169 {offsets = [0, 256], sizes = [8, 128], strides = [1, 1]} : vector<8x512xf32> to vector<8x128xf32>
    %183 = math.tanh %182 : vector<8x128xf32>
    %184 = vector.extract_strided_slice %169 {offsets = [0, 384], sizes = [8, 128], strides = [1, 1]} : vector<8x512xf32> to vector<8x128xf32>
    %185 = arith.negf %184 : vector<8x128xf32>
    %186 = math.exp %185 : vector<8x128xf32>
    %cst_84 = arith.constant 1.000000e+00 : f32
    %187 = vector.broadcast %cst_84 : f32 to vector<8x128xf32>
    %188 = arith.addf %187, %186 : vector<8x128xf32>
    %189 = arith.divf %187, %188 : vector<8x128xf32>
    %c0_85 = arith.constant 0 : index
    %c0_86 = arith.constant 0 : index
    %190 = vector.load %arg10[%c0_85, %c0_86] : memref<8x128xf32, #tpu.memory_space<vmem>>, vector<8x128xf32>
    %191 = arith.mulf %181, %190 : vector<8x128xf32>
    %192 = arith.mulf %175, %183 : vector<8x128xf32>
    %193 = arith.addf %191, %192 : vector<8x128xf32>
    %194 = math.tanh %193 : vector<8x128xf32>
    %195 = arith.mulf %189, %194 : vector<8x128xf32>
    %c0_87 = arith.constant 0 : index
    %c0_88 = arith.constant 0 : index
    %196 = vector.load %arg9[%c0_87, %c0_88] : memref<8x128xf32, #tpu.memory_space<vmem>>, vector<8x128xf32>
    tpu.vector_store %arg9[%c0_87, %c0_88], %195 {strides = array<i32>} : memref<8x128xf32, #tpu.memory_space<vmem>>, vector<8x128xf32>,
    %c0_89 = arith.constant 0 : index
    %c0_90 = arith.constant 0 : index
    %197 = vector.load %arg10[%c0_89, %c0_90] : memref<8x128xf32, #tpu.memory_space<vmem>>, vector<8x128xf32>
    tpu.vector_store %arg10[%c0_89, %c0_90], %193 {strides = array<i32>} : memref<8x128xf32, #tpu.memory_space<vmem>>, vector<8x128xf32>,
    %198 = arith.index_cast %164 : i32 to index
    %c0_91 = arith.constant 0 : index
    %199 = vector.load %arg7[%198, %c0_91] : memref<64x128xf32, #tpu.memory_space<vmem>>, vector<8x128xf32>
    tpu.vector_store %arg7[%198, %c0_91], %195 {strides = array<i32>} : memref<64x128xf32, #tpu.memory_space<vmem>>, vector<8x128xf32>,
    %c5_i32 = arith.constant 5 : i32
    %c8_i32_92 = arith.constant 8 : i32
    %200 = arith.muli %c5_i32, %c8_i32_92 : i32
    %201 = tpu.assume_multiple %200, 8 : i32
    %c0_93 = arith.constant 0 : index
    %c0_94 = arith.constant 0 : index
    %202 = vector.load %arg9[%c0_93, %c0_94] : memref<8x128xf32, #tpu.memory_space<vmem>>, vector<8x128xf32>
    %203 = arith.index_cast %201 : i32 to index
    %c0_95 = arith.constant 0 : index
    %204 = vector.load %arg8[%203, %c0_95] : memref<64x512xf32, #tpu.memory_space<vmem>>, vector<8x512xf32>
    %cst_96 = arith.constant dense<0.000000e+00> : vector<8x512xf32>
    %205 = tpu.matmul %202, %1, %cst_96 {dimension_numbers = #tpu.dot_dimension_numbers<[1], [0], [0], [1], [0, 0, 1, 1], [], []>} : vector<8x128xf32>, vector<128x512xf32>, vector<8x512xf32> -> vector<8x512xf32>
    %206 = arith.addf %204, %205 : vector<8x512xf32>
    %207 = vector.extract_strided_slice %206 {offsets = [0, 0], sizes = [8, 128], strides = [1, 1]} : vector<8x512xf32> to vector<8x128xf32>
    %208 = arith.negf %207 : vector<8x128xf32>
    %209 = math.exp %208 : vector<8x128xf32>
    %cst_97 = arith.constant 1.000000e+00 : f32
    %210 = vector.broadcast %cst_97 : f32 to vector<8x128xf32>
    %211 = arith.addf %210, %209 : vector<8x128xf32>
    %212 = arith.divf %210, %211 : vector<8x128xf32>
    %213 = vector.extract_strided_slice %206 {offsets = [0, 128], sizes = [8, 128], strides = [1, 1]} : vector<8x512xf32> to vector<8x128xf32>
    %214 = arith.negf %213 : vector<8x128xf32>
    %215 = math.exp %214 : vector<8x128xf32>
    %cst_98 = arith.constant 1.000000e+00 : f32
    %216 = vector.broadcast %cst_98 : f32 to vector<8x128xf32>
    %217 = arith.addf %216, %215 : vector<8x128xf32>
    %218 = arith.divf %216, %217 : vector<8x128xf32>
    %219 = vector.extract_strided_slice %206 {offsets = [0, 256], sizes = [8, 128], strides = [1, 1]} : vector<8x512xf32> to vector<8x128xf32>
    %220 = math.tanh %219 : vector<8x128xf32>
    %221 = vector.extract_strided_slice %206 {offsets = [0, 384], sizes = [8, 128], strides = [1, 1]} : vector<8x512xf32> to vector<8x128xf32>
    %222 = arith.negf %221 : vector<8x128xf32>
    %223 = math.exp %222 : vector<8x128xf32>
    %cst_99 = arith.constant 1.000000e+00 : f32
    %224 = vector.broadcast %cst_99 : f32 to vector<8x128xf32>
    %225 = arith.addf %224, %223 : vector<8x128xf32>
    %226 = arith.divf %224, %225 : vector<8x128xf32>
    %c0_100 = arith.constant 0 : index
    %c0_101 = arith.constant 0 : index
    %227 = vector.load %arg10[%c0_100, %c0_101] : memref<8x128xf32, #tpu.memory_space<vmem>>, vector<8x128xf32>
    %228 = arith.mulf %218, %227 : vector<8x128xf32>
    %229 = arith.mulf %212, %220 : vector<8x128xf32>
    %230 = arith.addf %228, %229 : vector<8x128xf32>
    %231 = math.tanh %230 : vector<8x128xf32>
    %232 = arith.mulf %226, %231 : vector<8x128xf32>
    %c0_102 = arith.constant 0 : index
    %c0_103 = arith.constant 0 : index
    %233 = vector.load %arg9[%c0_102, %c0_103] : memref<8x128xf32, #tpu.memory_space<vmem>>, vector<8x128xf32>
    tpu.vector_store %arg9[%c0_102, %c0_103], %232 {strides = array<i32>} : memref<8x128xf32, #tpu.memory_space<vmem>>, vector<8x128xf32>,
    %c0_104 = arith.constant 0 : index
    %c0_105 = arith.constant 0 : index
    %234 = vector.load %arg10[%c0_104, %c0_105] : memref<8x128xf32, #tpu.memory_space<vmem>>, vector<8x128xf32>
    tpu.vector_store %arg10[%c0_104, %c0_105], %230 {strides = array<i32>} : memref<8x128xf32, #tpu.memory_space<vmem>>, vector<8x128xf32>,
    %235 = arith.index_cast %201 : i32 to index
    %c0_106 = arith.constant 0 : index
    %236 = vector.load %arg7[%235, %c0_106] : memref<64x128xf32, #tpu.memory_space<vmem>>, vector<8x128xf32>
    tpu.vector_store %arg7[%235, %c0_106], %232 {strides = array<i32>} : memref<64x128xf32, #tpu.memory_space<vmem>>, vector<8x128xf32>,
    %c6_i32 = arith.constant 6 : i32
    %c8_i32_107 = arith.constant 8 : i32
    %237 = arith.muli %c6_i32, %c8_i32_107 : i32
    %238 = tpu.assume_multiple %237, 8 : i32
    %c0_108 = arith.constant 0 : index
    %c0_109 = arith.constant 0 : index
    %239 = vector.load %arg9[%c0_108, %c0_109] : memref<8x128xf32, #tpu.memory_space<vmem>>, vector<8x128xf32>
    %240 = arith.index_cast %238 : i32 to index
    %c0_110 = arith.constant 0 : index
    %241 = vector.load %arg8[%240, %c0_110] : memref<64x512xf32, #tpu.memory_space<vmem>>, vector<8x512xf32>
    %cst_111 = arith.constant dense<0.000000e+00> : vector<8x512xf32>
    %242 = tpu.matmul %239, %1, %cst_111 {dimension_numbers = #tpu.dot_dimension_numbers<[1], [0], [0], [1], [0, 0, 1, 1], [], []>} : vector<8x128xf32>, vector<128x512xf32>, vector<8x512xf32> -> vector<8x512xf32>
    %243 = arith.addf %241, %242 : vector<8x512xf32>
    %244 = vector.extract_strided_slice %243 {offsets = [0, 0], sizes = [8, 128], strides = [1, 1]} : vector<8x512xf32> to vector<8x128xf32>
    %245 = arith.negf %244 : vector<8x128xf32>
    %246 = math.exp %245 : vector<8x128xf32>
    %cst_112 = arith.constant 1.000000e+00 : f32
    %247 = vector.broadcast %cst_112 : f32 to vector<8x128xf32>
    %248 = arith.addf %247, %246 : vector<8x128xf32>
    %249 = arith.divf %247, %248 : vector<8x128xf32>
    %250 = vector.extract_strided_slice %243 {offsets = [0, 128], sizes = [8, 128], strides = [1, 1]} : vector<8x512xf32> to vector<8x128xf32>
    %251 = arith.negf %250 : vector<8x128xf32>
    %252 = math.exp %251 : vector<8x128xf32>
    %cst_113 = arith.constant 1.000000e+00 : f32
    %253 = vector.broadcast %cst_113 : f32 to vector<8x128xf32>
    %254 = arith.addf %253, %252 : vector<8x128xf32>
    %255 = arith.divf %253, %254 : vector<8x128xf32>
    %256 = vector.extract_strided_slice %243 {offsets = [0, 256], sizes = [8, 128], strides = [1, 1]} : vector<8x512xf32> to vector<8x128xf32>
    %257 = math.tanh %256 : vector<8x128xf32>
    %258 = vector.extract_strided_slice %243 {offsets = [0, 384], sizes = [8, 128], strides = [1, 1]} : vector<8x512xf32> to vector<8x128xf32>
    %259 = arith.negf %258 : vector<8x128xf32>
    %260 = math.exp %259 : vector<8x128xf32>
    %cst_114 = arith.constant 1.000000e+00 : f32
    %261 = vector.broadcast %cst_114 : f32 to vector<8x128xf32>
    %262 = arith.addf %261, %260 : vector<8x128xf32>
    %263 = arith.divf %261, %262 : vector<8x128xf32>
    %c0_115 = arith.constant 0 : index
    %c0_116 = arith.constant 0 : index
    %264 = vector.load %arg10[%c0_115, %c0_116] : memref<8x128xf32, #tpu.memory_space<vmem>>, vector<8x128xf32>
    %265 = arith.mulf %255, %264 : vector<8x128xf32>
    %266 = arith.mulf %249, %257 : vector<8x128xf32>
    %267 = arith.addf %265, %266 : vector<8x128xf32>
    %268 = math.tanh %267 : vector<8x128xf32>
    %269 = arith.mulf %263, %268 : vector<8x128xf32>
    %c0_117 = arith.constant 0 : index
    %c0_118 = arith.constant 0 : index
    %270 = vector.load %arg9[%c0_117, %c0_118] : memref<8x128xf32, #tpu.memory_space<vmem>>, vector<8x128xf32>
    tpu.vector_store %arg9[%c0_117, %c0_118], %269 {strides = array<i32>} : memref<8x128xf32, #tpu.memory_space<vmem>>, vector<8x128xf32>,
    %c0_119 = arith.constant 0 : index
    %c0_120 = arith.constant 0 : index
    %271 = vector.load %arg10[%c0_119, %c0_120] : memref<8x128xf32, #tpu.memory_space<vmem>>, vector<8x128xf32>
    tpu.vector_store %arg10[%c0_119, %c0_120], %267 {strides = array<i32>} : memref<8x128xf32, #tpu.memory_space<vmem>>, vector<8x128xf32>,
    %272 = arith.index_cast %238 : i32 to index
    %c0_121 = arith.constant 0 : index
    %273 = vector.load %arg7[%272, %c0_121] : memref<64x128xf32, #tpu.memory_space<vmem>>, vector<8x128xf32>
    tpu.vector_store %arg7[%272, %c0_121], %269 {strides = array<i32>} : memref<64x128xf32, #tpu.memory_space<vmem>>, vector<8x128xf32>,
    %c7_i32 = arith.constant 7 : i32
    %c8_i32_122 = arith.constant 8 : i32
    %274 = arith.muli %c7_i32, %c8_i32_122 : i32
    %275 = tpu.assume_multiple %274, 8 : i32
    %c0_123 = arith.constant 0 : index
    %c0_124 = arith.constant 0 : index
    %276 = vector.load %arg9[%c0_123, %c0_124] : memref<8x128xf32, #tpu.memory_space<vmem>>, vector<8x128xf32>
    %277 = arith.index_cast %275 : i32 to index
    %c0_125 = arith.constant 0 : index
    %278 = vector.load %arg8[%277, %c0_125] : memref<64x512xf32, #tpu.memory_space<vmem>>, vector<8x512xf32>
    %cst_126 = arith.constant dense<0.000000e+00> : vector<8x512xf32>
    %279 = tpu.matmul %276, %1, %cst_126 {dimension_numbers = #tpu.dot_dimension_numbers<[1], [0], [0], [1], [0, 0, 1, 1], [], []>} : vector<8x128xf32>, vector<128x512xf32>, vector<8x512xf32> -> vector<8x512xf32>
    %280 = arith.addf %278, %279 : vector<8x512xf32>
    %281 = vector.extract_strided_slice %280 {offsets = [0, 0], sizes = [8, 128], strides = [1, 1]} : vector<8x512xf32> to vector<8x128xf32>
    %282 = arith.negf %281 : vector<8x128xf32>
    %283 = math.exp %282 : vector<8x128xf32>
    %cst_127 = arith.constant 1.000000e+00 : f32
    %284 = vector.broadcast %cst_127 : f32 to vector<8x128xf32>
    %285 = arith.addf %284, %283 : vector<8x128xf32>
    %286 = arith.divf %284, %285 : vector<8x128xf32>
    %287 = vector.extract_strided_slice %280 {offsets = [0, 128], sizes = [8, 128], strides = [1, 1]} : vector<8x512xf32> to vector<8x128xf32>
    %288 = arith.negf %287 : vector<8x128xf32>
    %289 = math.exp %288 : vector<8x128xf32>
    %cst_128 = arith.constant 1.000000e+00 : f32
    %290 = vector.broadcast %cst_128 : f32 to vector<8x128xf32>
    %291 = arith.addf %290, %289 : vector<8x128xf32>
    %292 = arith.divf %290, %291 : vector<8x128xf32>
    %293 = vector.extract_strided_slice %280 {offsets = [0, 256], sizes = [8, 128], strides = [1, 1]} : vector<8x512xf32> to vector<8x128xf32>
    %294 = math.tanh %293 : vector<8x128xf32>
    %295 = vector.extract_strided_slice %280 {offsets = [0, 384], sizes = [8, 128], strides = [1, 1]} : vector<8x512xf32> to vector<8x128xf32>
    %296 = arith.negf %295 : vector<8x128xf32>
    %297 = math.exp %296 : vector<8x128xf32>
    %cst_129 = arith.constant 1.000000e+00 : f32
    %298 = vector.broadcast %cst_129 : f32 to vector<8x128xf32>
    %299 = arith.addf %298, %297 : vector<8x128xf32>
    %300 = arith.divf %298, %299 : vector<8x128xf32>
    %c0_130 = arith.constant 0 : index
    %c0_131 = arith.constant 0 : index
    %301 = vector.load %arg10[%c0_130, %c0_131] : memref<8x128xf32, #tpu.memory_space<vmem>>, vector<8x128xf32>
    %302 = arith.mulf %292, %301 : vector<8x128xf32>
    %303 = arith.mulf %286, %294 : vector<8x128xf32>
    %304 = arith.addf %302, %303 : vector<8x128xf32>
    %305 = math.tanh %304 : vector<8x128xf32>
    %306 = arith.mulf %300, %305 : vector<8x128xf32>
    %c0_132 = arith.constant 0 : index
    %c0_133 = arith.constant 0 : index
    %307 = vector.load %arg9[%c0_132, %c0_133] : memref<8x128xf32, #tpu.memory_space<vmem>>, vector<8x128xf32>
    tpu.vector_store %arg9[%c0_132, %c0_133], %306 {strides = array<i32>} : memref<8x128xf32, #tpu.memory_space<vmem>>, vector<8x128xf32>,
    %c0_134 = arith.constant 0 : index
    %c0_135 = arith.constant 0 : index
    %308 = vector.load %arg10[%c0_134, %c0_135] : memref<8x128xf32, #tpu.memory_space<vmem>>, vector<8x128xf32>
    tpu.vector_store %arg10[%c0_134, %c0_135], %304 {strides = array<i32>} : memref<8x128xf32, #tpu.memory_space<vmem>>, vector<8x128xf32>,
    %309 = arith.index_cast %275 : i32 to index
    %c0_136 = arith.constant 0 : index
    %310 = vector.load %arg7[%309, %c0_136] : memref<64x128xf32, #tpu.memory_space<vmem>>, vector<8x128xf32>
    tpu.vector_store %arg7[%309, %c0_136], %306 {strides = array<i32>} : memref<64x128xf32, #tpu.memory_space<vmem>>, vector<8x128xf32>,
    %c8_i32_137 = arith.constant 8 : i32
    %c1 = arith.constant 1 : index
    %c0_138 = arith.constant 0 : index
    %c0_139 = arith.constant 0 : index
    %311 = vector.load %arg2[%c1, %c0_138, %c0_139] : memref<2x128x512xf32, #tpu.memory_space<vmem>>, vector<1x128x512xf32>
    %312 = vector.shape_cast %311 : vector<1x128x512xf32> to vector<128x512xf32>
    %c0_140 = arith.constant 0 : index
    %c0_141 = arith.constant 0 : index
    %313 = vector.load %arg7[%c0_140, %c0_141] : memref<64x128xf32, #tpu.memory_space<vmem>>, vector<64x128xf32>
    %c1_142 = arith.constant 1 : index
    %c0_143 = arith.constant 0 : index
    %c0_144 = arith.constant 0 : index
    %314 = vector.load %arg1[%c1_142, %c0_143, %c0_144] : memref<2x128x512xf32, #tpu.memory_space<vmem>>, vector<1x128x512xf32>
    %315 = vector.shape_cast %314 : vector<1x128x512xf32> to vector<128x512xf32>
    %cst_145 = arith.constant dense<0.000000e+00> : vector<64x512xf32>
    %316 = tpu.matmul %313, %315, %cst_145 {dimension_numbers = #tpu.dot_dimension_numbers<[1], [0], [0], [1], [0, 0, 1, 1], [], []>} : vector<64x128xf32>, vector<128x512xf32>, vector<64x512xf32> -> vector<64x512xf32>
    %c1_146 = arith.constant 1 : index
    %c0_147 = arith.constant 0 : index
    %c0_148 = arith.constant 0 : index
    %317 = vector.load %arg3[%c1_146, %c0_147, %c0_148] : memref<2x1x512xf32, #tpu.memory_space<vmem>>, vector<1x1x512xf32>
    %318 = vector.shape_cast %317 : vector<1x1x512xf32> to vector<1x512xf32>
    %319 = vector.broadcast %318 : vector<1x512xf32> to vector<64x512xf32>
    %320 = arith.addf %316, %319 : vector<64x512xf32>
    %c0_149 = arith.constant 0 : index
    %c0_150 = arith.constant 0 : index
    %321 = vector.load %arg8[%c0_149, %c0_150] : memref<64x512xf32, #tpu.memory_space<vmem>>, vector<64x512xf32>
    tpu.vector_store %arg8[%c0_149, %c0_150], %320 {strides = array<i32>} : memref<64x512xf32, #tpu.memory_space<vmem>>, vector<64x512xf32>,
    %cst_151 = arith.constant 0.000000e+00 : f32
    %322 = vector.broadcast %cst_151 : f32 to vector<8x128xf32>
    %c0_152 = arith.constant 0 : index
    %c0_153 = arith.constant 0 : index
    %323 = vector.load %arg9[%c0_152, %c0_153] : memref<8x128xf32, #tpu.memory_space<vmem>>, vector<8x128xf32>
    tpu.vector_store %arg9[%c0_152, %c0_153], %322 {strides = array<i32>} : memref<8x128xf32, #tpu.memory_space<vmem>>, vector<8x128xf32>,
    %cst_154 = arith.constant 0.000000e+00 : f32
    %324 = vector.broadcast %cst_154 : f32 to vector<8x128xf32>
    %c0_155 = arith.constant 0 : index
    %c0_156 = arith.constant 0 : index
    %325 = vector.load %arg10[%c0_155, %c0_156] : memref<8x128xf32, #tpu.memory_space<vmem>>, vector<8x128xf32>
    tpu.vector_store %arg10[%c0_155, %c0_156], %324 {strides = array<i32>} : memref<8x128xf32, #tpu.memory_space<vmem>>, vector<8x128xf32>,
    %c0_i32_157 = arith.constant 0 : i32
    %c8_i32_158 = arith.constant 8 : i32
    %326 = arith.muli %c0_i32_157, %c8_i32_158 : i32
    %327 = tpu.assume_multiple %326, 8 : i32
    %c0_159 = arith.constant 0 : index
    %c0_160 = arith.constant 0 : index
    %328 = vector.load %arg9[%c0_159, %c0_160] : memref<8x128xf32, #tpu.memory_space<vmem>>, vector<8x128xf32>
    %329 = arith.index_cast %327 : i32 to index
    %c0_161 = arith.constant 0 : index
    %330 = vector.load %arg8[%329, %c0_161] : memref<64x512xf32, #tpu.memory_space<vmem>>, vector<8x512xf32>
    %cst_162 = arith.constant dense<0.000000e+00> : vector<8x512xf32>
    %331 = tpu.matmul %328, %312, %cst_162 {dimension_numbers = #tpu.dot_dimension_numbers<[1], [0], [0], [1], [0, 0, 1, 1], [], []>} : vector<8x128xf32>, vector<128x512xf32>, vector<8x512xf32> -> vector<8x512xf32>
    %332 = arith.addf %330, %331 : vector<8x512xf32>
    %333 = vector.extract_strided_slice %332 {offsets = [0, 0], sizes = [8, 128], strides = [1, 1]} : vector<8x512xf32> to vector<8x128xf32>
    %334 = arith.negf %333 : vector<8x128xf32>
    %335 = math.exp %334 : vector<8x128xf32>
    %cst_163 = arith.constant 1.000000e+00 : f32
    %336 = vector.broadcast %cst_163 : f32 to vector<8x128xf32>
    %337 = arith.addf %336, %335 : vector<8x128xf32>
    %338 = arith.divf %336, %337 : vector<8x128xf32>
    %339 = vector.extract_strided_slice %332 {offsets = [0, 128], sizes = [8, 128], strides = [1, 1]} : vector<8x512xf32> to vector<8x128xf32>
    %340 = arith.negf %339 : vector<8x128xf32>
    %341 = math.exp %340 : vector<8x128xf32>
    %cst_164 = arith.constant 1.000000e+00 : f32
    %342 = vector.broadcast %cst_164 : f32 to vector<8x128xf32>
    %343 = arith.addf %342, %341 : vector<8x128xf32>
    %344 = arith.divf %342, %343 : vector<8x128xf32>
    %345 = vector.extract_strided_slice %332 {offsets = [0, 256], sizes = [8, 128], strides = [1, 1]} : vector<8x512xf32> to vector<8x128xf32>
    %346 = math.tanh %345 : vector<8x128xf32>
    %347 = vector.extract_strided_slice %332 {offsets = [0, 384], sizes = [8, 128], strides = [1, 1]} : vector<8x512xf32> to vector<8x128xf32>
    %348 = arith.negf %347 : vector<8x128xf32>
    %349 = math.exp %348 : vector<8x128xf32>
    %cst_165 = arith.constant 1.000000e+00 : f32
    %350 = vector.broadcast %cst_165 : f32 to vector<8x128xf32>
    %351 = arith.addf %350, %349 : vector<8x128xf32>
    %352 = arith.divf %350, %351 : vector<8x128xf32>
    %c0_166 = arith.constant 0 : index
    %c0_167 = arith.constant 0 : index
    %353 = vector.load %arg10[%c0_166, %c0_167] : memref<8x128xf32, #tpu.memory_space<vmem>>, vector<8x128xf32>
    %354 = arith.mulf %344, %353 : vector<8x128xf32>
    %355 = arith.mulf %338, %346 : vector<8x128xf32>
    %356 = arith.addf %354, %355 : vector<8x128xf32>
    %357 = math.tanh %356 : vector<8x128xf32>
    %358 = arith.mulf %352, %357 : vector<8x128xf32>
    %c0_168 = arith.constant 0 : index
    %c0_169 = arith.constant 0 : index
    %359 = vector.load %arg9[%c0_168, %c0_169] : memref<8x128xf32, #tpu.memory_space<vmem>>, vector<8x128xf32>
    tpu.vector_store %arg9[%c0_168, %c0_169], %358 {strides = array<i32>} : memref<8x128xf32, #tpu.memory_space<vmem>>, vector<8x128xf32>,
    %c0_170 = arith.constant 0 : index
    %c0_171 = arith.constant 0 : index
    %360 = vector.load %arg10[%c0_170, %c0_171] : memref<8x128xf32, #tpu.memory_space<vmem>>, vector<8x128xf32>
    tpu.vector_store %arg10[%c0_170, %c0_171], %356 {strides = array<i32>} : memref<8x128xf32, #tpu.memory_space<vmem>>, vector<8x128xf32>,
    %c1_i32_172 = arith.constant 1 : i32
    %c8_i32_173 = arith.constant 8 : i32
    %361 = arith.muli %c1_i32_172, %c8_i32_173 : i32
    %362 = tpu.assume_multiple %361, 8 : i32
    %c0_174 = arith.constant 0 : index
    %c0_175 = arith.constant 0 : index
    %363 = vector.load %arg9[%c0_174, %c0_175] : memref<8x128xf32, #tpu.memory_space<vmem>>, vector<8x128xf32>
    %364 = arith.index_cast %362 : i32 to index
    %c0_176 = arith.constant 0 : index
    %365 = vector.load %arg8[%364, %c0_176] : memref<64x512xf32, #tpu.memory_space<vmem>>, vector<8x512xf32>
    %cst_177 = arith.constant dense<0.000000e+00> : vector<8x512xf32>
    %366 = tpu.matmul %363, %312, %cst_177 {dimension_numbers = #tpu.dot_dimension_numbers<[1], [0], [0], [1], [0, 0, 1, 1], [], []>} : vector<8x128xf32>, vector<128x512xf32>, vector<8x512xf32> -> vector<8x512xf32>
    %367 = arith.addf %365, %366 : vector<8x512xf32>
    %368 = vector.extract_strided_slice %367 {offsets = [0, 0], sizes = [8, 128], strides = [1, 1]} : vector<8x512xf32> to vector<8x128xf32>
    %369 = arith.negf %368 : vector<8x128xf32>
    %370 = math.exp %369 : vector<8x128xf32>
    %cst_178 = arith.constant 1.000000e+00 : f32
    %371 = vector.broadcast %cst_178 : f32 to vector<8x128xf32>
    %372 = arith.addf %371, %370 : vector<8x128xf32>
    %373 = arith.divf %371, %372 : vector<8x128xf32>
    %374 = vector.extract_strided_slice %367 {offsets = [0, 128], sizes = [8, 128], strides = [1, 1]} : vector<8x512xf32> to vector<8x128xf32>
    %375 = arith.negf %374 : vector<8x128xf32>
    %376 = math.exp %375 : vector<8x128xf32>
    %cst_179 = arith.constant 1.000000e+00 : f32
    %377 = vector.broadcast %cst_179 : f32 to vector<8x128xf32>
    %378 = arith.addf %377, %376 : vector<8x128xf32>
    %379 = arith.divf %377, %378 : vector<8x128xf32>
    %380 = vector.extract_strided_slice %367 {offsets = [0, 256], sizes = [8, 128], strides = [1, 1]} : vector<8x512xf32> to vector<8x128xf32>
    %381 = math.tanh %380 : vector<8x128xf32>
    %382 = vector.extract_strided_slice %367 {offsets = [0, 384], sizes = [8, 128], strides = [1, 1]} : vector<8x512xf32> to vector<8x128xf32>
    %383 = arith.negf %382 : vector<8x128xf32>
    %384 = math.exp %383 : vector<8x128xf32>
    %cst_180 = arith.constant 1.000000e+00 : f32
    %385 = vector.broadcast %cst_180 : f32 to vector<8x128xf32>
    %386 = arith.addf %385, %384 : vector<8x128xf32>
    %387 = arith.divf %385, %386 : vector<8x128xf32>
    %c0_181 = arith.constant 0 : index
    %c0_182 = arith.constant 0 : index
    %388 = vector.load %arg10[%c0_181, %c0_182] : memref<8x128xf32, #tpu.memory_space<vmem>>, vector<8x128xf32>
    %389 = arith.mulf %379, %388 : vector<8x128xf32>
    %390 = arith.mulf %373, %381 : vector<8x128xf32>
    %391 = arith.addf %389, %390 : vector<8x128xf32>
    %392 = math.tanh %391 : vector<8x128xf32>
    %393 = arith.mulf %387, %392 : vector<8x128xf32>
    %c0_183 = arith.constant 0 : index
    %c0_184 = arith.constant 0 : index
    %394 = vector.load %arg9[%c0_183, %c0_184] : memref<8x128xf32, #tpu.memory_space<vmem>>, vector<8x128xf32>
    tpu.vector_store %arg9[%c0_183, %c0_184], %393 {strides = array<i32>} : memref<8x128xf32, #tpu.memory_space<vmem>>, vector<8x128xf32>,
    %c0_185 = arith.constant 0 : index
    %c0_186 = arith.constant 0 : index
    %395 = vector.load %arg10[%c0_185, %c0_186] : memref<8x128xf32, #tpu.memory_space<vmem>>, vector<8x128xf32>
    tpu.vector_store %arg10[%c0_185, %c0_186], %391 {strides = array<i32>} : memref<8x128xf32, #tpu.memory_space<vmem>>, vector<8x128xf32>,
    %c2_i32_187 = arith.constant 2 : i32
    %c8_i32_188 = arith.constant 8 : i32
    %396 = arith.muli %c2_i32_187, %c8_i32_188 : i32
    %397 = tpu.assume_multiple %396, 8 : i32
    %c0_189 = arith.constant 0 : index
    %c0_190 = arith.constant 0 : index
    %398 = vector.load %arg9[%c0_189, %c0_190] : memref<8x128xf32, #tpu.memory_space<vmem>>, vector<8x128xf32>
    %399 = arith.index_cast %397 : i32 to index
    %c0_191 = arith.constant 0 : index
    %400 = vector.load %arg8[%399, %c0_191] : memref<64x512xf32, #tpu.memory_space<vmem>>, vector<8x512xf32>
    %cst_192 = arith.constant dense<0.000000e+00> : vector<8x512xf32>
    %401 = tpu.matmul %398, %312, %cst_192 {dimension_numbers = #tpu.dot_dimension_numbers<[1], [0], [0], [1], [0, 0, 1, 1], [], []>} : vector<8x128xf32>, vector<128x512xf32>, vector<8x512xf32> -> vector<8x512xf32>
    %402 = arith.addf %400, %401 : vector<8x512xf32>
    %403 = vector.extract_strided_slice %402 {offsets = [0, 0], sizes = [8, 128], strides = [1, 1]} : vector<8x512xf32> to vector<8x128xf32>
    %404 = arith.negf %403 : vector<8x128xf32>
    %405 = math.exp %404 : vector<8x128xf32>
    %cst_193 = arith.constant 1.000000e+00 : f32
    %406 = vector.broadcast %cst_193 : f32 to vector<8x128xf32>
    %407 = arith.addf %406, %405 : vector<8x128xf32>
    %408 = arith.divf %406, %407 : vector<8x128xf32>
    %409 = vector.extract_strided_slice %402 {offsets = [0, 128], sizes = [8, 128], strides = [1, 1]} : vector<8x512xf32> to vector<8x128xf32>
    %410 = arith.negf %409 : vector<8x128xf32>
    %411 = math.exp %410 : vector<8x128xf32>
    %cst_194 = arith.constant 1.000000e+00 : f32
    %412 = vector.broadcast %cst_194 : f32 to vector<8x128xf32>
    %413 = arith.addf %412, %411 : vector<8x128xf32>
    %414 = arith.divf %412, %413 : vector<8x128xf32>
    %415 = vector.extract_strided_slice %402 {offsets = [0, 256], sizes = [8, 128], strides = [1, 1]} : vector<8x512xf32> to vector<8x128xf32>
    %416 = math.tanh %415 : vector<8x128xf32>
    %417 = vector.extract_strided_slice %402 {offsets = [0, 384], sizes = [8, 128], strides = [1, 1]} : vector<8x512xf32> to vector<8x128xf32>
    %418 = arith.negf %417 : vector<8x128xf32>
    %419 = math.exp %418 : vector<8x128xf32>
    %cst_195 = arith.constant 1.000000e+00 : f32
    %420 = vector.broadcast %cst_195 : f32 to vector<8x128xf32>
    %421 = arith.addf %420, %419 : vector<8x128xf32>
    %422 = arith.divf %420, %421 : vector<8x128xf32>
    %c0_196 = arith.constant 0 : index
    %c0_197 = arith.constant 0 : index
    %423 = vector.load %arg10[%c0_196, %c0_197] : memref<8x128xf32, #tpu.memory_space<vmem>>, vector<8x128xf32>
    %424 = arith.mulf %414, %423 : vector<8x128xf32>
    %425 = arith.mulf %408, %416 : vector<8x128xf32>
    %426 = arith.addf %424, %425 : vector<8x128xf32>
    %427 = math.tanh %426 : vector<8x128xf32>
    %428 = arith.mulf %422, %427 : vector<8x128xf32>
    %c0_198 = arith.constant 0 : index
    %c0_199 = arith.constant 0 : index
    %429 = vector.load %arg9[%c0_198, %c0_199] : memref<8x128xf32, #tpu.memory_space<vmem>>, vector<8x128xf32>
    tpu.vector_store %arg9[%c0_198, %c0_199], %428 {strides = array<i32>} : memref<8x128xf32, #tpu.memory_space<vmem>>, vector<8x128xf32>,
    %c0_200 = arith.constant 0 : index
    %c0_201 = arith.constant 0 : index
    %430 = vector.load %arg10[%c0_200, %c0_201] : memref<8x128xf32, #tpu.memory_space<vmem>>, vector<8x128xf32>
    tpu.vector_store %arg10[%c0_200, %c0_201], %426 {strides = array<i32>} : memref<8x128xf32, #tpu.memory_space<vmem>>, vector<8x128xf32>,
    %c3_i32_202 = arith.constant 3 : i32
    %c8_i32_203 = arith.constant 8 : i32
    %431 = arith.muli %c3_i32_202, %c8_i32_203 : i32
    %432 = tpu.assume_multiple %431, 8 : i32
    %c0_204 = arith.constant 0 : index
    %c0_205 = arith.constant 0 : index
    %433 = vector.load %arg9[%c0_204, %c0_205] : memref<8x128xf32, #tpu.memory_space<vmem>>, vector<8x128xf32>
    %434 = arith.index_cast %432 : i32 to index
    %c0_206 = arith.constant 0 : index
    %435 = vector.load %arg8[%434, %c0_206] : memref<64x512xf32, #tpu.memory_space<vmem>>, vector<8x512xf32>
    %cst_207 = arith.constant dense<0.000000e+00> : vector<8x512xf32>
    %436 = tpu.matmul %433, %312, %cst_207 {dimension_numbers = #tpu.dot_dimension_numbers<[1], [0], [0], [1], [0, 0, 1, 1], [], []>} : vector<8x128xf32>, vector<128x512xf32>, vector<8x512xf32> -> vector<8x512xf32>
    %437 = arith.addf %435, %436 : vector<8x512xf32>
    %438 = vector.extract_strided_slice %437 {offsets = [0, 0], sizes = [8, 128], strides = [1, 1]} : vector<8x512xf32> to vector<8x128xf32>
    %439 = arith.negf %438 : vector<8x128xf32>
    %440 = math.exp %439 : vector<8x128xf32>
    %cst_208 = arith.constant 1.000000e+00 : f32
    %441 = vector.broadcast %cst_208 : f32 to vector<8x128xf32>
    %442 = arith.addf %441, %440 : vector<8x128xf32>
    %443 = arith.divf %441, %442 : vector<8x128xf32>
    %444 = vector.extract_strided_slice %437 {offsets = [0, 128], sizes = [8, 128], strides = [1, 1]} : vector<8x512xf32> to vector<8x128xf32>
    %445 = arith.negf %444 : vector<8x128xf32>
    %446 = math.exp %445 : vector<8x128xf32>
    %cst_209 = arith.constant 1.000000e+00 : f32
    %447 = vector.broadcast %cst_209 : f32 to vector<8x128xf32>
    %448 = arith.addf %447, %446 : vector<8x128xf32>
    %449 = arith.divf %447, %448 : vector<8x128xf32>
    %450 = vector.extract_strided_slice %437 {offsets = [0, 256], sizes = [8, 128], strides = [1, 1]} : vector<8x512xf32> to vector<8x128xf32>
    %451 = math.tanh %450 : vector<8x128xf32>
    %452 = vector.extract_strided_slice %437 {offsets = [0, 384], sizes = [8, 128], strides = [1, 1]} : vector<8x512xf32> to vector<8x128xf32>
    %453 = arith.negf %452 : vector<8x128xf32>
    %454 = math.exp %453 : vector<8x128xf32>
    %cst_210 = arith.constant 1.000000e+00 : f32
    %455 = vector.broadcast %cst_210 : f32 to vector<8x128xf32>
    %456 = arith.addf %455, %454 : vector<8x128xf32>
    %457 = arith.divf %455, %456 : vector<8x128xf32>
    %c0_211 = arith.constant 0 : index
    %c0_212 = arith.constant 0 : index
    %458 = vector.load %arg10[%c0_211, %c0_212] : memref<8x128xf32, #tpu.memory_space<vmem>>, vector<8x128xf32>
    %459 = arith.mulf %449, %458 : vector<8x128xf32>
    %460 = arith.mulf %443, %451 : vector<8x128xf32>
    %461 = arith.addf %459, %460 : vector<8x128xf32>
    %462 = math.tanh %461 : vector<8x128xf32>
    %463 = arith.mulf %457, %462 : vector<8x128xf32>
    %c0_213 = arith.constant 0 : index
    %c0_214 = arith.constant 0 : index
    %464 = vector.load %arg9[%c0_213, %c0_214] : memref<8x128xf32, #tpu.memory_space<vmem>>, vector<8x128xf32>
    tpu.vector_store %arg9[%c0_213, %c0_214], %463 {strides = array<i32>} : memref<8x128xf32, #tpu.memory_space<vmem>>, vector<8x128xf32>,
    %c0_215 = arith.constant 0 : index
    %c0_216 = arith.constant 0 : index
    %465 = vector.load %arg10[%c0_215, %c0_216] : memref<8x128xf32, #tpu.memory_space<vmem>>, vector<8x128xf32>
    tpu.vector_store %arg10[%c0_215, %c0_216], %461 {strides = array<i32>} : memref<8x128xf32, #tpu.memory_space<vmem>>, vector<8x128xf32>,
    %c4_i32_217 = arith.constant 4 : i32
    %c8_i32_218 = arith.constant 8 : i32
    %466 = arith.muli %c4_i32_217, %c8_i32_218 : i32
    %467 = tpu.assume_multiple %466, 8 : i32
    %c0_219 = arith.constant 0 : index
    %c0_220 = arith.constant 0 : index
    %468 = vector.load %arg9[%c0_219, %c0_220] : memref<8x128xf32, #tpu.memory_space<vmem>>, vector<8x128xf32>
    %469 = arith.index_cast %467 : i32 to index
    %c0_221 = arith.constant 0 : index
    %470 = vector.load %arg8[%469, %c0_221] : memref<64x512xf32, #tpu.memory_space<vmem>>, vector<8x512xf32>
    %cst_222 = arith.constant dense<0.000000e+00> : vector<8x512xf32>
    %471 = tpu.matmul %468, %312, %cst_222 {dimension_numbers = #tpu.dot_dimension_numbers<[1], [0], [0], [1], [0, 0, 1, 1], [], []>} : vector<8x128xf32>, vector<128x512xf32>, vector<8x512xf32> -> vector<8x512xf32>
    %472 = arith.addf %470, %471 : vector<8x512xf32>
    %473 = vector.extract_strided_slice %472 {offsets = [0, 0], sizes = [8, 128], strides = [1, 1]} : vector<8x512xf32> to vector<8x128xf32>
    %474 = arith.negf %473 : vector<8x128xf32>
    %475 = math.exp %474 : vector<8x128xf32>
    %cst_223 = arith.constant 1.000000e+00 : f32
    %476 = vector.broadcast %cst_223 : f32 to vector<8x128xf32>
    %477 = arith.addf %476, %475 : vector<8x128xf32>
    %478 = arith.divf %476, %477 : vector<8x128xf32>
    %479 = vector.extract_strided_slice %472 {offsets = [0, 128], sizes = [8, 128], strides = [1, 1]} : vector<8x512xf32> to vector<8x128xf32>
    %480 = arith.negf %479 : vector<8x128xf32>
    %481 = math.exp %480 : vector<8x128xf32>
    %cst_224 = arith.constant 1.000000e+00 : f32
    %482 = vector.broadcast %cst_224 : f32 to vector<8x128xf32>
    %483 = arith.addf %482, %481 : vector<8x128xf32>
    %484 = arith.divf %482, %483 : vector<8x128xf32>
    %485 = vector.extract_strided_slice %472 {offsets = [0, 256], sizes = [8, 128], strides = [1, 1]} : vector<8x512xf32> to vector<8x128xf32>
    %486 = math.tanh %485 : vector<8x128xf32>
    %487 = vector.extract_strided_slice %472 {offsets = [0, 384], sizes = [8, 128], strides = [1, 1]} : vector<8x512xf32> to vector<8x128xf32>
    %488 = arith.negf %487 : vector<8x128xf32>
    %489 = math.exp %488 : vector<8x128xf32>
    %cst_225 = arith.constant 1.000000e+00 : f32
    %490 = vector.broadcast %cst_225 : f32 to vector<8x128xf32>
    %491 = arith.addf %490, %489 : vector<8x128xf32>
    %492 = arith.divf %490, %491 : vector<8x128xf32>
    %c0_226 = arith.constant 0 : index
    %c0_227 = arith.constant 0 : index
    %493 = vector.load %arg10[%c0_226, %c0_227] : memref<8x128xf32, #tpu.memory_space<vmem>>, vector<8x128xf32>
    %494 = arith.mulf %484, %493 : vector<8x128xf32>
    %495 = arith.mulf %478, %486 : vector<8x128xf32>
    %496 = arith.addf %494, %495 : vector<8x128xf32>
    %497 = math.tanh %496 : vector<8x128xf32>
    %498 = arith.mulf %492, %497 : vector<8x128xf32>
    %c0_228 = arith.constant 0 : index
    %c0_229 = arith.constant 0 : index
    %499 = vector.load %arg9[%c0_228, %c0_229] : memref<8x128xf32, #tpu.memory_space<vmem>>, vector<8x128xf32>
    tpu.vector_store %arg9[%c0_228, %c0_229], %498 {strides = array<i32>} : memref<8x128xf32, #tpu.memory_space<vmem>>, vector<8x128xf32>,
    %c0_230 = arith.constant 0 : index
    %c0_231 = arith.constant 0 : index
    %500 = vector.load %arg10[%c0_230, %c0_231] : memref<8x128xf32, #tpu.memory_space<vmem>>, vector<8x128xf32>
    tpu.vector_store %arg10[%c0_230, %c0_231], %496 {strides = array<i32>} : memref<8x128xf32, #tpu.memory_space<vmem>>, vector<8x128xf32>,
    %c5_i32_232 = arith.constant 5 : i32
    %c8_i32_233 = arith.constant 8 : i32
    %501 = arith.muli %c5_i32_232, %c8_i32_233 : i32
    %502 = tpu.assume_multiple %501, 8 : i32
    %c0_234 = arith.constant 0 : index
    %c0_235 = arith.constant 0 : index
    %503 = vector.load %arg9[%c0_234, %c0_235] : memref<8x128xf32, #tpu.memory_space<vmem>>, vector<8x128xf32>
    %504 = arith.index_cast %502 : i32 to index
    %c0_236 = arith.constant 0 : index
    %505 = vector.load %arg8[%504, %c0_236] : memref<64x512xf32, #tpu.memory_space<vmem>>, vector<8x512xf32>
    %cst_237 = arith.constant dense<0.000000e+00> : vector<8x512xf32>
    %506 = tpu.matmul %503, %312, %cst_237 {dimension_numbers = #tpu.dot_dimension_numbers<[1], [0], [0], [1], [0, 0, 1, 1], [], []>} : vector<8x128xf32>, vector<128x512xf32>, vector<8x512xf32> -> vector<8x512xf32>
    %507 = arith.addf %505, %506 : vector<8x512xf32>
    %508 = vector.extract_strided_slice %507 {offsets = [0, 0], sizes = [8, 128], strides = [1, 1]} : vector<8x512xf32> to vector<8x128xf32>
    %509 = arith.negf %508 : vector<8x128xf32>
    %510 = math.exp %509 : vector<8x128xf32>
    %cst_238 = arith.constant 1.000000e+00 : f32
    %511 = vector.broadcast %cst_238 : f32 to vector<8x128xf32>
    %512 = arith.addf %511, %510 : vector<8x128xf32>
    %513 = arith.divf %511, %512 : vector<8x128xf32>
    %514 = vector.extract_strided_slice %507 {offsets = [0, 128], sizes = [8, 128], strides = [1, 1]} : vector<8x512xf32> to vector<8x128xf32>
    %515 = arith.negf %514 : vector<8x128xf32>
    %516 = math.exp %515 : vector<8x128xf32>
    %cst_239 = arith.constant 1.000000e+00 : f32
    %517 = vector.broadcast %cst_239 : f32 to vector<8x128xf32>
    %518 = arith.addf %517, %516 : vector<8x128xf32>
    %519 = arith.divf %517, %518 : vector<8x128xf32>
    %520 = vector.extract_strided_slice %507 {offsets = [0, 256], sizes = [8, 128], strides = [1, 1]} : vector<8x512xf32> to vector<8x128xf32>
    %521 = math.tanh %520 : vector<8x128xf32>
    %522 = vector.extract_strided_slice %507 {offsets = [0, 384], sizes = [8, 128], strides = [1, 1]} : vector<8x512xf32> to vector<8x128xf32>
    %523 = arith.negf %522 : vector<8x128xf32>
    %524 = math.exp %523 : vector<8x128xf32>
    %cst_240 = arith.constant 1.000000e+00 : f32
    %525 = vector.broadcast %cst_240 : f32 to vector<8x128xf32>
    %526 = arith.addf %525, %524 : vector<8x128xf32>
    %527 = arith.divf %525, %526 : vector<8x128xf32>
    %c0_241 = arith.constant 0 : index
    %c0_242 = arith.constant 0 : index
    %528 = vector.load %arg10[%c0_241, %c0_242] : memref<8x128xf32, #tpu.memory_space<vmem>>, vector<8x128xf32>
    %529 = arith.mulf %519, %528 : vector<8x128xf32>
    %530 = arith.mulf %513, %521 : vector<8x128xf32>
    %531 = arith.addf %529, %530 : vector<8x128xf32>
    %532 = math.tanh %531 : vector<8x128xf32>
    %533 = arith.mulf %527, %532 : vector<8x128xf32>
    %c0_243 = arith.constant 0 : index
    %c0_244 = arith.constant 0 : index
    %534 = vector.load %arg9[%c0_243, %c0_244] : memref<8x128xf32, #tpu.memory_space<vmem>>, vector<8x128xf32>
    tpu.vector_store %arg9[%c0_243, %c0_244], %533 {strides = array<i32>} : memref<8x128xf32, #tpu.memory_space<vmem>>, vector<8x128xf32>,
    %c0_245 = arith.constant 0 : index
    %c0_246 = arith.constant 0 : index
    %535 = vector.load %arg10[%c0_245, %c0_246] : memref<8x128xf32, #tpu.memory_space<vmem>>, vector<8x128xf32>
    tpu.vector_store %arg10[%c0_245, %c0_246], %531 {strides = array<i32>} : memref<8x128xf32, #tpu.memory_space<vmem>>, vector<8x128xf32>,
    %c6_i32_247 = arith.constant 6 : i32
    %c8_i32_248 = arith.constant 8 : i32
    %536 = arith.muli %c6_i32_247, %c8_i32_248 : i32
    %537 = tpu.assume_multiple %536, 8 : i32
    %c0_249 = arith.constant 0 : index
    %c0_250 = arith.constant 0 : index
    %538 = vector.load %arg9[%c0_249, %c0_250] : memref<8x128xf32, #tpu.memory_space<vmem>>, vector<8x128xf32>
    %539 = arith.index_cast %537 : i32 to index
    %c0_251 = arith.constant 0 : index
    %540 = vector.load %arg8[%539, %c0_251] : memref<64x512xf32, #tpu.memory_space<vmem>>, vector<8x512xf32>
    %cst_252 = arith.constant dense<0.000000e+00> : vector<8x512xf32>
    %541 = tpu.matmul %538, %312, %cst_252 {dimension_numbers = #tpu.dot_dimension_numbers<[1], [0], [0], [1], [0, 0, 1, 1], [], []>} : vector<8x128xf32>, vector<128x512xf32>, vector<8x512xf32> -> vector<8x512xf32>
    %542 = arith.addf %540, %541 : vector<8x512xf32>
    %543 = vector.extract_strided_slice %542 {offsets = [0, 0], sizes = [8, 128], strides = [1, 1]} : vector<8x512xf32> to vector<8x128xf32>
    %544 = arith.negf %543 : vector<8x128xf32>
    %545 = math.exp %544 : vector<8x128xf32>
    %cst_253 = arith.constant 1.000000e+00 : f32
    %546 = vector.broadcast %cst_253 : f32 to vector<8x128xf32>
    %547 = arith.addf %546, %545 : vector<8x128xf32>
    %548 = arith.divf %546, %547 : vector<8x128xf32>
    %549 = vector.extract_strided_slice %542 {offsets = [0, 128], sizes = [8, 128], strides = [1, 1]} : vector<8x512xf32> to vector<8x128xf32>
    %550 = arith.negf %549 : vector<8x128xf32>
    %551 = math.exp %550 : vector<8x128xf32>
    %cst_254 = arith.constant 1.000000e+00 : f32
    %552 = vector.broadcast %cst_254 : f32 to vector<8x128xf32>
    %553 = arith.addf %552, %551 : vector<8x128xf32>
    %554 = arith.divf %552, %553 : vector<8x128xf32>
    %555 = vector.extract_strided_slice %542 {offsets = [0, 256], sizes = [8, 128], strides = [1, 1]} : vector<8x512xf32> to vector<8x128xf32>
    %556 = math.tanh %555 : vector<8x128xf32>
    %557 = vector.extract_strided_slice %542 {offsets = [0, 384], sizes = [8, 128], strides = [1, 1]} : vector<8x512xf32> to vector<8x128xf32>
    %558 = arith.negf %557 : vector<8x128xf32>
    %559 = math.exp %558 : vector<8x128xf32>
    %cst_255 = arith.constant 1.000000e+00 : f32
    %560 = vector.broadcast %cst_255 : f32 to vector<8x128xf32>
    %561 = arith.addf %560, %559 : vector<8x128xf32>
    %562 = arith.divf %560, %561 : vector<8x128xf32>
    %c0_256 = arith.constant 0 : index
    %c0_257 = arith.constant 0 : index
    %563 = vector.load %arg10[%c0_256, %c0_257] : memref<8x128xf32, #tpu.memory_space<vmem>>, vector<8x128xf32>
    %564 = arith.mulf %554, %563 : vector<8x128xf32>
    %565 = arith.mulf %548, %556 : vector<8x128xf32>
    %566 = arith.addf %564, %565 : vector<8x128xf32>
    %567 = math.tanh %566 : vector<8x128xf32>
    %568 = arith.mulf %562, %567 : vector<8x128xf32>
    %c0_258 = arith.constant 0 : index
    %c0_259 = arith.constant 0 : index
    %569 = vector.load %arg9[%c0_258, %c0_259] : memref<8x128xf32, #tpu.memory_space<vmem>>, vector<8x128xf32>
    tpu.vector_store %arg9[%c0_258, %c0_259], %568 {strides = array<i32>} : memref<8x128xf32, #tpu.memory_space<vmem>>, vector<8x128xf32>,
    %c0_260 = arith.constant 0 : index
    %c0_261 = arith.constant 0 : index
    %570 = vector.load %arg10[%c0_260, %c0_261] : memref<8x128xf32, #tpu.memory_space<vmem>>, vector<8x128xf32>
    tpu.vector_store %arg10[%c0_260, %c0_261], %566 {strides = array<i32>} : memref<8x128xf32, #tpu.memory_space<vmem>>, vector<8x128xf32>,
    %c7_i32_262 = arith.constant 7 : i32
    %c8_i32_263 = arith.constant 8 : i32
    %571 = arith.muli %c7_i32_262, %c8_i32_263 : i32
    %572 = tpu.assume_multiple %571, 8 : i32
    %c0_264 = arith.constant 0 : index
    %c0_265 = arith.constant 0 : index
    %573 = vector.load %arg9[%c0_264, %c0_265] : memref<8x128xf32, #tpu.memory_space<vmem>>, vector<8x128xf32>
    %574 = arith.index_cast %572 : i32 to index
    %c0_266 = arith.constant 0 : index
    %575 = vector.load %arg8[%574, %c0_266] : memref<64x512xf32, #tpu.memory_space<vmem>>, vector<8x512xf32>
    %cst_267 = arith.constant dense<0.000000e+00> : vector<8x512xf32>
    %576 = tpu.matmul %573, %312, %cst_267 {dimension_numbers = #tpu.dot_dimension_numbers<[1], [0], [0], [1], [0, 0, 1, 1], [], []>} : vector<8x128xf32>, vector<128x512xf32>, vector<8x512xf32> -> vector<8x512xf32>
    %577 = arith.addf %575, %576 : vector<8x512xf32>
    %578 = vector.extract_strided_slice %577 {offsets = [0, 0], sizes = [8, 128], strides = [1, 1]} : vector<8x512xf32> to vector<8x128xf32>
    %579 = arith.negf %578 : vector<8x128xf32>
    %580 = math.exp %579 : vector<8x128xf32>
    %cst_268 = arith.constant 1.000000e+00 : f32
    %581 = vector.broadcast %cst_268 : f32 to vector<8x128xf32>
    %582 = arith.addf %581, %580 : vector<8x128xf32>
    %583 = arith.divf %581, %582 : vector<8x128xf32>
    %584 = vector.extract_strided_slice %577 {offsets = [0, 128], sizes = [8, 128], strides = [1, 1]} : vector<8x512xf32> to vector<8x128xf32>
    %585 = arith.negf %584 : vector<8x128xf32>
    %586 = math.exp %585 : vector<8x128xf32>
    %cst_269 = arith.constant 1.000000e+00 : f32
    %587 = vector.broadcast %cst_269 : f32 to vector<8x128xf32>
    %588 = arith.addf %587, %586 : vector<8x128xf32>
    %589 = arith.divf %587, %588 : vector<8x128xf32>
    %590 = vector.extract_strided_slice %577 {offsets = [0, 256], sizes = [8, 128], strides = [1, 1]} : vector<8x512xf32> to vector<8x128xf32>
    %591 = math.tanh %590 : vector<8x128xf32>
    %592 = vector.extract_strided_slice %577 {offsets = [0, 384], sizes = [8, 128], strides = [1, 1]} : vector<8x512xf32> to vector<8x128xf32>
    %593 = arith.negf %592 : vector<8x128xf32>
    %594 = math.exp %593 : vector<8x128xf32>
    %cst_270 = arith.constant 1.000000e+00 : f32
    %595 = vector.broadcast %cst_270 : f32 to vector<8x128xf32>
    %596 = arith.addf %595, %594 : vector<8x128xf32>
    %597 = arith.divf %595, %596 : vector<8x128xf32>
    %c0_271 = arith.constant 0 : index
    %c0_272 = arith.constant 0 : index
    %598 = vector.load %arg10[%c0_271, %c0_272] : memref<8x128xf32, #tpu.memory_space<vmem>>, vector<8x128xf32>
    %599 = arith.mulf %589, %598 : vector<8x128xf32>
    %600 = arith.mulf %583, %591 : vector<8x128xf32>
    %601 = arith.addf %599, %600 : vector<8x128xf32>
    %602 = math.tanh %601 : vector<8x128xf32>
    %603 = arith.mulf %597, %602 : vector<8x128xf32>
    %c0_273 = arith.constant 0 : index
    %c0_274 = arith.constant 0 : index
    %604 = vector.load %arg9[%c0_273, %c0_274] : memref<8x128xf32, #tpu.memory_space<vmem>>, vector<8x128xf32>
    tpu.vector_store %arg9[%c0_273, %c0_274], %603 {strides = array<i32>} : memref<8x128xf32, #tpu.memory_space<vmem>>, vector<8x128xf32>,
    %c0_275 = arith.constant 0 : index
    %c0_276 = arith.constant 0 : index
    %605 = vector.load %arg10[%c0_275, %c0_276] : memref<8x128xf32, #tpu.memory_space<vmem>>, vector<8x128xf32>
    tpu.vector_store %arg10[%c0_275, %c0_276], %601 {strides = array<i32>} : memref<8x128xf32, #tpu.memory_space<vmem>>, vector<8x128xf32>,
    %c8_i32_277 = arith.constant 8 : i32
    %c0_278 = arith.constant 0 : index
    %c0_279 = arith.constant 0 : index
    %606 = vector.load %arg9[%c0_278, %c0_279] : memref<8x128xf32, #tpu.memory_space<vmem>>, vector<8x128xf32>
    %c0_280 = arith.constant 0 : index
    %c0_281 = arith.constant 0 : index
    %607 = vector.load %arg4[%c0_280, %c0_281] : memref<128x4xf32, #tpu.memory_space<vmem>>, vector<128x4xf32>
    %cst_282 = arith.constant dense<0.000000e+00> : vector<8x4xf32>
    %608 = tpu.matmul %606, %607, %cst_282 {dimension_numbers = #tpu.dot_dimension_numbers<[1], [0], [0], [1], [0, 0, 1, 1], [], []>} : vector<8x128xf32>, vector<128x4xf32>, vector<8x4xf32> -> vector<8x4xf32>
    %c0_283 = arith.constant 0 : index
    %c0_284 = arith.constant 0 : index
    %609 = vector.load %arg5[%c0_283, %c0_284] : memref<1x4xf32, #tpu.memory_space<vmem>>, vector<1x4xf32>
    %610 = vector.broadcast %609 : vector<1x4xf32> to vector<8x4xf32>
    %611 = arith.addf %608, %610 : vector<8x4xf32>
    %c0_285 = arith.constant 0 : index
    %c0_286 = arith.constant 0 : index
    %612 = vector.load %arg6[%c0_285, %c0_286] : memref<8x4xf32, #tpu.memory_space<vmem>>, vector<8x4xf32>
    tpu.vector_store %arg6[%c0_285, %c0_286], %611 {strides = array<i32>} : memref<8x4xf32, #tpu.memory_space<vmem>>, vector<8x4xf32>,
    return
  }
}

</mosaic_0001>

<llo_original>
// kernel: tpu_custom_call.1
$region0: #{tpu_custom_call.1}
  #allocation0 [shape = 'u32[]', space=smem, size = 0x4, offset = 0x4, fixed_abs, tag = 'smem constant byte address 0x4 - core index']
  #allocation1 [shape = 'u32[144,128]{1,0:T(1,128)}', space=vmem, size = 0x12000, scoped, tag = 'internal scratch']
  #allocation2 [shape = 'f32[64,128]{1,0:T(8,128)}', space=vmem, size = 0x8000, scoped, tag = 'scratch operand']
  #allocation3 [shape = 'f32[64,512]{1,0:T(8,128)}', space=vmem, size = 0x20000, scoped, tag = 'scratch operand']
  #allocation4 [shape = 'f32[8,128]{1,0:T(8,128)}', space=vmem, size = 0x1000, scoped, tag = 'scratch operand']
  #allocation5 [shape = 'f32[8,128]{1,0:T(8,128)}', space=vmem, size = 0x1000, scoped, tag = 'scratch operand']
  %s0 = inlined_call_operand.vmem [shape: f32[64,128], index: 0, kind: input, shape index: {}]
  %s1 = inlined_call_operand.hbm [shape: f32[2,128,512], index: 1, kind: input, shape index: {}]
  %s2 = inlined_call_operand.hbm [shape: f32[2,128,512], index: 2, kind: input, shape index: {}]
  %s3 = inlined_call_operand.vmem [shape: f32[2,1,512], index: 3, kind: input, shape index: {}]
  %s4 = inlined_call_operand.vmem [shape: f32[128,4], index: 4, kind: input, shape index: {}]
  %s5 = inlined_call_operand.vmem [shape: f32[1,4], index: 5, kind: input, shape index: {}]
  %s6 = inlined_call_operand.vmem [shape: f32[8,4], index: 6, kind: output, shape index: {}]
  %s7 = sld [smem:[#allocation0]]
  $region42: #{tpu_custom_call.1} parent=0
    _
  %s9 = ssub.s32 1, %s7
  %s10 = scalar_select 0, %s9, %s7
  $region1: #{tpu_custom_call.1} parent=0
    #allocation6 [shape = 'u8[524288]{0}', space=vmem, size = 0x80000, scoped, tag = 'input window, operand 1, single buffered']
    #allocation7 [shape = 's32[1]{0}', space=sflag, size = 0x4, scoped, tag = 'scoped memory for tpu_custom_call.1']
    #allocation8 [shape = 'u8[524288]{0}', space=vmem, size = 0x80000, scoped, tag = 'input window, operand 2, single buffered']
    #allocation9 [shape = 's32[1]{0}', space=sflag, size = 0x4, scoped, tag = 'scoped memory for tpu_custom_call.1']
    %11 = vsyncpa [#allocation7], 0
    %12 = vsyncpa [#allocation9], 0
    // Predicated region
    $region2: #{tpu_custom_call.1} parent=1 // pred_check
      _
    $region3: #{tpu_custom_call.1} parent=1 // pred_check_branch
      %14 = sbr.rel (0) target = $region5
    $region4: #{tpu_custom_call.1} parent=1 // pred_region
      _
    $region5: #{tpu_custom_call.1} parent=1 // pred_fallthru
      _
    // Predicated region
    $region6: #{tpu_custom_call.1} parent=1 // pred_check
      _
    $region7: #{tpu_custom_call.1} parent=1 // pred_check_branch
      %16 = sbr.rel (0) target = $region9
    $region8: #{tpu_custom_call.1} parent=1 // pred_region
      %s18 = ssub.s32 16384, 16384
      %19 = vsyncadd [#allocation7], %s18
      %s20 = sshll.u32 [#allocation6], 4
      %s21 = int_to_ptr.vmem [resolvable:$true] %s20
      %26 = dma.hbm_to_vmem [thread:$0]  %s1, 16384, %s21, [#allocation7], 512, 512, 32
    $region9: #{tpu_custom_call.1} parent=1 // pred_fallthru
      _
    // Predicated region
    $region10: #{tpu_custom_call.1} parent=1 // pred_check
      _
    $region11: #{tpu_custom_call.1} parent=1 // pred_check_branch
      %28 = sbr.rel (0) target = $region13
    $region12: #{tpu_custom_call.1} parent=1 // pred_region
      %s30 = ssub.s32 16384, 16384
      %31 = vsyncadd [#allocation9], %s30
      %s32 = sshll.u32 [#allocation8], 4
      %s33 = int_to_ptr.vmem [resolvable:$true] %s32
      %38 = dma.hbm_to_vmem [thread:$0]  %s2, 16384, %s33, [#allocation9], 512, 512, 32
    $region13: #{tpu_custom_call.1} parent=1 // pred_fallthru
      _
    // Predicated region
    $region14: #{tpu_custom_call.1} parent=1 // pred_check
      _
    $region15: #{tpu_custom_call.1} parent=1 // pred_check_branch
      %40 = sbr.rel (0) target = $region17
    $region16: #{tpu_custom_call.1} parent=1 // pred_region
      _
    $region17: #{tpu_custom_call.1} parent=1 // pred_fallthru
      _
    // Predicated region
    $region18: #{tpu_custom_call.1} parent=1 // pred_check
      _
    $region19: #{tpu_custom_call.1} parent=1 // pred_check_branch
      %42 = sbr.rel (0) target = $region21
    $region20: #{tpu_custom_call.1} parent=1 // pred_region
      _
    $region21: #{tpu_custom_call.1} parent=1 // pred_fallthru
      _
    // Predicated region
    $region22: #{tpu_custom_call.1} parent=1 // pred_check
      _
    $region23: #{tpu_custom_call.1} parent=1 // pred_check_branch
      %44 = sbr.rel (0) target = $region25
    $region24: #{tpu_custom_call.1} parent=1 // pred_region
      _
    $region25: #{tpu_custom_call.1} parent=1 // pred_fallthru
      _
    // Predicated region
    $region26: #{tpu_custom_call.1} parent=1 // pred_check
      _
    $region27: #{tpu_custom_call.1} parent=1 // pred_check_branch
      %46 = sbr.rel (0) target = $region29
    $region28: #{tpu_custom_call.1} parent=1 // pred_region
      %47 = dma.done [#allocation7], 16384
    $region29: #{tpu_custom_call.1} parent=1 // pred_fallthru
      _
    // Predicated region
    $region30: #{tpu_custom_call.1} parent=1 // pred_check
      _
    $region31: #{tpu_custom_call.1} parent=1 // pred_check_branch
      %49 = sbr.rel (0) target = $region33
    $region32: #{tpu_custom_call.1} parent=1 // pred_region
      %50 = dma.done [#allocation9], 16384
    $region33: #{tpu_custom_call.1} parent=1 // pred_fallthru
      _
    %v51 = vld [vmem:[#allocation8] sm:$0xff]
    %v52 = vld [vmem:[#allocation8 + $0x8] sm:$0xff]
    %v53 = vld [vmem:[#allocation8 + $0x10] sm:$0xff]
    %v54 = vld [vmem:[#allocation8 + $0x18] sm:$0xff]
    %v55 = vld [vmem:[#allocation8 + $0x20] sm:$0xff]
    %v56 = vld [vmem:[#allocation8 + $0x28] sm:$0xff]
    %v57 = vld [vmem:[#allocation8 + $0x30] sm:$0xff]
    %v58 = vld [vmem:[#allocation8 + $0x38] sm:$0xff]
    %v59 = vld [vmem:[#allocation8 + $0x40] sm:$0xff]
    %v60 = vld [vmem:[#allocation8 + $0x48] sm:$0xff]
    %v61 = vld [vmem:[#allocation8 + $0x50] sm:$0xff]
    %v62 = vld [vmem:[#allocation8 + $0x58] sm:$0xff]
    %v63 = vld [vmem:[#allocation8 + $0x60] sm:$0xff]
    %v64 = vld [vmem:[#allocation8 + $0x68] sm:$0xff]
    %v65 = vld [vmem:[#allocation8 + $0x70] sm:$0xff]
    %v66 = vld [vmem:[#allocation8 + $0x78] sm:$0xff]
    %v67 = vld [vmem:[#allocation8 + $0x80] sm:$0xff]
    %v68 = vld [vmem:[#allocation8 + $0x88] sm:$0xff]
    %v69 = vld [vmem:[#allocation8 + $0x90] sm:$0xff]
    %v70 = vld [vmem:[#allocation8 + $0x98] sm:$0xff]
    %v71 = vld [vmem:[#allocation8 + $0xa0] sm:$0xff]
    %v72 = vld [vmem:[#allocation8 + $0xa8] sm:$0xff]
    %v73 = vld [vmem:[#allocation8 + $0xb0] sm:$0xff]
    %v74 = vld [vmem:[#allocation8 + $0xb8] sm:$0xff]
    %v75 = vld [vmem:[#allocation8 + $0xc0] sm:$0xff]
    %v76 = vld [vmem:[#allocation8 + $0xc8] sm:$0xff]
    %v77 = vld [vmem:[#allocation8 + $0xd0] sm:$0xff]
    %v78 = vld [vmem:[#allocation8 + $0xd8] sm:$0xff]
    %v79 = vld [vmem:[#allocation8 + $0xe0] sm:$0xff]
    %v80 = vld [vmem:[#allocation8 + $0xe8] sm:$0xff]
    %v81 = vld [vmem:[#allocation8 + $0xf0] sm:$0xff]
    %v82 = vld [vmem:[#allocation8 + $0xf8] sm:$0xff]
    %v83 = vld [vmem:[#allocation8 + $0x100] sm:$0xff]
    %v84 = vld [vmem:[#allocation8 + $0x108] sm:$0xff]
    %v85 = vld [vmem:[#allocation8 + $0x110] sm:$0xff]
    %v86 = vld [vmem:[#allocation8 + $0x118] sm:$0xff]
    %v87 = vld [vmem:[#allocation8 + $0x120] sm:$0xff]
    %v88 = vld [vmem:[#allocation8 + $0x128] sm:$0xff]
    %v89 = vld [vmem:[#allocation8 + $0x130] sm:$0xff]
    %v90 = vld [vmem:[#allocation8 + $0x138] sm:$0xff]
    %v91 = vld [vmem:[#allocation8 + $0x140] sm:$0xff]
    %v92 = vld [vmem:[#allocation8 + $0x148] sm:$0xff]
    %v93 = vld [vmem:[#allocation8 + $0x150] sm:$0xff]
    %v94 = vld [vmem:[#allocation8 + $0x158] sm:$0xff]
    %v95 = vld [vmem:[#allocation8 + $0x160] sm:$0xff]
    %v96 = vld [vmem:[#allocation8 + $0x168] sm:$0xff]
    %v97 = vld [vmem:[#allocation8 + $0x170] sm:$0xff]
    %v98 = vld [vmem:[#allocation8 + $0x178] sm:$0xff]
    %v99 = vld [vmem:[#allocation8 + $0x180] sm:$0xff]
    %v100 = vld [vmem:[#allocation8 + $0x188] sm:$0xff]
    %v101 = vld [vmem:[#allocation8 + $0x190] sm:$0xff]
    %v102 = vld [vmem:[#allocation8 + $0x198] sm:$0xff]
    %v103 = vld [vmem:[#allocation8 + $0x1a0] sm:$0xff]
    %v104 = vld [vmem:[#allocation8 + $0x1a8] sm:$0xff]
    %v105 = vld [vmem:[#allocation8 + $0x1b0] sm:$0xff]
    %v106 = vld [vmem:[#allocation8 + $0x1b8] sm:$0xff]
    %v107 = vld [vmem:[#allocation8 + $0x1c0] sm:$0xff]
    %v108 = vld [vmem:[#allocation8 + $0x1c8] sm:$0xff]
    %v109 = vld [vmem:[#allocation8 + $0x1d0] sm:$0xff]
    %v110 = vld [vmem:[#allocation8 + $0x1d8] sm:$0xff]
    %v111 = vld [vmem:[#allocation8 + $0x1e0] sm:$0xff]
    %v112 = vld [vmem:[#allocation8 + $0x1e8] sm:$0xff]
    %v113 = vld [vmem:[#allocation8 + $0x1f0] sm:$0xff]
    %v114 = vld [vmem:[#allocation8 + $0x1f8] sm:$0xff]
    %v115 = vld [vmem:[%s0] sm:$0xff]
    %v116 = vld [vmem:[%s0 + $0x8] sm:$0xff]
    %v117 = vld [vmem:[%s0 + $0x10] sm:$0xff]
    %v118 = vld [vmem:[%s0 + $0x18] sm:$0xff]
    %v119 = vld [vmem:[%s0 + $0x20] sm:$0xff]
    %v120 = vld [vmem:[%s0 + $0x28] sm:$0xff]
    %v121 = vld [vmem:[%s0 + $0x30] sm:$0xff]
    %v122 = vld [vmem:[%s0 + $0x38] sm:$0xff]
    %v123 = vld [vmem:[#allocation6] sm:$0xff]
    %v124 = vld [vmem:[#allocation6 + $0x8] sm:$0xff]
    %v125 = vld [vmem:[#allocation6 + $0x10] sm:$0xff]
    %v126 = vld [vmem:[#allocation6 + $0x18] sm:$0xff]
    %v127 = vld [vmem:[#allocation6 + $0x20] sm:$0xff]
    %v128 = vld [vmem:[#allocation6 + $0x28] sm:$0xff]
    %v129 = vld [vmem:[#allocation6 + $0x30] sm:$0xff]
    %v130 = vld [vmem:[#allocation6 + $0x38] sm:$0xff]
    %v131 = vld [vmem:[#allocation6 + $0x40] sm:$0xff]
    %v132 = vld [vmem:[#allocation6 + $0x48] sm:$0xff]
    %v133 = vld [vmem:[#allocation6 + $0x50] sm:$0xff]
    %v134 = vld [vmem:[#allocation6 + $0x58] sm:$0xff]
    %v135 = vld [vmem:[#allocation6 + $0x60] sm:$0xff]
    %v136 = vld [vmem:[#allocation6 + $0x68] sm:$0xff]
    %v137 = vld [vmem:[#allocation6 + $0x70] sm:$0xff]
    %v138 = vld [vmem:[#allocation6 + $0x78] sm:$0xff]
    %v139 = vld [vmem:[#allocation6 + $0x80] sm:$0xff]
    %v140 = vld [vmem:[#allocation6 + $0x88] sm:$0xff]
    %v141 = vld [vmem:[#allocation6 + $0x90] sm:$0xff]
    %v142 = vld [vmem:[#allocation6 + $0x98] sm:$0xff]
    %v143 = vld [vmem:[#allocation6 + $0xa0] sm:$0xff]
    %v144 = vld [vmem:[#allocation6 + $0xa8] sm:$0xff]
    %v145 = vld [vmem:[#allocation6 + $0xb0] sm:$0xff]
    %v146 = vld [vmem:[#allocation6 + $0xb8] sm:$0xff]
    %v147 = vld [vmem:[#allocation6 + $0xc0] sm:$0xff]
    %v148 = vld [vmem:[#allocation6 + $0xc8] sm:$0xff]
    %v149 = vld [vmem:[#allocation6 + $0xd0] sm:$0xff]
    %v150 = vld [vmem:[#allocation6 + $0xd8] sm:$0xff]
    %v151 = vld [vmem:[#allocation6 + $0xe0] sm:$0xff]
    %v152 = vld [vmem:[#allocation6 + $0xe8] sm:$0xff]
    %v153 = vld [vmem:[#allocation6 + $0xf0] sm:$0xff]
    %v154 = vld [vmem:[#allocation6 + $0xf8] sm:$0xff]
    %v155 = vld [vmem:[#allocation6 + $0x100] sm:$0xff]
    %v156 = vld [vmem:[#allocation6 + $0x108] sm:$0xff]
    %v157 = vld [vmem:[#allocation6 + $0x110] sm:$0xff]
    %v158 = vld [vmem:[#allocation6 + $0x118] sm:$0xff]
    %v159 = vld [vmem:[#allocation6 + $0x120] sm:$0xff]
    %v160 = vld [vmem:[#allocation6 + $0x128] sm:$0xff]
    %v161 = vld [vmem:[#allocation6 + $0x130] sm:$0xff]
    %v162 = vld [vmem:[#allocation6 + $0x138] sm:$0xff]
    %v163 = vld [vmem:[#allocation6 + $0x140] sm:$0xff]
    %v164 = vld [vmem:[#allocation6 + $0x148] sm:$0xff]
    %v165 = vld [vmem:[#allocation6 + $0x150] sm:$0xff]
    %v166 = vld [vmem:[#allocation6 + $0x158] sm:$0xff]
    %v167 = vld [vmem:[#allocation6 + $0x160] sm:$0xff]
    %v168 = vld [vmem:[#allocation6 + $0x168] sm:$0xff]
    %v169 = vld [vmem:[#allocation6 + $0x170] sm:$0xff]
    %v170 = vld [vmem:[#allocation6 + $0x178] sm:$0xff]
    %v171 = vld [vmem:[#allocation6 + $0x180] sm:$0xff]
    %v172 = vld [vmem:[#allocation6 + $0x188] sm:$0xff]
    %v173 = vld [vmem:[#allocation6 + $0x190] sm:$0xff]
    %v174 = vld [vmem:[#allocation6 + $0x198] sm:$0xff]
    %v175 = vld [vmem:[#allocation6 + $0x1a0] sm:$0xff]
    %v176 = vld [vmem:[#allocation6 + $0x1a8] sm:$0xff]
    %v177 = vld [vmem:[#allocation6 + $0x1b0] sm:$0xff]
    %v178 = vld [vmem:[#allocation6 + $0x1b8] sm:$0xff]
    %v179 = vld [vmem:[#allocation6 + $0x1c0] sm:$0xff]
    %v180 = vld [vmem:[#allocation6 + $0x1c8] sm:$0xff]
    %v181 = vld [vmem:[#allocation6 + $0x1d0] sm:$0xff]
    %v182 = vld [vmem:[#allocation6 + $0x1d8] sm:$0xff]
    %v183 = vld [vmem:[#allocation6 + $0x1e0] sm:$0xff]
    %v184 = vld [vmem:[#allocation6 + $0x1e8] sm:$0xff]
    %v185 = vld [vmem:[#allocation6 + $0x1f0] sm:$0xff]
    %v186 = vld [vmem:[#allocation6 + $0x1f8] sm:$0xff]
    %v187 = vld [vmem:[%s3] sm:$0xf]
    %v189 = vlaneseq
    %v190 = vshrl.u32 %v189, 7
    %v191 = vsub.s32 0, %v190
    %v192 = vrot.slane %v187, %v191
    %v193 = vlaneseq
    %v194 = vshrl.u32 %v193, 7
    %v195 = vsub.s32 1, %v194
    %v196 = vrot.slane %v187, %v195
    %v197 = vlaneseq
    %v198 = vshrl.u32 %v197, 7
    %v199 = vsub.s32 2, %v198
    %v200 = vrot.slane %v187, %v199
    %v201 = vlaneseq
    %v202 = vshrl.u32 %v201, 7
    %v203 = vsub.s32 3, %v202
    %v204 = vrot.slane %v187, %v203
    %209 = vmatprep.subr.mxu0 %v184
    %210 = vmatpush1.msra.mxu0 %v183
    %211 = vmatprep.subr.mxu0 %v180
    %212 = vmatpush1.msra.mxu0 %v179
    %213 = vmatprep.subr.mxu0 %v176
    %214 = vmatpush1.msra.mxu0 %v175
    %215 = vmatprep.subr.mxu0 %v172
    %216 = vmatpush1.msra.mxu0 %v171
    %217 = vmatprep.subr.mxu0 %v168
    %218 = vmatpush1.msra.mxu0 %v167
    %219 = vmatprep.subr.mxu0 %v164
    %220 = vmatpush1.msra.mxu0 %v163
    %221 = vmatprep.subr.mxu0 %v160
    %222 = vmatpush1.msra.mxu0 %v159
    %223 = vmatprep.subr.mxu0 %v156
    %224 = vmatpush1.msra.mxu0 %v155
    %225 = vmatprep.subr.mxu0 %v152
    %226 = vmatpush1.msra.mxu0 %v151
    %227 = vmatprep.subr.mxu0 %v148
    %228 = vmatpush1.msra.mxu0 %v147
    %229 = vmatprep.subr.mxu0 %v144
    %230 = vmatpush1.msra.mxu0 %v143
    %231 = vmatprep.subr.mxu0 %v140
    %232 = vmatpush1.msra.mxu0 %v139
    %233 = vmatprep.subr.mxu0 %v136
    %234 = vmatpush1.msra.mxu0 %v135
    %235 = vmatprep.subr.mxu0 %v132
    %236 = vmatpush1.msra.mxu0 %v131
    %237 = vmatprep.subr.mxu0 %v128
    %238 = vmatpush1.msra.mxu0 %v127
    %239 = vmatprep.subr.mxu0 %v124
    %240 = vmatpush1.msra.mxu0 %v123
    %241 = vmatprep.subr.mxu0 0.0
    %242 = vmatpush2.msra.mxu0 0.0
    %243 = vmatprep.subr.mxu0 0.0
    %244 = vmatpush2.msra.mxu0 0.0
    %245 = vmatprep.subr.mxu0 0.0
    %246 = vmatpush2.msra.mxu0 0.0
    %247 = vmatprep.subr.mxu0 0.0
    %248 = vmatpush2.msra.mxu0 0.0
    %249 = vmatprep.subr.mxu0 0.0
    %250 = vmatpush2.msra.mxu0 0.0
    %251 = vmatprep.subr.mxu0 0.0
    %252 = vmatpush2.msra.mxu0 0.0
    %253 = vmatprep.subr.mxu0 0.0
    %254 = vmatpush2.msra.mxu0 0.0
    %255 = vmatprep.subr.mxu0 0.0
    %256 = vmatpush2.msra.mxu0 0.0
    %257 = vmatprep.subr.mxu0 0.0
    %258 = vmatpush2.msra.mxu0 0.0
    %259 = vmatprep.subr.mxu0 0.0
    %260 = vmatpush2.msra.mxu0 0.0
    %261 = vmatprep.subr.mxu0 0.0
    %262 = vmatpush2.msra.mxu0 0.0
    %263 = vmatprep.subr.mxu0 0.0
    %264 = vmatpush2.msra.mxu0 0.0
    %265 = vmatprep.subr.mxu0 0.0
    %266 = vmatpush2.msra.mxu0 0.0
    %267 = vmatprep.subr.mxu0 0.0
    %268 = vmatpush2.msra.mxu0 0.0
    %269 = vmatprep.subr.mxu0 0.0
    %270 = vmatpush2.msra.mxu0 0.0
    %271 = vmatprep.subr.mxu0 0.0
    %272 = vmatpush2.msra.mxu0 0.0
    %273 = vmatprep.mubr.f32.mxu0 0.0
    %274 = vmatmul.mubr.f32.gmra.mxu0 %v115
    %v275 = vpop.f32.mrf.mxu0
    %v276 = vadd.f32 %v192, %v275
    %v277 = vpop.f32.mrf.mxu0
    %v278 = vadd.f32 %v196, %v277
    %279 = vmatprep.mubr.f32.mxu0 0.0
    %280 = vmatmul.mubr.f32.gmra.mxu0 %v116
    %v281 = vpop.f32.mrf.mxu0
    %v282 = vadd.f32 %v192, %v281
    %v283 = vpop.f32.mrf.mxu0
    %v284 = vadd.f32 %v196, %v283
    %285 = vmatprep.mubr.f32.mxu0 0.0
    %286 = vmatmul.mubr.f32.gmra.mxu0 %v117
    %v287 = vpop.f32.mrf.mxu0
    %v288 = vadd.f32 %v192, %v287
    %v289 = vpop.f32.mrf.mxu0
    %v290 = vadd.f32 %v196, %v289
    %291 = vmatprep.mubr.f32.mxu0 0.0
    %292 = vmatmul.mubr.f32.gmra.mxu0 %v118
    %v293 = vpop.f32.mrf.mxu0
    %v294 = vadd.f32 %v192, %v293
    %v295 = vpop.f32.mrf.mxu0
    %v296 = vadd.f32 %v196, %v295
    %297 = vmatprep.mubr.f32.mxu0 0.0
    %298 = vmatmul.mubr.f32.gmra.mxu0 %v119
    %v299 = vpop.f32.mrf.mxu0
    %v300 = vadd.f32 %v192, %v299
    %v301 = vpop.f32.mrf.mxu0
    %v302 = vadd.f32 %v196, %v301
    %303 = vmatprep.mubr.f32.mxu0 0.0
    %304 = vmatmul.mubr.f32.gmra.mxu0 %v120
    %v305 = vpop.f32.mrf.mxu0
    %v306 = vadd.f32 %v192, %v305
    %v307 = vpop.f32.mrf.mxu0
    %v308 = vadd.f32 %v196, %v307
    %309 = vmatprep.mubr.f32.mxu0 0.0
    %310 = vmatmul.mubr.f32.gmra.mxu0 %v121
    %v311 = vpop.f32.mrf.mxu0
    %v312 = vadd.f32 %v192, %v311
    %v313 = vpop.f32.mrf.mxu0
    %v314 = vadd.f32 %v196, %v313
    %315 = vmatprep.mubr.f32.mxu0 0.0
    %316 = vmatmul.mubr.f32.gmra.mxu0 %v122
    %v317 = vpop.f32.mrf.mxu0
    %v318 = vadd.f32 %v192, %v317
    %v319 = vpop.f32.mrf.mxu0
    %v320 = vadd.f32 %v196, %v319
    %321 = vdwg.mxu0
    %322 = vmatprep.subr.mxu0 %v186
    %323 = vmatpush1.msra.mxu0 %v185
    %324 = vmatprep.subr.mxu0 %v182
    %325 = vmatpush1.msra.mxu0 %v181
    %326 = vmatprep.subr.mxu0 %v178
    %327 = vmatpush1.msra.mxu0 %v177
    %328 = vmatprep.subr.mxu0 %v174
    %329 = vmatpush1.msra.mxu0 %v173
    %330 = vmatprep.subr.mxu0 %v170
    %331 = vmatpush1.msra.mxu0 %v169
    %332 = vmatprep.subr.mxu0 %v166
    %333 = vmatpush1.msra.mxu0 %v165
    %334 = vmatprep.subr.mxu0 %v162
    %335 = vmatpush1.msra.mxu0 %v161
    %336 = vmatprep.subr.mxu0 %v158
    %337 = vmatpush1.msra.mxu0 %v157
    %338 = vmatprep.subr.mxu0 %v154
    %339 = vmatpush1.msra.mxu0 %v153
    %340 = vmatprep.subr.mxu0 %v150
    %341 = vmatpush1.msra.mxu0 %v149
    %342 = vmatprep.subr.mxu0 %v146
    %343 = vmatpush1.msra.mxu0 %v145
    %344 = vmatprep.subr.mxu0 %v142
    %345 = vmatpush1.msra.mxu0 %v141
    %346 = vmatprep.subr.mxu0 %v138
    %347 = vmatpush1.msra.mxu0 %v137
    %348 = vmatprep.subr.mxu0 %v134
    %349 = vmatpush1.msra.mxu0 %v133
    %350 = vmatprep.subr.mxu0 %v130
    %351 = vmatpush1.msra.mxu0 %v129
    %352 = vmatprep.subr.mxu0 %v126
    %353 = vmatpush1.msra.mxu0 %v125
    %354 = vmatprep.subr.mxu0 0.0
    %355 = vmatpush2.msra.mxu0 0.0
    %356 = vmatprep.subr.mxu0 0.0
    %357 = vmatpush2.msra.mxu0 0.0
    %358 = vmatprep.subr.mxu0 0.0
    %359 = vmatpush2.msra.mxu0 0.0
    %360 = vmatprep.subr.mxu0 0.0
    %361 = vmatpush2.msra.mxu0 0.0
    %362 = vmatprep.subr.mxu0 0.0
    %363 = vmatpush2.msra.mxu0 0.0
    %364 = vmatprep.subr.mxu0 0.0
    %365 = vmatpush2.msra.mxu0 0.0
    %366 = vmatprep.subr.mxu0 0.0
    %367 = vmatpush2.msra.mxu0 0.0
    %368 = vmatprep.subr.mxu0 0.0
    %369 = vmatpush2.msra.mxu0 0.0
    %370 = vmatprep.subr.mxu0 0.0
    %371 = vmatpush2.msra.mxu0 0.0
    %372 = vmatprep.subr.mxu0 0.0
    %373 = vmatpush2.msra.mxu0 0.0
    %374 = vmatprep.subr.mxu0 0.0
    %375 = vmatpush2.msra.mxu0 0.0
    %376 = vmatprep.subr.mxu0 0.0
    %377 = vmatpush2.msra.mxu0 0.0
    %378 = vmatprep.subr.mxu0 0.0
    %379 = vmatpush2.msra.mxu0 0.0
    %380 = vmatprep.subr.mxu0 0.0
    %381 = vmatpush2.msra.mxu0 0.0
    %382 = vmatprep.subr.mxu0 0.0
    %383 = vmatpush2.msra.mxu0 0.0
    %384 = vmatprep.subr.mxu0 0.0
    %385 = vmatpush2.msra.mxu0 0.0
    %386 = vmatprep.mubr.f32.mxu0 0.0
    %387 = vmatmul.mubr.f32.gmra.mxu0 %v115
    %v388 = vpop.f32.mrf.mxu0
    %v389 = vadd.f32 %v200, %v388
    %v390 = vpop.f32.mrf.mxu0
    %v391 = vadd.f32 %v204, %v390
    %392 = vmatprep.mubr.f32.mxu0 0.0
    %393 = vmatmul.mubr.f32.gmra.mxu0 %v116
    %v394 = vpop.f32.mrf.mxu0
    %v395 = vadd.f32 %v200, %v394
    %v396 = vpop.f32.mrf.mxu0
    %v397 = vadd.f32 %v204, %v396
    %398 = vmatprep.mubr.f32.mxu0 0.0
    %399 = vmatmul.mubr.f32.gmra.mxu0 %v117
    %v400 = vpop.f32.mrf.mxu0
    %v401 = vadd.f32 %v200, %v400
    %v402 = vpop.f32.mrf.mxu0
    %v403 = vadd.f32 %v204, %v402
    %404 = vmatprep.mubr.f32.mxu0 0.0
    %405 = vmatmul.mubr.f32.gmra.mxu0 %v118
    %v406 = vpop.f32.mrf.mxu0
    %v407 = vadd.f32 %v200, %v406
    %v408 = vpop.f32.mrf.mxu0
    %v409 = vadd.f32 %v204, %v408
    %410 = vmatprep.mubr.f32.mxu0 0.0
    %411 = vmatmul.mubr.f32.gmra.mxu0 %v119
    %v412 = vpop.f32.mrf.mxu0
    %v413 = vadd.f32 %v200, %v412
    %v414 = vpop.f32.mrf.mxu0
    %v415 = vadd.f32 %v204, %v414
    %416 = vmatprep.mubr.f32.mxu0 0.0
    %417 = vmatmul.mubr.f32.gmra.mxu0 %v120
    %v418 = vpop.f32.mrf.mxu0
    %v419 = vadd.f32 %v200, %v418
    %v420 = vpop.f32.mrf.mxu0
    %v421 = vadd.f32 %v204, %v420
    %422 = vmatprep.mubr.f32.mxu0 0.0
    %423 = vmatmul.mubr.f32.gmra.mxu0 %v121
    %v424 = vpop.f32.mrf.mxu0
    %v425 = vadd.f32 %v200, %v424
    %v426 = vpop.f32.mrf.mxu0
    %v427 = vadd.f32 %v204, %v426
    %428 = vmatprep.mubr.f32.mxu0 0.0
    %429 = vmatmul.mubr.f32.gmra.mxu0 %v122
    %v430 = vpop.f32.mrf.mxu0
    %v431 = vadd.f32 %v200, %v430
    %v432 = vpop.f32.mrf.mxu0
    %v433 = vadd.f32 %v204, %v432
    %434 = vdwg.mxu0
    %435 = vst [vmem:[#allocation3] sm:$0xff] %v276
    %436 = vst [vmem:[#allocation3 + $0x8] sm:$0xff] %v278
    %437 = vst [vmem:[#allocation3 + $0x10] sm:$0xff] %v389
    %438 = vst [vmem:[#allocation3 + $0x18] sm:$0xff] %v391
    %439 = vst [vmem:[#allocation3 + $0x20] sm:$0xff] %v282
    %440 = vst [vmem:[#allocation3 + $0x28] sm:$0xff] %v284
    %441 = vst [vmem:[#allocation3 + $0x30] sm:$0xff] %v395
    %442 = vst [vmem:[#allocation3 + $0x38] sm:$0xff] %v397
    %443 = vst [vmem:[#allocation3 + $0x40] sm:$0xff] %v288
    %444 = vst [vmem:[#allocation3 + $0x48] sm:$0xff] %v290
    %445 = vst [vmem:[#allocation3 + $0x50] sm:$0xff] %v401
    %446 = vst [vmem:[#allocation3 + $0x58] sm:$0xff] %v403
    %447 = vst [vmem:[#allocation3 + $0x60] sm:$0xff] %v294
    %448 = vst [vmem:[#allocation3 + $0x68] sm:$0xff] %v296
    %449 = vst [vmem:[#allocation3 + $0x70] sm:$0xff] %v407
    %450 = vst [vmem:[#allocation3 + $0x78] sm:$0xff] %v409
    %451 = vst [vmem:[#allocation3 + $0x80] sm:$0xff] %v300
    %452 = vst [vmem:[#allocation3 + $0x88] sm:$0xff] %v302
    %453 = vst [vmem:[#allocation3 + $0x90] sm:$0xff] %v413
    %454 = vst [vmem:[#allocation3 + $0x98] sm:$0xff] %v415
    %455 = vst [vmem:[#allocation3 + $0xa0] sm:$0xff] %v306
    %456 = vst [vmem:[#allocation3 + $0xa8] sm:$0xff] %v308
    %457 = vst [vmem:[#allocation3 + $0xb0] sm:$0xff] %v419
    %458 = vst [vmem:[#allocation3 + $0xb8] sm:$0xff] %v421
    %459 = vst [vmem:[#allocation3 + $0xc0] sm:$0xff] %v312
    %460 = vst [vmem:[#allocation3 + $0xc8] sm:$0xff] %v314
    %461 = vst [vmem:[#allocation3 + $0xd0] sm:$0xff] %v425
    %462 = vst [vmem:[#allocation3 + $0xd8] sm:$0xff] %v427
    %463 = vst [vmem:[#allocation3 + $0xe0] sm:$0xff] %v318
    %464 = vst [vmem:[#allocation3 + $0xe8] sm:$0xff] %v320
    %465 = vst [vmem:[#allocation3 + $0xf0] sm:$0xff] %v431
    %466 = vst [vmem:[#allocation3 + $0xf8] sm:$0xff] %v433
    %467 = vst [vmem:[#allocation4] sm:$0xff] 0.0
    %468 = vst [vmem:[#allocation5] sm:$0xff] 0.0
    %v469 = vld [vmem:[#allocation4] sm:$0xff]
    %s470 = smul.u32 0, 4
    %s471 = smul.addr %s470, 8
    %s472 = scalar_lea.vmem [#allocation3], %s471
    %v473 = vld [vmem:[%s472] sm:$0xff]
    %v474 = vld [vmem:[%s472 + $0x8] sm:$0xff]
    %v475 = vld [vmem:[%s472 + $0x10] sm:$0xff]
    %v476 = vld [vmem:[%s472 + $0x18] sm:$0xff]
    %477 = vmatprep.subr.mxu0 %v112
    %478 = vmatpush1.msra.mxu0 %v111
    %479 = vmatprep.subr.mxu0 %v108
    %480 = vmatpush1.msra.mxu0 %v107
    %481 = vmatprep.subr.mxu0 %v104
    %482 = vmatpush1.msra.mxu0 %v103
    %483 = vmatprep.subr.mxu0 %v100
    %484 = vmatpush1.msra.mxu0 %v99
    %485 = vmatprep.subr.mxu0 %v96
    %486 = vmatpush1.msra.mxu0 %v95
    %487 = vmatprep.subr.mxu0 %v92
    %488 = vmatpush1.msra.mxu0 %v91
    %489 = vmatprep.subr.mxu0 %v88
    %490 = vmatpush1.msra.mxu0 %v87
    %491 = vmatprep.subr.mxu0 %v84
    %492 = vmatpush1.msra.mxu0 %v83
    %493 = vmatprep.subr.mxu0 %v80
    %494 = vmatpush1.msra.mxu0 %v79
    %495 = vmatprep.subr.mxu0 %v76
    %496 = vmatpush1.msra.mxu0 %v75
    %497 = vmatprep.subr.mxu0 %v72
    %498 = vmatpush1.msra.mxu0 %v71
    %499 = vmatprep.subr.mxu0 %v68
    %500 = vmatpush1.msra.mxu0 %v67
    %501 = vmatprep.subr.mxu0 %v64
    %502 = vmatpush1.msra.mxu0 %v63
    %503 = vmatprep.subr.mxu0 %v60
    %504 = vmatpush1.msra.mxu0 %v59
    %505 = vmatprep.subr.mxu0 %v56
    %506 = vmatpush1.msra.mxu0 %v55
    %507 = vmatprep.subr.mxu0 %v52
    %508 = vmatpush1.msra.mxu0 %v51
    %509 = vmatprep.subr.mxu0 0.0
    %510 = vmatpush2.msra.mxu0 0.0
    %511 = vmatprep.subr.mxu0 0.0
    %512 = vmatpush2.msra.mxu0 0.0
    %513 = vmatprep.subr.mxu0 0.0
    %514 = vmatpush2.msra.mxu0 0.0
    %515 = vmatprep.subr.mxu0 0.0
    %516 = vmatpush2.msra.mxu0 0.0
    %517 = vmatprep.subr.mxu0 0.0
    %518 = vmatpush2.msra.mxu0 0.0
    %519 = vmatprep.subr.mxu0 0.0
    %520 = vmatpush2.msra.mxu0 0.0
    %521 = vmatprep.subr.mxu0 0.0
    %522 = vmatpush2.msra.mxu0 0.0
    %523 = vmatprep.subr.mxu0 0.0
    %524 = vmatpush2.msra.mxu0 0.0
    %525 = vmatprep.subr.mxu0 0.0
    %526 = vmatpush2.msra.mxu0 0.0
    %527 = vmatprep.subr.mxu0 0.0
    %528 = vmatpush2.msra.mxu0 0.0
    %529 = vmatprep.subr.mxu0 0.0
    %530 = vmatpush2.msra.mxu0 0.0
    %531 = vmatprep.subr.mxu0 0.0
    %532 = vmatpush2.msra.mxu0 0.0
    %533 = vmatprep.subr.mxu0 0.0
    %534 = vmatpush2.msra.mxu0 0.0
    %535 = vmatprep.subr.mxu0 0.0
    %536 = vmatpush2.msra.mxu0 0.0
    %537 = vmatprep.subr.mxu0 0.0
    %538 = vmatpush2.msra.mxu0 0.0
    %539 = vmatprep.subr.mxu0 0.0
    %540 = vmatpush2.msra.mxu0 0.0
    %541 = vmatprep.mubr.f32.mxu0 0.0
    %542 = vmatmul.mubr.f32.gmra.mxu0 %v469
    %v543 = vpop.f32.mrf.mxu0
    %v544 = vadd.f32 0.0, %v543
    %v545 = vpop.f32.mrf.mxu0
    %v546 = vadd.f32 0.0, %v545
    %547 = vdwg.mxu0
    %548 = vmatprep.subr.mxu0 %v114
    %549 = vmatpush1.msra.mxu0 %v113
    %550 = vmatprep.subr.mxu0 %v110
    %551 = vmatpush1.msra.mxu0 %v109
    %552 = vmatprep.subr.mxu0 %v106
    %553 = vmatpush1.msra.mxu0 %v105
    %554 = vmatprep.subr.mxu0 %v102
    %555 = vmatpush1.msra.mxu0 %v101
    %556 = vmatprep.subr.mxu0 %v98
    %557 = vmatpush1.msra.mxu0 %v97
    %558 = vmatprep.subr.mxu0 %v94
    %559 = vmatpush1.msra.mxu0 %v93
    %560 = vmatprep.subr.mxu0 %v90
    %561 = vmatpush1.msra.mxu0 %v89
    %562 = vmatprep.subr.mxu0 %v86
    %563 = vmatpush1.msra.mxu0 %v85
    %564 = vmatprep.subr.mxu0 %v82
    %565 = vmatpush1.msra.mxu0 %v81
    %566 = vmatprep.subr.mxu0 %v78
    %567 = vmatpush1.msra.mxu0 %v77
    %568 = vmatprep.subr.mxu0 %v74
    %569 = vmatpush1.msra.mxu0 %v73
    %570 = vmatprep.subr.mxu0 %v70
    %571 = vmatpush1.msra.mxu0 %v69
    %572 = vmatprep.subr.mxu0 %v66
    %573 = vmatpush1.msra.mxu0 %v65
    %574 = vmatprep.subr.mxu0 %v62
    %575 = vmatpush1.msra.mxu0 %v61
    %576 = vmatprep.subr.mxu0 %v58
    %577 = vmatpush1.msra.mxu0 %v57
    %578 = vmatprep.subr.mxu0 %v54
    %579 = vmatpush1.msra.mxu0 %v53
    %580 = vmatprep.subr.mxu0 0.0
    %581 = vmatpush2.msra.mxu0 0.0
    %582 = vmatprep.subr.mxu0 0.0
    %583 = vmatpush2.msra.mxu0 0.0
    %584 = vmatprep.subr.mxu0 0.0
    %585 = vmatpush2.msra.mxu0 0.0
    %586 = vmatprep.subr.mxu0 0.0
    %587 = vmatpush2.msra.mxu0 0.0
    %588 = vmatprep.subr.mxu0 0.0
    %589 = vmatpush2.msra.mxu0 0.0
    %590 = vmatprep.subr.mxu0 0.0
    %591 = vmatpush2.msra.mxu0 0.0
    %592 = vmatprep.subr.mxu0 0.0
    %593 = vmatpush2.msra.mxu0 0.0
    %594 = vmatprep.subr.mxu0 0.0
    %595 = vmatpush2.msra.mxu0 0.0
    %596 = vmatprep.subr.mxu0 0.0
    %597 = vmatpush2.msra.mxu0 0.0
    %598 = vmatprep.subr.mxu0 0.0
    %599 = vmatpush2.msra.mxu0 0.0
    %600 = vmatprep.subr.mxu0 0.0
    %601 = vmatpush2.msra.mxu0 0.0
    %602 = vmatprep.subr.mxu0 0.0
    %603 = vmatpush2.msra.mxu0 0.0
    %604 = vmatprep.subr.mxu0 0.0
    %605 = vmatpush2.msra.mxu0 0.0
    %606 = vmatprep.subr.mxu0 0.0
    %607 = vmatpush2.msra.mxu0 0.0
    %608 = vmatprep.subr.mxu0 0.0
    %609 = vmatpush2.msra.mxu0 0.0
    %610 = vmatprep.subr.mxu0 0.0
    %611 = vmatpush2.msra.mxu0 0.0
    %612 = vmatprep.mubr.f32.mxu0 0.0
    %613 = vmatmul.mubr.f32.gmra.mxu0 %v469
    %v614 = vpop.f32.mrf.mxu0
    %v615 = vadd.f32 0.0, %v614
    %v616 = vpop.f32.mrf.mxu0
    %v617 = vadd.f32 0.0, %v616
    %618 = vdwg.mxu0
    %v619 = vadd.f32 %v473, %v544
    %v620 = vadd.f32 %v474, %v546
    %v621 = vadd.f32 %v475, %v615
    %v622 = vadd.f32 %v476, %v617
    %v623 = vxor.u32 %v619, 2147483648
    %v624 = vmul.f32 %v623, 1.442695
    %v625 = vpow.pop %v624
    %v626 = vadd.f32 %v625, 1.0
    %v627 = vrcp.pop %v626
    %v628 = vmul.f32 1.0, %v627
    %v629 = vxor.u32 %v620, 2147483648
    %v630 = vmul.f32 %v629, 1.442695
    %v631 = vpow.pop %v630
    %v632 = vadd.f32 %v631, 1.0
    %v633 = vrcp.pop %v632
    %v634 = vmul.f32 1.0, %v633
    %v635 = vtanh.pop %v621
    %v636 = vxor.u32 %v622, 2147483648
    %v637 = vmul.f32 %v636, 1.442695
    %v638 = vpow.pop %v637
    %v639 = vadd.f32 %v638, 1.0
    %v640 = vrcp.pop %v639
    %v641 = vmul.f32 1.0, %v640
    %v642 = vld [vmem:[#allocation5] sm:$0xff]
    %v643 = vmul.f32 %v634, %v642
    %v644 = vmul.f32 %v628, %v635
    %v645 = vadd.f32 %v643, %v644
    %v646 = vtanh.pop %v645
    %v647 = vmul.f32 %v641, %v646
    %648 = vst [vmem:[#allocation4] sm:$0xff] %v647
    %649 = vst [vmem:[#allocation5] sm:$0xff] %v645
    %650 = vst [vmem:[#allocation2] sm:$0xff] %v647
    %v651 = vld [vmem:[#allocation4] sm:$0xff]
    %s652 = smul.u32 1, 4
    %s653 = smul.addr %s652, 8
    %s654 = scalar_lea.vmem [#allocation3], %s653
    %v655 = vld [vmem:[%s654] sm:$0xff]
    %v656 = vld [vmem:[%s654 + $0x8] sm:$0xff]
    %v657 = vld [vmem:[%s654 + $0x10] sm:$0xff]
    %v658 = vld [vmem:[%s654 + $0x18] sm:$0xff]
    %659 = vmatprep.subr.mxu0 %v112
    %660 = vmatpush1.msra.mxu0 %v111
    %661 = vmatprep.subr.mxu0 %v108
    %662 = vmatpush1.msra.mxu0 %v107
    %663 = vmatprep.subr.mxu0 %v104
    %664 = vmatpush1.msra.mxu0 %v103
    %665 = vmatprep.subr.mxu0 %v100
    %666 = vmatpush1.msra.mxu0 %v99
    %667 = vmatprep.subr.mxu0 %v96
    %668 = vmatpush1.msra.mxu0 %v95
    %669 = vmatprep.subr.mxu0 %v92
    %670 = vmatpush1.msra.mxu0 %v91
    %671 = vmatprep.subr.mxu0 %v88
    %672 = vmatpush1.msra.mxu0 %v87
    %673 = vmatprep.subr.mxu0 %v84
    %674 = vmatpush1.msra.mxu0 %v83
    %675 = vmatprep.subr.mxu0 %v80
    %676 = vmatpush1.msra.mxu0 %v79
    %677 = vmatprep.subr.mxu0 %v76
    %678 = vmatpush1.msra.mxu0 %v75
    %679 = vmatprep.subr.mxu0 %v72
    %680 = vmatpush1.msra.mxu0 %v71
    %681 = vmatprep.subr.mxu0 %v68
    %682 = vmatpush1.msra.mxu0 %v67
    %683 = vmatprep.subr.mxu0 %v64
    %684 = vmatpush1.msra.mxu0 %v63
    %685 = vmatprep.subr.mxu0 %v60
    %686 = vmatpush1.msra.mxu0 %v59
    %687 = vmatprep.subr.mxu0 %v56
    %688 = vmatpush1.msra.mxu0 %v55
    %689 = vmatprep.subr.mxu0 %v52
    %690 = vmatpush1.msra.mxu0 %v51
    %691 = vmatprep.subr.mxu0 0.0
    %692 = vmatpush2.msra.mxu0 0.0
    %693 = vmatprep.subr.mxu0 0.0
    %694 = vmatpush2.msra.mxu0 0.0
    %695 = vmatprep.subr.mxu0 0.0
    %696 = vmatpush2.msra.mxu0 0.0
    %697 = vmatprep.subr.mxu0 0.0
    %698 = vmatpush2.msra.mxu0 0.0
    %699 = vmatprep.subr.mxu0 0.0
    %700 = vmatpush2.msra.mxu0 0.0
    %701 = vmatprep.subr.mxu0 0.0
    %702 = vmatpush2.msra.mxu0 0.0
    %703 = vmatprep.subr.mxu0 0.0
    %704 = vmatpush2.msra.mxu0 0.0
    %705 = vmatprep.subr.mxu0 0.0
    %706 = vmatpush2.msra.mxu0 0.0
    %707 = vmatprep.subr.mxu0 0.0
    %708 = vmatpush2.msra.mxu0 0.0
    %709 = vmatprep.subr.mxu0 0.0
    %710 = vmatpush2.msra.mxu0 0.0
    %711 = vmatprep.subr.mxu0 0.0
    %712 = vmatpush2.msra.mxu0 0.0
    %713 = vmatprep.subr.mxu0 0.0
    %714 = vmatpush2.msra.mxu0 0.0
    %715 = vmatprep.subr.mxu0 0.0
    %716 = vmatpush2.msra.mxu0 0.0
    %717 = vmatprep.subr.mxu0 0.0
    %718 = vmatpush2.msra.mxu0 0.0
    %719 = vmatprep.subr.mxu0 0.0
    %720 = vmatpush2.msra.mxu0 0.0
    %721 = vmatprep.subr.mxu0 0.0
    %722 = vmatpush2.msra.mxu0 0.0
    %723 = vmatprep.mubr.f32.mxu0 0.0
    %724 = vmatmul.mubr.f32.gmra.mxu0 %v651
    %v725 = vpop.f32.mrf.mxu0
    %v726 = vadd.f32 0.0, %v725
    %v727 = vpop.f32.mrf.mxu0
    %v728 = vadd.f32 0.0, %v727
    %729 = vdwg.mxu0
    %730 = vmatprep.subr.mxu0 %v114
    %731 = vmatpush1.msra.mxu0 %v113
    %732 = vmatprep.subr.mxu0 %v110
    %733 = vmatpush1.msra.mxu0 %v109
    %734 = vmatprep.subr.mxu0 %v106
    %735 = vmatpush1.msra.mxu0 %v105
    %736 = vmatprep.subr.mxu0 %v102
    %737 = vmatpush1.msra.mxu0 %v101
    %738 = vmatprep.subr.mxu0 %v98
    %739 = vmatpush1.msra.mxu0 %v97
    %740 = vmatprep.subr.mxu0 %v94
    %741 = vmatpush1.msra.mxu0 %v93
    %742 = vmatprep.subr.mxu0 %v90
    %743 = vmatpush1.msra.mxu0 %v89
    %744 = vmatprep.subr.mxu0 %v86
    %745 = vmatpush1.msra.mxu0 %v85
    %746 = vmatprep.subr.mxu0 %v82
    %747 = vmatpush1.msra.mxu0 %v81
    %748 = vmatprep.subr.mxu0 %v78
    %749 = vmatpush1.msra.mxu0 %v77
    %750 = vmatprep.subr.mxu0 %v74
    %751 = vmatpush1.msra.mxu0 %v73
    %752 = vmatprep.subr.mxu0 %v70
    %753 = vmatpush1.msra.mxu0 %v69
    %754 = vmatprep.subr.mxu0 %v66
    %755 = vmatpush1.msra.mxu0 %v65
    %756 = vmatprep.subr.mxu0 %v62
    %757 = vmatpush1.msra.mxu0 %v61
    %758 = vmatprep.subr.mxu0 %v58
    %759 = vmatpush1.msra.mxu0 %v57
    %760 = vmatprep.subr.mxu0 %v54
    %761 = vmatpush1.msra.mxu0 %v53
    %762 = vmatprep.subr.mxu0 0.0
    %763 = vmatpush2.msra.mxu0 0.0
    %764 = vmatprep.subr.mxu0 0.0
    %765 = vmatpush2.msra.mxu0 0.0
    %766 = vmatprep.subr.mxu0 0.0
    %767 = vmatpush2.msra.mxu0 0.0
    %768 = vmatprep.subr.mxu0 0.0
    %769 = vmatpush2.msra.mxu0 0.0
    %770 = vmatprep.subr.mxu0 0.0
    %771 = vmatpush2.msra.mxu0 0.0
    %772 = vmatprep.subr.mxu0 0.0
    %773 = vmatpush2.msra.mxu0 0.0
    %774 = vmatprep.subr.mxu0 0.0
    %775 = vmatpush2.msra.mxu0 0.0
    %776 = vmatprep.subr.mxu0 0.0
    %777 = vmatpush2.msra.mxu0 0.0
    %778 = vmatprep.subr.mxu0 0.0
    %779 = vmatpush2.msra.mxu0 0.0
    %780 = vmatprep.subr.mxu0 0.0
    %781 = vmatpush2.msra.mxu0 0.0
    %782 = vmatprep.subr.mxu0 0.0
    %783 = vmatpush2.msra.mxu0 0.0
    %784 = vmatprep.subr.mxu0 0.0
    %785 = vmatpush2.msra.mxu0 0.0
    %786 = vmatprep.subr.mxu0 0.0
    %787 = vmatpush2.msra.mxu0 0.0
    %788 = vmatprep.subr.mxu0 0.0
    %789 = vmatpush2.msra.mxu0 0.0
    %790 = vmatprep.subr.mxu0 0.0
    %791 = vmatpush2.msra.mxu0 0.0
    %792 = vmatprep.subr.mxu0 0.0
    %793 = vmatpush2.msra.mxu0 0.0
    %794 = vmatprep.mubr.f32.mxu0 0.0
    %795 = vmatmul.mubr.f32.gmra.mxu0 %v651
    %v796 = vpop.f32.mrf.mxu0
    %v797 = vadd.f32 0.0, %v796
    %v798 = vpop.f32.mrf.mxu0
    %v799 = vadd.f32 0.0, %v798
    %800 = vdwg.mxu0
    %v801 = vadd.f32 %v655, %v726
    %v802 = vadd.f32 %v656, %v728
    %v803 = vadd.f32 %v657, %v797
    %v804 = vadd.f32 %v658, %v799
    %v805 = vxor.u32 %v801, 2147483648
    %v806 = vmul.f32 %v805, 1.442695
    %v807 = vpow.pop %v806
    %v808 = vadd.f32 %v807, 1.0
    %v809 = vrcp.pop %v808
    %v810 = vmul.f32 1.0, %v809
    %v811 = vxor.u32 %v802, 2147483648
    %v812 = vmul.f32 %v811, 1.442695
    %v813 = vpow.pop %v812
    %v814 = vadd.f32 %v813, 1.0
    %v815 = vrcp.pop %v814
    %v816 = vmul.f32 1.0, %v815
    %v817 = vtanh.pop %v803
    %v818 = vxor.u32 %v804, 2147483648
    %v819 = vmul.f32 %v818, 1.442695
    %v820 = vpow.pop %v819
    %v821 = vadd.f32 %v820, 1.0
    %v822 = vrcp.pop %v821
    %v823 = vmul.f32 1.0, %v822
    %v824 = vld [vmem:[#allocation5] sm:$0xff]
    %v825 = vmul.f32 %v816, %v824
    %v826 = vmul.f32 %v810, %v817
    %v827 = vadd.f32 %v825, %v826
    %v828 = vtanh.pop %v827
    %v829 = vmul.f32 %v823, %v828
    %830 = vst [vmem:[#allocation4] sm:$0xff] %v829
    %831 = vst [vmem:[#allocation5] sm:$0xff] %v827
    %s832 = scalar_lea.vmem [#allocation2], 8
    %833 = vst [vmem:[%s832] sm:$0xff] %v829
    %v834 = vld [vmem:[#allocation4] sm:$0xff]
    %s835 = smul.u32 2, 4
    %s836 = smul.addr %s835, 8
    %s837 = scalar_lea.vmem [#allocation3], %s836
    %v838 = vld [vmem:[%s837] sm:$0xff]
    %v839 = vld [vmem:[%s837 + $0x8] sm:$0xff]
    %v840 = vld [vmem:[%s837 + $0x10] sm:$0xff]
    %v841 = vld [vmem:[%s837 + $0x18] sm:$0xff]
    %842 = vmatprep.subr.mxu0 %v112
    %843 = vmatpush1.msra.mxu0 %v111
    %844 = vmatprep.subr.mxu0 %v108
    %845 = vmatpush1.msra.mxu0 %v107
    %846 = vmatprep.subr.mxu0 %v104
    %847 = vmatpush1.msra.mxu0 %v103
    %848 = vmatprep.subr.mxu0 %v100
    %849 = vmatpush1.msra.mxu0 %v99
    %850 = vmatprep.subr.mxu0 %v96
    %851 = vmatpush1.msra.mxu0 %v95
    %852 = vmatprep.subr.mxu0 %v92
    %853 = vmatpush1.msra.mxu0 %v91
    %854 = vmatprep.subr.mxu0 %v88
    %855 = vmatpush1.msra.mxu0 %v87
    %856 = vmatprep.subr.mxu0 %v84
    %857 = vmatpush1.msra.mxu0 %v83
    %858 = vmatprep.subr.mxu0 %v80
    %859 = vmatpush1.msra.mxu0 %v79
    %860 = vmatprep.subr.mxu0 %v76
    %861 = vmatpush1.msra.mxu0 %v75
    %862 = vmatprep.subr.mxu0 %v72
    %863 = vmatpush1.msra.mxu0 %v71
    %864 = vmatprep.subr.mxu0 %v68
    %865 = vmatpush1.msra.mxu0 %v67
    %866 = vmatprep.subr.mxu0 %v64
    %867 = vmatpush1.msra.mxu0 %v63
    %868 = vmatprep.subr.mxu0 %v60
    %869 = vmatpush1.msra.mxu0 %v59
    %870 = vmatprep.subr.mxu0 %v56
    %871 = vmatpush1.msra.mxu0 %v55
    %872 = vmatprep.subr.mxu0 %v52
    %873 = vmatpush1.msra.mxu0 %v51
    %874 = vmatprep.subr.mxu0 0.0
    %875 = vmatpush2.msra.mxu0 0.0
    %876 = vmatprep.subr.mxu0 0.0
    %877 = vmatpush2.msra.mxu0 0.0
    %878 = vmatprep.subr.mxu0 0.0
    %879 = vmatpush2.msra.mxu0 0.0
    %880 = vmatprep.subr.mxu0 0.0
    %881 = vmatpush2.msra.mxu0 0.0
    %882 = vmatprep.subr.mxu0 0.0
    %883 = vmatpush2.msra.mxu0 0.0
    %884 = vmatprep.subr.mxu0 0.0
    %885 = vmatpush2.msra.mxu0 0.0
    %886 = vmatprep.subr.mxu0 0.0
    %887 = vmatpush2.msra.mxu0 0.0
    %888 = vmatprep.subr.mxu0 0.0
    %889 = vmatpush2.msra.mxu0 0.0
    %890 = vmatprep.subr.mxu0 0.0
    %891 = vmatpush2.msra.mxu0 0.0
    %892 = vmatprep.subr.mxu0 0.0
    %893 = vmatpush2.msra.mxu0 0.0
    %894 = vmatprep.subr.mxu0 0.0
    %895 = vmatpush2.msra.mxu0 0.0
    %896 = vmatprep.subr.mxu0 0.0
    %897 = vmatpush2.msra.mxu0 0.0
    %898 = vmatprep.subr.mxu0 0.0
    %899 = vmatpush2.msra.mxu0 0.0
    %900 = vmatprep.subr.mxu0 0.0
    %901 = vmatpush2.msra.mxu0 0.0
    %902 = vmatprep.subr.mxu0 0.0
    %903 = vmatpush2.msra.mxu0 0.0
    %904 = vmatprep.subr.mxu0 0.0
    %905 = vmatpush2.msra.mxu0 0.0
    %906 = vmatprep.mubr.f32.mxu0 0.0
    %907 = vmatmul.mubr.f32.gmra.mxu0 %v834
    %v908 = vpop.f32.mrf.mxu0
    %v909 = vadd.f32 0.0, %v908
    %v910 = vpop.f32.mrf.mxu0
    %v911 = vadd.f32 0.0, %v910
    %912 = vdwg.mxu0
    %913 = vmatprep.subr.mxu0 %v114
    %914 = vmatpush1.msra.mxu0 %v113
    %915 = vmatprep.subr.mxu0 %v110
    %916 = vmatpush1.msra.mxu0 %v109
    %917 = vmatprep.subr.mxu0 %v106
    %918 = vmatpush1.msra.mxu0 %v105
    %919 = vmatprep.subr.mxu0 %v102
    %920 = vmatpush1.msra.mxu0 %v101
    %921 = vmatprep.subr.mxu0 %v98
    %922 = vmatpush1.msra.mxu0 %v97
    %923 = vmatprep.subr.mxu0 %v94
    %924 = vmatpush1.msra.mxu0 %v93
    %925 = vmatprep.subr.mxu0 %v90
    %926 = vmatpush1.msra.mxu0 %v89
    %927 = vmatprep.subr.mxu0 %v86
    %928 = vmatpush1.msra.mxu0 %v85
    %929 = vmatprep.subr.mxu0 %v82
    %930 = vmatpush1.msra.mxu0 %v81
    %931 = vmatprep.subr.mxu0 %v78
    %932 = vmatpush1.msra.mxu0 %v77
    %933 = vmatprep.subr.mxu0 %v74
    %934 = vmatpush1.msra.mxu0 %v73
    %935 = vmatprep.subr.mxu0 %v70
    %936 = vmatpush1.msra.mxu0 %v69
    %937 = vmatprep.subr.mxu0 %v66
    %938 = vmatpush1.msra.mxu0 %v65
    %939 = vmatprep.subr.mxu0 %v62
    %940 = vmatpush1.msra.mxu0 %v61
    %941 = vmatprep.subr.mxu0 %v58
    %942 = vmatpush1.msra.mxu0 %v57
    %943 = vmatprep.subr.mxu0 %v54
    %944 = vmatpush1.msra.mxu0 %v53
    %945 = vmatprep.subr.mxu0 0.0
    %946 = vmatpush2.msra.mxu0 0.0
    %947 = vmatprep.subr.mxu0 0.0
    %948 = vmatpush2.msra.mxu0 0.0
    %949 = vmatprep.subr.mxu0 0.0
    %950 = vmatpush2.msra.mxu0 0.0
    %951 = vmatprep.subr.mxu0 0.0
    %952 = vmatpush2.msra.mxu0 0.0
    %953 = vmatprep.subr.mxu0 0.0
    %954 = vmatpush2.msra.mxu0 0.0
    %955 = vmatprep.subr.mxu0 0.0
    %956 = vmatpush2.msra.mxu0 0.0
    %957 = vmatprep.subr.mxu0 0.0
    %958 = vmatpush2.msra.mxu0 0.0
    %959 = vmatprep.subr.mxu0 0.0
    %960 = vmatpush2.msra.mxu0 0.0
    %961 = vmatprep.subr.mxu0 0.0
    %962 = vmatpush2.msra.mxu0 0.0
    %963 = vmatprep.subr.mxu0 0.0
    %964 = vmatpush2.msra.mxu0 0.0
    %965 = vmatprep.subr.mxu0 0.0
    %966 = vmatpush2.msra.mxu0 0.0
    %967 = vmatprep.subr.mxu0 0.0
    %968 = vmatpush2.msra.mxu0 0.0
    %969 = vmatprep.subr.mxu0 0.0
    %970 = vmatpush2.msra.mxu0 0.0
    %971 = vmatprep.subr.mxu0 0.0
    %972 = vmatpush2.msra.mxu0 0.0
    %973 = vmatprep.subr.mxu0 0.0
    %974 = vmatpush2.msra.mxu0 0.0
    %975 = vmatprep.subr.mxu0 0.0
    %976 = vmatpush2.msra.mxu0 0.0
    %977 = vmatprep.mubr.f32.mxu0 0.0
    %978 = vmatmul.mubr.f32.gmra.mxu0 %v834
    %v979 = vpop.f32.mrf.mxu0
    %v980 = vadd.f32 0.0, %v979
    %v981 = vpop.f32.mrf.mxu0
    %v982 = vadd.f32 0.0, %v981
    %983 = vdwg.mxu0
    %v984 = vadd.f32 %v838, %v909
    %v985 = vadd.f32 %v839, %v911
    %v986 = vadd.f32 %v840, %v980
    %v987 = vadd.f32 %v841, %v982
    %v988 = vxor.u32 %v984, 2147483648
    %v989 = vmul.f32 %v988, 1.442695
    %v990 = vpow.pop %v989
    %v991 = vadd.f32 %v990, 1.0
    %v992 = vrcp.pop %v991
    %v993 = vmul.f32 1.0, %v992
    %v994 = vxor.u32 %v985, 2147483648
    %v995 = vmul.f32 %v994, 1.442695
    %v996 = vpow.pop %v995
    %v997 = vadd.f32 %v996, 1.0
    %v998 = vrcp.pop %v997
    %v999 = vmul.f32 1.0, %v998
    %v1000 = vtanh.pop %v986
    %v1001 = vxor.u32 %v987, 2147483648
    %v1002 = vmul.f32 %v1001, 1.442695
    %v1003 = vpow.pop %v1002
    %v1004 = vadd.f32 %v1003, 1.0
    %v1005 = vrcp.pop %v1004
    %v1006 = vmul.f32 1.0, %v1005
    %v1007 = vld [vmem:[#allocation5] sm:$0xff]
    %v1008 = vmul.f32 %v999, %v1007
    %v1009 = vmul.f32 %v993, %v1000
    %v1010 = vadd.f32 %v1008, %v1009
    %v1011 = vtanh.pop %v1010
    %v1012 = vmul.f32 %v1006, %v1011
    %1013 = vst [vmem:[#allocation4] sm:$0xff] %v1012
    %1014 = vst [vmem:[#allocation5] sm:$0xff] %v1010
    %s1015 = scalar_lea.vmem [#allocation2], 16
    %1016 = vst [vmem:[%s1015] sm:$0xff] %v1012
    %v1017 = vld [vmem:[#allocation4] sm:$0xff]
    %s1018 = smul.u32 3, 4
    %s1019 = smul.addr %s1018, 8
    %s1020 = scalar_lea.vmem [#allocation3], %s1019
    %v1021 = vld [vmem:[%s1020] sm:$0xff]
    %v1022 = vld [vmem:[%s1020 + $0x8] sm:$0xff]
    %v1023 = vld [vmem:[%s1020 + $0x10] sm:$0xff]
    %v1024 = vld [vmem:[%s1020 + $0x18] sm:$0xff]
    %1025 = vmatprep.subr.mxu0 %v112
    %1026 = vmatpush1.msra.mxu0 %v111
    %1027 = vmatprep.subr.mxu0 %v108
    %1028 = vmatpush1.msra.mxu0 %v107
    %1029 = vmatprep.subr.mxu0 %v104
    %1030 = vmatpush1.msra.mxu0 %v103
    %1031 = vmatprep.subr.mxu0 %v100
    %1032 = vmatpush1.msra.mxu0 %v99
    %1033 = vmatprep.subr.mxu0 %v96
    %1034 = vmatpush1.msra.mxu0 %v95
    %1035 = vmatprep.subr.mxu0 %v92
    %1036 = vmatpush1.msra.mxu0 %v91
    %1037 = vmatprep.subr.mxu0 %v88
    %1038 = vmatpush1.msra.mxu0 %v87
    %1039 = vmatprep.subr.mxu0 %v84
    %1040 = vmatpush1.msra.mxu0 %v83
    %1041 = vmatprep.subr.mxu0 %v80
    %1042 = vmatpush1.msra.mxu0 %v79
    %1043 = vmatprep.subr.mxu0 %v76
    %1044 = vmatpush1.msra.mxu0 %v75
    %1045 = vmatprep.subr.mxu0 %v72
    %1046 = vmatpush1.msra.mxu0 %v71
    %1047 = vmatprep.subr.mxu0 %v68
    %1048 = vmatpush1.msra.mxu0 %v67
    %1049 = vmatprep.subr.mxu0 %v64
    %1050 = vmatpush1.msra.mxu0 %v63
    %1051 = vmatprep.subr.mxu0 %v60
    %1052 = vmatpush1.msra.mxu0 %v59
    %1053 = vmatprep.subr.mxu0 %v56
    %1054 = vmatpush1.msra.mxu0 %v55
    %1055 = vmatprep.subr.mxu0 %v52
    %1056 = vmatpush1.msra.mxu0 %v51
    %1057 = vmatprep.subr.mxu0 0.0
    %1058 = vmatpush2.msra.mxu0 0.0
    %1059 = vmatprep.subr.mxu0 0.0
    %1060 = vmatpush2.msra.mxu0 0.0
    %1061 = vmatprep.subr.mxu0 0.0
    %1062 = vmatpush2.msra.mxu0 0.0
    %1063 = vmatprep.subr.mxu0 0.0
    %1064 = vmatpush2.msra.mxu0 0.0
    %1065 = vmatprep.subr.mxu0 0.0
    %1066 = vmatpush2.msra.mxu0 0.0
    %1067 = vmatprep.subr.mxu0 0.0
    %1068 = vmatpush2.msra.mxu0 0.0
    %1069 = vmatprep.subr.mxu0 0.0
    %1070 = vmatpush2.msra.mxu0 0.0
    %1071 = vmatprep.subr.mxu0 0.0
    %1072 = vmatpush2.msra.mxu0 0.0
    %1073 = vmatprep.subr.mxu0 0.0
    %1074 = vmatpush2.msra.mxu0 0.0
    %1075 = vmatprep.subr.mxu0 0.0
    %1076 = vmatpush2.msra.mxu0 0.0
    %1077 = vmatprep.subr.mxu0 0.0
    %1078 = vmatpush2.msra.mxu0 0.0
    %1079 = vmatprep.subr.mxu0 0.0
    %1080 = vmatpush2.msra.mxu0 0.0
    %1081 = vmatprep.subr.mxu0 0.0
    %1082 = vmatpush2.msra.mxu0 0.0
    %1083 = vmatprep.subr.mxu0 0.0
    %1084 = vmatpush2.msra.mxu0 0.0
    %1085 = vmatprep.subr.mxu0 0.0
    %1086 = vmatpush2.msra.mxu0 0.0
    %1087 = vmatprep.subr.mxu0 0.0
    %1088 = vmatpush2.msra.mxu0 0.0
    %1089 = vmatprep.mubr.f32.mxu0 0.0
    %1090 = vmatmul.mubr.f32.gmra.mxu0 %v1017
    %v1091 = vpop.f32.mrf.mxu0
    %v1092 = vadd.f32 0.0, %v1091
    %v1093 = vpop.f32.mrf.mxu0
    %v1094 = vadd.f32 0.0, %v1093
    %1095 = vdwg.mxu0
    %1096 = vmatprep.subr.mxu0 %v114
    %1097 = vmatpush1.msra.mxu0 %v113
    %1098 = vmatprep.subr.mxu0 %v110
    %1099 = vmatpush1.msra.mxu0 %v109
    %1100 = vmatprep.subr.mxu0 %v106
    %1101 = vmatpush1.msra.mxu0 %v105
    %1102 = vmatprep.subr.mxu0 %v102
    %1103 = vmatpush1.msra.mxu0 %v101
    %1104 = vmatprep.subr.mxu0 %v98
    %1105 = vmatpush1.msra.mxu0 %v97
    %1106 = vmatprep.subr.mxu0 %v94
    %1107 = vmatpush1.msra.mxu0 %v93
    %1108 = vmatprep.subr.mxu0 %v90
    %1109 = vmatpush1.msra.mxu0 %v89
    %1110 = vmatprep.subr.mxu0 %v86
    %1111 = vmatpush1.msra.mxu0 %v85
    %1112 = vmatprep.subr.mxu0 %v82
    %1113 = vmatpush1.msra.mxu0 %v81
    %1114 = vmatprep.subr.mxu0 %v78
    %1115 = vmatpush1.msra.mxu0 %v77
    %1116 = vmatprep.subr.mxu0 %v74
    %1117 = vmatpush1.msra.mxu0 %v73
    %1118 = vmatprep.subr.mxu0 %v70
    %1119 = vmatpush1.msra.mxu0 %v69
    %1120 = vmatprep.subr.mxu0 %v66
    %1121 = vmatpush1.msra.mxu0 %v65
    %1122 = vmatprep.subr.mxu0 %v62
    %1123 = vmatpush1.msra.mxu0 %v61
    %1124 = vmatprep.subr.mxu0 %v58
    %1125 = vmatpush1.msra.mxu0 %v57
    %1126 = vmatprep.subr.mxu0 %v54
    %1127 = vmatpush1.msra.mxu0 %v53
    %1128 = vmatprep.subr.mxu0 0.0
    %1129 = vmatpush2.msra.mxu0 0.0
    %1130 = vmatprep.subr.mxu0 0.0
    %1131 = vmatpush2.msra.mxu0 0.0
    %1132 = vmatprep.subr.mxu0 0.0
    %1133 = vmatpush2.msra.mxu0 0.0
    %1134 = vmatprep.subr.mxu0 0.0
    %1135 = vmatpush2.msra.mxu0 0.0
    %1136 = vmatprep.subr.mxu0 0.0
    %1137 = vmatpush2.msra.mxu0 0.0
    %1138 = vmatprep.subr.mxu0 0.0
    %1139 = vmatpush2.msra.mxu0 0.0
    %1140 = vmatprep.subr.mxu0 0.0
    %1141 = vmatpush2.msra.mxu0 0.0
    %1142 = vmatprep.subr.mxu0 0.0
    %1143 = vmatpush2.msra.mxu0 0.0
    %1144 = vmatprep.subr.mxu0 0.0
    %1145 = vmatpush2.msra.mxu0 0.0
    %1146 = vmatprep.subr.mxu0 0.0
    %1147 = vmatpush2.msra.mxu0 0.0
    %1148 = vmatprep.subr.mxu0 0.0
    %1149 = vmatpush2.msra.mxu0 0.0
    %1150 = vmatprep.subr.mxu0 0.0
    %1151 = vmatpush2.msra.mxu0 0.0
    %1152 = vmatprep.subr.mxu0 0.0
    %1153 = vmatpush2.msra.mxu0 0.0
    %1154 = vmatprep.subr.mxu0 0.0
    %1155 = vmatpush2.msra.mxu0 0.0
    %1156 = vmatprep.subr.mxu0 0.0
    %1157 = vmatpush2.msra.mxu0 0.0
    %1158 = vmatprep.subr.mxu0 0.0
    %1159 = vmatpush2.msra.mxu0 0.0
    %1160 = vmatprep.mubr.f32.mxu0 0.0
    %1161 = vmatmul.mubr.f32.gmra.mxu0 %v1017
    %v1162 = vpop.f32.mrf.mxu0
    %v1163 = vadd.f32 0.0, %v1162
    %v1164 = vpop.f32.mrf.mxu0
    %v1165 = vadd.f32 0.0, %v1164
    %1166 = vdwg.mxu0
    %v1167 = vadd.f32 %v1021, %v1092
    %v1168 = vadd.f32 %v1022, %v1094
    %v1169 = vadd.f32 %v1023, %v1163
    %v1170 = vadd.f32 %v1024, %v1165
    %v1171 = vxor.u32 %v1167, 2147483648
    %v1172 = vmul.f32 %v1171, 1.442695
    %v1173 = vpow.pop %v1172
    %v1174 = vadd.f32 %v1173, 1.0
    %v1175 = vrcp.pop %v1174
    %v1176 = vmul.f32 1.0, %v1175
    %v1177 = vxor.u32 %v1168, 2147483648
    %v1178 = vmul.f32 %v1177, 1.442695
    %v1179 = vpow.pop %v1178
    %v1180 = vadd.f32 %v1179, 1.0
    %v1181 = vrcp.pop %v1180
    %v1182 = vmul.f32 1.0, %v1181
    %v1183 = vtanh.pop %v1169
    %v1184 = vxor.u32 %v1170, 2147483648
    %v1185 = vmul.f32 %v1184, 1.442695
    %v1186 = vpow.pop %v1185
    %v1187 = vadd.f32 %v1186, 1.0
    %v1188 = vrcp.pop %v1187
    %v1189 = vmul.f32 1.0, %v1188
    %v1190 = vld [vmem:[#allocation5] sm:$0xff]
    %v1191 = vmul.f32 %v1182, %v1190
    %v1192 = vmul.f32 %v1176, %v1183
    %v1193 = vadd.f32 %v1191, %v1192
    %v1194 = vtanh.pop %v1193
    %v1195 = vmul.f32 %v1189, %v1194
    %1196 = vst [vmem:[#allocation4] sm:$0xff] %v1195
    %1197 = vst [vmem:[#allocation5] sm:$0xff] %v1193
    %s1198 = scalar_lea.vmem [#allocation2], 24
    %1199 = vst [vmem:[%s1198] sm:$0xff] %v1195
    %v1200 = vld [vmem:[#allocation4] sm:$0xff]
    %s1201 = smul.u32 4, 4
    %s1202 = smul.addr %s1201, 8
    %s1203 = scalar_lea.vmem [#allocation3], %s1202
    %v1204 = vld [vmem:[%s1203] sm:$0xff]
    %v1205 = vld [vmem:[%s1203 + $0x8] sm:$0xff]
    %v1206 = vld [vmem:[%s1203 + $0x10] sm:$0xff]
    %v1207 = vld [vmem:[%s1203 + $0x18] sm:$0xff]
    %1208 = vmatprep.subr.mxu0 %v112
    %1209 = vmatpush1.msra.mxu0 %v111
    %1210 = vmatprep.subr.mxu0 %v108
    %1211 = vmatpush1.msra.mxu0 %v107
    %1212 = vmatprep.subr.mxu0 %v104
    %1213 = vmatpush1.msra.mxu0 %v103
    %1214 = vmatprep.subr.mxu0 %v100
    %1215 = vmatpush1.msra.mxu0 %v99
    %1216 = vmatprep.subr.mxu0 %v96
    %1217 = vmatpush1.msra.mxu0 %v95
    %1218 = vmatprep.subr.mxu0 %v92
    %1219 = vmatpush1.msra.mxu0 %v91
    %1220 = vmatprep.subr.mxu0 %v88
    %1221 = vmatpush1.msra.mxu0 %v87
    %1222 = vmatprep.subr.mxu0 %v84
    %1223 = vmatpush1.msra.mxu0 %v83
    %1224 = vmatprep.subr.mxu0 %v80
    %1225 = vmatpush1.msra.mxu0 %v79
    %1226 = vmatprep.subr.mxu0 %v76
    %1227 = vmatpush1.msra.mxu0 %v75
    %1228 = vmatprep.subr.mxu0 %v72
    %1229 = vmatpush1.msra.mxu0 %v71
    %1230 = vmatprep.subr.mxu0 %v68
    %1231 = vmatpush1.msra.mxu0 %v67
    %1232 = vmatprep.subr.mxu0 %v64
    %1233 = vmatpush1.msra.mxu0 %v63
    %1234 = vmatprep.subr.mxu0 %v60
    %1235 = vmatpush1.msra.mxu0 %v59
    %1236 = vmatprep.subr.mxu0 %v56
    %1237 = vmatpush1.msra.mxu0 %v55
    %1238 = vmatprep.subr.mxu0 %v52
    %1239 = vmatpush1.msra.mxu0 %v51
    %1240 = vmatprep.subr.mxu0 0.0
    %1241 = vmatpush2.msra.mxu0 0.0
    %1242 = vmatprep.subr.mxu0 0.0
    %1243 = vmatpush2.msra.mxu0 0.0
    %1244 = vmatprep.subr.mxu0 0.0
    %1245 = vmatpush2.msra.mxu0 0.0
    %1246 = vmatprep.subr.mxu0 0.0
    %1247 = vmatpush2.msra.mxu0 0.0
    %1248 = vmatprep.subr.mxu0 0.0
    %1249 = vmatpush2.msra.mxu0 0.0
    %1250 = vmatprep.subr.mxu0 0.0
    %1251 = vmatpush2.msra.mxu0 0.0
    %1252 = vmatprep.subr.mxu0 0.0
    %1253 = vmatpush2.msra.mxu0 0.0
    %1254 = vmatprep.subr.mxu0 0.0
    %1255 = vmatpush2.msra.mxu0 0.0
    %1256 = vmatprep.subr.mxu0 0.0
    %1257 = vmatpush2.msra.mxu0 0.0
    %1258 = vmatprep.subr.mxu0 0.0
    %1259 = vmatpush2.msra.mxu0 0.0
    %1260 = vmatprep.subr.mxu0 0.0
    %1261 = vmatpush2.msra.mxu0 0.0
    %1262 = vmatprep.subr.mxu0 0.0
    %1263 = vmatpush2.msra.mxu0 0.0
    %1264 = vmatprep.subr.mxu0 0.0
    %1265 = vmatpush2.msra.mxu0 0.0
    %1266 = vmatprep.subr.mxu0 0.0
    %1267 = vmatpush2.msra.mxu0 0.0
    %1268 = vmatprep.subr.mxu0 0.0
    %1269 = vmatpush2.msra.mxu0 0.0
    %1270 = vmatprep.subr.mxu0 0.0
    %1271 = vmatpush2.msra.mxu0 0.0
    %1272 = vmatprep.mubr.f32.mxu0 0.0
    %1273 = vmatmul.mubr.f32.gmra.mxu0 %v1200
    %v1274 = vpop.f32.mrf.mxu0
    %v1275 = vadd.f32 0.0, %v1274
    %v1276 = vpop.f32.mrf.mxu0
    %v1277 = vadd.f32 0.0, %v1276
    %1278 = vdwg.mxu0
    %1279 = vmatprep.subr.mxu0 %v114
    %1280 = vmatpush1.msra.mxu0 %v113
    %1281 = vmatprep.subr.mxu0 %v110
    %1282 = vmatpush1.msra.mxu0 %v109
    %1283 = vmatprep.subr.mxu0 %v106
    %1284 = vmatpush1.msra.mxu0 %v105
    %1285 = vmatprep.subr.mxu0 %v102
    %1286 = vmatpush1.msra.mxu0 %v101
    %1287 = vmatprep.subr.mxu0 %v98
    %1288 = vmatpush1.msra.mxu0 %v97
    %1289 = vmatprep.subr.mxu0 %v94
    %1290 = vmatpush1.msra.mxu0 %v93
    %1291 = vmatprep.subr.mxu0 %v90
    %1292 = vmatpush1.msra.mxu0 %v89
    %1293 = vmatprep.subr.mxu0 %v86
    %1294 = vmatpush1.msra.mxu0 %v85
    %1295 = vmatprep.subr.mxu0 %v82
    %1296 = vmatpush1.msra.mxu0 %v81
    %1297 = vmatprep.subr.mxu0 %v78
    %1298 = vmatpush1.msra.mxu0 %v77
    %1299 = vmatprep.subr.mxu0 %v74
    %1300 = vmatpush1.msra.mxu0 %v73
    %1301 = vmatprep.subr.mxu0 %v70
    %1302 = vmatpush1.msra.mxu0 %v69
    %1303 = vmatprep.subr.mxu0 %v66
    %1304 = vmatpush1.msra.mxu0 %v65
    %1305 = vmatprep.subr.mxu0 %v62
    %1306 = vmatpush1.msra.mxu0 %v61
    %1307 = vmatprep.subr.mxu0 %v58
    %1308 = vmatpush1.msra.mxu0 %v57
    %1309 = vmatprep.subr.mxu0 %v54
    %1310 = vmatpush1.msra.mxu0 %v53
    %1311 = vmatprep.subr.mxu0 0.0
    %1312 = vmatpush2.msra.mxu0 0.0
    %1313 = vmatprep.subr.mxu0 0.0
    %1314 = vmatpush2.msra.mxu0 0.0
    %1315 = vmatprep.subr.mxu0 0.0
    %1316 = vmatpush2.msra.mxu0 0.0
    %1317 = vmatprep.subr.mxu0 0.0
    %1318 = vmatpush2.msra.mxu0 0.0
    %1319 = vmatprep.subr.mxu0 0.0
    %1320 = vmatpush2.msra.mxu0 0.0
    %1321 = vmatprep.subr.mxu0 0.0
    %1322 = vmatpush2.msra.mxu0 0.0
    %1323 = vmatprep.subr.mxu0 0.0
    %1324 = vmatpush2.msra.mxu0 0.0
    %1325 = vmatprep.subr.mxu0 0.0
    %1326 = vmatpush2.msra.mxu0 0.0
    %1327 = vmatprep.subr.mxu0 0.0
    %1328 = vmatpush2.msra.mxu0 0.0
    %1329 = vmatprep.subr.mxu0 0.0
    %1330 = vmatpush2.msra.mxu0 0.0
    %1331 = vmatprep.subr.mxu0 0.0
    %1332 = vmatpush2.msra.mxu0 0.0
    %1333 = vmatprep.subr.mxu0 0.0
    %1334 = vmatpush2.msra.mxu0 0.0
    %1335 = vmatprep.subr.mxu0 0.0
    %1336 = vmatpush2.msra.mxu0 0.0
    %1337 = vmatprep.subr.mxu0 0.0
    %1338 = vmatpush2.msra.mxu0 0.0
    %1339 = vmatprep.subr.mxu0 0.0
    %1340 = vmatpush2.msra.mxu0 0.0
    %1341 = vmatprep.subr.mxu0 0.0
    %1342 = vmatpush2.msra.mxu0 0.0
    %1343 = vmatprep.mubr.f32.mxu0 0.0
    %1344 = vmatmul.mubr.f32.gmra.mxu0 %v1200
    %v1345 = vpop.f32.mrf.mxu0
    %v1346 = vadd.f32 0.0, %v1345
    %v1347 = vpop.f32.mrf.mxu0
    %v1348 = vadd.f32 0.0, %v1347
    %1349 = vdwg.mxu0
    %v1350 = vadd.f32 %v1204, %v1275
    %v1351 = vadd.f32 %v1205, %v1277
    %v1352 = vadd.f32 %v1206, %v1346
    %v1353 = vadd.f32 %v1207, %v1348
    %v1354 = vxor.u32 %v1350, 2147483648
    %v1355 = vmul.f32 %v1354, 1.442695
    %v1356 = vpow.pop %v1355
    %v1357 = vadd.f32 %v1356, 1.0
    %v1358 = vrcp.pop %v1357
    %v1359 = vmul.f32 1.0, %v1358
    %v1360 = vxor.u32 %v1351, 2147483648
    %v1361 = vmul.f32 %v1360, 1.442695
    %v1362 = vpow.pop %v1361
    %v1363 = vadd.f32 %v1362, 1.0
    %v1364 = vrcp.pop %v1363
    %v1365 = vmul.f32 1.0, %v1364
    %v1366 = vtanh.pop %v1352
    %v1367 = vxor.u32 %v1353, 2147483648
    %v1368 = vmul.f32 %v1367, 1.442695
    %v1369 = vpow.pop %v1368
    %v1370 = vadd.f32 %v1369, 1.0
    %v1371 = vrcp.pop %v1370
    %v1372 = vmul.f32 1.0, %v1371
    %v1373 = vld [vmem:[#allocation5] sm:$0xff]
    %v1374 = vmul.f32 %v1365, %v1373
    %v1375 = vmul.f32 %v1359, %v1366
    %v1376 = vadd.f32 %v1374, %v1375
    %v1377 = vtanh.pop %v1376
    %v1378 = vmul.f32 %v1372, %v1377
    %1379 = vst [vmem:[#allocation4] sm:$0xff] %v1378
    %1380 = vst [vmem:[#allocation5] sm:$0xff] %v1376
    %s1381 = scalar_lea.vmem [#allocation2], 32
    %1382 = vst [vmem:[%s1381] sm:$0xff] %v1378
    %v1383 = vld [vmem:[#allocation4] sm:$0xff]
    %s1384 = smul.u32 5, 4
    %s1385 = smul.addr %s1384, 8
    %s1386 = scalar_lea.vmem [#allocation3], %s1385
    %v1387 = vld [vmem:[%s1386] sm:$0xff]
    %v1388 = vld [vmem:[%s1386 + $0x8] sm:$0xff]
    %v1389 = vld [vmem:[%s1386 + $0x10] sm:$0xff]
    %v1390 = vld [vmem:[%s1386 + $0x18] sm:$0xff]
    %1391 = vmatprep.subr.mxu0 %v112
    %1392 = vmatpush1.msra.mxu0 %v111
    %1393 = vmatprep.subr.mxu0 %v108
    %1394 = vmatpush1.msra.mxu0 %v107
    %1395 = vmatprep.subr.mxu0 %v104
    %1396 = vmatpush1.msra.mxu0 %v103
    %1397 = vmatprep.subr.mxu0 %v100
    %1398 = vmatpush1.msra.mxu0 %v99
    %1399 = vmatprep.subr.mxu0 %v96
    %1400 = vmatpush1.msra.mxu0 %v95
    %1401 = vmatprep.subr.mxu0 %v92
    %1402 = vmatpush1.msra.mxu0 %v91
    %1403 = vmatprep.subr.mxu0 %v88
    %1404 = vmatpush1.msra.mxu0 %v87
    %1405 = vmatprep.subr.mxu0 %v84
    %1406 = vmatpush1.msra.mxu0 %v83
    %1407 = vmatprep.subr.mxu0 %v80
    %1408 = vmatpush1.msra.mxu0 %v79
    %1409 = vmatprep.subr.mxu0 %v76
    %1410 = vmatpush1.msra.mxu0 %v75
    %1411 = vmatprep.subr.mxu0 %v72
    %1412 = vmatpush1.msra.mxu0 %v71
    %1413 = vmatprep.subr.mxu0 %v68
    %1414 = vmatpush1.msra.mxu0 %v67
    %1415 = vmatprep.subr.mxu0 %v64
    %1416 = vmatpush1.msra.mxu0 %v63
    %1417 = vmatprep.subr.mxu0 %v60
    %1418 = vmatpush1.msra.mxu0 %v59
    %1419 = vmatprep.subr.mxu0 %v56
    %1420 = vmatpush1.msra.mxu0 %v55
    %1421 = vmatprep.subr.mxu0 %v52
    %1422 = vmatpush1.msra.mxu0 %v51
    %1423 = vmatprep.subr.mxu0 0.0
    %1424 = vmatpush2.msra.mxu0 0.0
    %1425 = vmatprep.subr.mxu0 0.0
    %1426 = vmatpush2.msra.mxu0 0.0
    %1427 = vmatprep.subr.mxu0 0.0
    %1428 = vmatpush2.msra.mxu0 0.0
    %1429 = vmatprep.subr.mxu0 0.0
    %1430 = vmatpush2.msra.mxu0 0.0
    %1431 = vmatprep.subr.mxu0 0.0
    %1432 = vmatpush2.msra.mxu0 0.0
    %1433 = vmatprep.subr.mxu0 0.0
    %1434 = vmatpush2.msra.mxu0 0.0
    %1435 = vmatprep.subr.mxu0 0.0
    %1436 = vmatpush2.msra.mxu0 0.0
    %1437 = vmatprep.subr.mxu0 0.0
    %1438 = vmatpush2.msra.mxu0 0.0
    %1439 = vmatprep.subr.mxu0 0.0
    %1440 = vmatpush2.msra.mxu0 0.0
    %1441 = vmatprep.subr.mxu0 0.0
    %1442 = vmatpush2.msra.mxu0 0.0
    %1443 = vmatprep.subr.mxu0 0.0
    %1444 = vmatpush2.msra.mxu0 0.0
    %1445 = vmatprep.subr.mxu0 0.0
    %1446 = vmatpush2.msra.mxu0 0.0
    %1447 = vmatprep.subr.mxu0 0.0
    %1448 = vmatpush2.msra.mxu0 0.0
    %1449 = vmatprep.subr.mxu0 0.0
    %1450 = vmatpush2.msra.mxu0 0.0
    %1451 = vmatprep.subr.mxu0 0.0
    %1452 = vmatpush2.msra.mxu0 0.0
    %1453 = vmatprep.subr.mxu0 0.0
    %1454 = vmatpush2.msra.mxu0 0.0
    %1455 = vmatprep.mubr.f32.mxu0 0.0
    %1456 = vmatmul.mubr.f32.gmra.mxu0 %v1383
    %v1457 = vpop.f32.mrf.mxu0
    %v1458 = vadd.f32 0.0, %v1457
    %v1459 = vpop.f32.mrf.mxu0
    %v1460 = vadd.f32 0.0, %v1459
    %1461 = vdwg.mxu0
    %1462 = vmatprep.subr.mxu0 %v114
    %1463 = vmatpush1.msra.mxu0 %v113
    %1464 = vmatprep.subr.mxu0 %v110
    %1465 = vmatpush1.msra.mxu0 %v109
    %1466 = vmatprep.subr.mxu0 %v106
    %1467 = vmatpush1.msra.mxu0 %v105
    %1468 = vmatprep.subr.mxu0 %v102
    %1469 = vmatpush1.msra.mxu0 %v101
    %1470 = vmatprep.subr.mxu0 %v98
    %1471 = vmatpush1.msra.mxu0 %v97
    %1472 = vmatprep.subr.mxu0 %v94
    %1473 = vmatpush1.msra.mxu0 %v93
    %1474 = vmatprep.subr.mxu0 %v90
    %1475 = vmatpush1.msra.mxu0 %v89
    %1476 = vmatprep.subr.mxu0 %v86
    %1477 = vmatpush1.msra.mxu0 %v85
    %1478 = vmatprep.subr.mxu0 %v82
    %1479 = vmatpush1.msra.mxu0 %v81
    %1480 = vmatprep.subr.mxu0 %v78
    %1481 = vmatpush1.msra.mxu0 %v77
    %1482 = vmatprep.subr.mxu0 %v74
    %1483 = vmatpush1.msra.mxu0 %v73
    %1484 = vmatprep.subr.mxu0 %v70
    %1485 = vmatpush1.msra.mxu0 %v69
    %1486 = vmatprep.subr.mxu0 %v66
    %1487 = vmatpush1.msra.mxu0 %v65
    %1488 = vmatprep.subr.mxu0 %v62
    %1489 = vmatpush1.msra.mxu0 %v61
    %1490 = vmatprep.subr.mxu0 %v58
    %1491 = vmatpush1.msra.mxu0 %v57
    %1492 = vmatprep.subr.mxu0 %v54
    %1493 = vmatpush1.msra.mxu0 %v53
    %1494 = vmatprep.subr.mxu0 0.0
    %1495 = vmatpush2.msra.mxu0 0.0
    %1496 = vmatprep.subr.mxu0 0.0
    %1497 = vmatpush2.msra.mxu0 0.0
    %1498 = vmatprep.subr.mxu0 0.0
    %1499 = vmatpush2.msra.mxu0 0.0
    %1500 = vmatprep.subr.mxu0 0.0
    %1501 = vmatpush2.msra.mxu0 0.0
    %1502 = vmatprep.subr.mxu0 0.0
    %1503 = vmatpush2.msra.mxu0 0.0
    %1504 = vmatprep.subr.mxu0 0.0
    %1505 = vmatpush2.msra.mxu0 0.0
    %1506 = vmatprep.subr.mxu0 0.0
    %1507 = vmatpush2.msra.mxu0 0.0
    %1508 = vmatprep.subr.mxu0 0.0
    %1509 = vmatpush2.msra.mxu0 0.0
    %1510 = vmatprep.subr.mxu0 0.0
    %1511 = vmatpush2.msra.mxu0 0.0
    %1512 = vmatprep.subr.mxu0 0.0
    %1513 = vmatpush2.msra.mxu0 0.0
    %1514 = vmatprep.subr.mxu0 0.0
    %1515 = vmatpush2.msra.mxu0 0.0
    %1516 = vmatprep.subr.mxu0 0.0
    %1517 = vmatpush2.msra.mxu0 0.0
    %1518 = vmatprep.subr.mxu0 0.0
    %1519 = vmatpush2.msra.mxu0 0.0
    %1520 = vmatprep.subr.mxu0 0.0
    %1521 = vmatpush2.msra.mxu0 0.0
    %1522 = vmatprep.subr.mxu0 0.0
    %1523 = vmatpush2.msra.mxu0 0.0
    %1524 = vmatprep.subr.mxu0 0.0
    %1525 = vmatpush2.msra.mxu0 0.0
    %1526 = vmatprep.mubr.f32.mxu0 0.0
    %1527 = vmatmul.mubr.f32.gmra.mxu0 %v1383
    %v1528 = vpop.f32.mrf.mxu0
    %v1529 = vadd.f32 0.0, %v1528
    %v1530 = vpop.f32.mrf.mxu0
    %v1531 = vadd.f32 0.0, %v1530
    %1532 = vdwg.mxu0
    %v1533 = vadd.f32 %v1387, %v1458
    %v1534 = vadd.f32 %v1388, %v1460
    %v1535 = vadd.f32 %v1389, %v1529
    %v1536 = vadd.f32 %v1390, %v1531
    %v1537 = vxor.u32 %v1533, 2147483648
    %v1538 = vmul.f32 %v1537, 1.442695
    %v1539 = vpow.pop %v1538
    %v1540 = vadd.f32 %v1539, 1.0
    %v1541 = vrcp.pop %v1540
    %v1542 = vmul.f32 1.0, %v1541
    %v1543 = vxor.u32 %v1534, 2147483648
    %v1544 = vmul.f32 %v1543, 1.442695
    %v1545 = vpow.pop %v1544
    %v1546 = vadd.f32 %v1545, 1.0
    %v1547 = vrcp.pop %v1546
    %v1548 = vmul.f32 1.0, %v1547
    %v1549 = vtanh.pop %v1535
    %v1550 = vxor.u32 %v1536, 2147483648
    %v1551 = vmul.f32 %v1550, 1.442695
    %v1552 = vpow.pop %v1551
    %v1553 = vadd.f32 %v1552, 1.0
    %v1554 = vrcp.pop %v1553
    %v1555 = vmul.f32 1.0, %v1554
    %v1556 = vld [vmem:[#allocation5] sm:$0xff]
    %v1557 = vmul.f32 %v1548, %v1556
    %v1558 = vmul.f32 %v1542, %v1549
    %v1559 = vadd.f32 %v1557, %v1558
    %v1560 = vtanh.pop %v1559
    %v1561 = vmul.f32 %v1555, %v1560
    %1562 = vst [vmem:[#allocation4] sm:$0xff] %v1561
    %1563 = vst [vmem:[#allocation5] sm:$0xff] %v1559
    %s1564 = scalar_lea.vmem [#allocation2], 40
    %1565 = vst [vmem:[%s1564] sm:$0xff] %v1561
    %v1566 = vld [vmem:[#allocation4] sm:$0xff]
    %s1567 = smul.u32 6, 4
    %s1568 = smul.addr %s1567, 8
    %s1569 = scalar_lea.vmem [#allocation3], %s1568
    %v1570 = vld [vmem:[%s1569] sm:$0xff]
    %v1571 = vld [vmem:[%s1569 + $0x8] sm:$0xff]
    %v1572 = vld [vmem:[%s1569 + $0x10] sm:$0xff]
    %v1573 = vld [vmem:[%s1569 + $0x18] sm:$0xff]
    %1574 = vmatprep.subr.mxu0 %v112
    %1575 = vmatpush1.msra.mxu0 %v111
    %1576 = vmatprep.subr.mxu0 %v108
    %1577 = vmatpush1.msra.mxu0 %v107
    %1578 = vmatprep.subr.mxu0 %v104
    %1579 = vmatpush1.msra.mxu0 %v103
    %1580 = vmatprep.subr.mxu0 %v100
    %1581 = vmatpush1.msra.mxu0 %v99
    %1582 = vmatprep.subr.mxu0 %v96
    %1583 = vmatpush1.msra.mxu0 %v95
    %1584 = vmatprep.subr.mxu0 %v92
    %1585 = vmatpush1.msra.mxu0 %v91
    %1586 = vmatprep.subr.mxu0 %v88
    %1587 = vmatpush1.msra.mxu0 %v87
    %1588 = vmatprep.subr.mxu0 %v84
    %1589 = vmatpush1.msra.mxu0 %v83
    %1590 = vmatprep.subr.mxu0 %v80
    %1591 = vmatpush1.msra.mxu0 %v79
    %1592 = vmatprep.subr.mxu0 %v76
    %1593 = vmatpush1.msra.mxu0 %v75
    %1594 = vmatprep.subr.mxu0 %v72
    %1595 = vmatpush1.msra.mxu0 %v71
    %1596 = vmatprep.subr.mxu0 %v68
    %1597 = vmatpush1.msra.mxu0 %v67
    %1598 = vmatprep.subr.mxu0 %v64
    %1599 = vmatpush1.msra.mxu0 %v63
    %1600 = vmatprep.subr.mxu0 %v60
    %1601 = vmatpush1.msra.mxu0 %v59
    %1602 = vmatprep.subr.mxu0 %v56
    %1603 = vmatpush1.msra.mxu0 %v55
    %1604 = vmatprep.subr.mxu0 %v52
    %1605 = vmatpush1.msra.mxu0 %v51
    %1606 = vmatprep.subr.mxu0 0.0
    %1607 = vmatpush2.msra.mxu0 0.0
    %1608 = vmatprep.subr.mxu0 0.0
    %1609 = vmatpush2.msra.mxu0 0.0
    %1610 = vmatprep.subr.mxu0 0.0
    %1611 = vmatpush2.msra.mxu0 0.0
    %1612 = vmatprep.subr.mxu0 0.0
    %1613 = vmatpush2.msra.mxu0 0.0
    %1614 = vmatprep.subr.mxu0 0.0
    %1615 = vmatpush2.msra.mxu0 0.0
    %1616 = vmatprep.subr.mxu0 0.0
    %1617 = vmatpush2.msra.mxu0 0.0
    %1618 = vmatprep.subr.mxu0 0.0
    %1619 = vmatpush2.msra.mxu0 0.0
    %1620 = vmatprep.subr.mxu0 0.0
    %1621 = vmatpush2.msra.mxu0 0.0
    %1622 = vmatprep.subr.mxu0 0.0
    %1623 = vmatpush2.msra.mxu0 0.0
    %1624 = vmatprep.subr.mxu0 0.0
    %1625 = vmatpush2.msra.mxu0 0.0
    %1626 = vmatprep.subr.mxu0 0.0
    %1627 = vmatpush2.msra.mxu0 0.0
    %1628 = vmatprep.subr.mxu0 0.0
    %1629 = vmatpush2.msra.mxu0 0.0
    %1630 = vmatprep.subr.mxu0 0.0
    %1631 = vmatpush2.msra.mxu0 0.0
    %1632 = vmatprep.subr.mxu0 0.0
    %1633 = vmatpush2.msra.mxu0 0.0
    %1634 = vmatprep.subr.mxu0 0.0
    %1635 = vmatpush2.msra.mxu0 0.0
    %1636 = vmatprep.subr.mxu0 0.0
    %1637 = vmatpush2.msra.mxu0 0.0
    %1638 = vmatprep.mubr.f32.mxu0 0.0
    %1639 = vmatmul.mubr.f32.gmra.mxu0 %v1566
    %v1640 = vpop.f32.mrf.mxu0
    %v1641 = vadd.f32 0.0, %v1640
    %v1642 = vpop.f32.mrf.mxu0
    %v1643 = vadd.f32 0.0, %v1642
    %1644 = vdwg.mxu0
    %1645 = vmatprep.subr.mxu0 %v114
    %1646 = vmatpush1.msra.mxu0 %v113
    %1647 = vmatprep.subr.mxu0 %v110
    %1648 = vmatpush1.msra.mxu0 %v109
    %1649 = vmatprep.subr.mxu0 %v106
    %1650 = vmatpush1.msra.mxu0 %v105
    %1651 = vmatprep.subr.mxu0 %v102
    %1652 = vmatpush1.msra.mxu0 %v101
    %1653 = vmatprep.subr.mxu0 %v98
    %1654 = vmatpush1.msra.mxu0 %v97
    %1655 = vmatprep.subr.mxu0 %v94
    %1656 = vmatpush1.msra.mxu0 %v93
    %1657 = vmatprep.subr.mxu0 %v90
    %1658 = vmatpush1.msra.mxu0 %v89
    %1659 = vmatprep.subr.mxu0 %v86
    %1660 = vmatpush1.msra.mxu0 %v85
    %1661 = vmatprep.subr.mxu0 %v82
    %1662 = vmatpush1.msra.mxu0 %v81
    %1663 = vmatprep.subr.mxu0 %v78
    %1664 = vmatpush1.msra.mxu0 %v77
    %1665 = vmatprep.subr.mxu0 %v74
    %1666 = vmatpush1.msra.mxu0 %v73
    %1667 = vmatprep.subr.mxu0 %v70
    %1668 = vmatpush1.msra.mxu0 %v69
    %1669 = vmatprep.subr.mxu0 %v66
    %1670 = vmatpush1.msra.mxu0 %v65
    %1671 = vmatprep.subr.mxu0 %v62
    %1672 = vmatpush1.msra.mxu0 %v61
    %1673 = vmatprep.subr.mxu0 %v58
    %1674 = vmatpush1.msra.mxu0 %v57
    %1675 = vmatprep.subr.mxu0 %v54
    %1676 = vmatpush1.msra.mxu0 %v53
    %1677 = vmatprep.subr.mxu0 0.0
    %1678 = vmatpush2.msra.mxu0 0.0
    %1679 = vmatprep.subr.mxu0 0.0
    %1680 = vmatpush2.msra.mxu0 0.0
    %1681 = vmatprep.subr.mxu0 0.0
    %1682 = vmatpush2.msra.mxu0 0.0
    %1683 = vmatprep.subr.mxu0 0.0
    %1684 = vmatpush2.msra.mxu0 0.0
    %1685 = vmatprep.subr.mxu0 0.0
    %1686 = vmatpush2.msra.mxu0 0.0
    %1687 = vmatprep.subr.mxu0 0.0
    %1688 = vmatpush2.msra.mxu0 0.0
    %1689 = vmatprep.subr.mxu0 0.0
    %1690 = vmatpush2.msra.mxu0 0.0
    %1691 = vmatprep.subr.mxu0 0.0
    %1692 = vmatpush2.msra.mxu0 0.0
    %1693 = vmatprep.subr.mxu0 0.0
    %1694 = vmatpush2.msra.mxu0 0.0
    %1695 = vmatprep.subr.mxu0 0.0
    %1696 = vmatpush2.msra.mxu0 0.0
    %1697 = vmatprep.subr.mxu0 0.0
    %1698 = vmatpush2.msra.mxu0 0.0
    %1699 = vmatprep.subr.mxu0 0.0
    %1700 = vmatpush2.msra.mxu0 0.0
    %1701 = vmatprep.subr.mxu0 0.0
    %1702 = vmatpush2.msra.mxu0 0.0
    %1703 = vmatprep.subr.mxu0 0.0
    %1704 = vmatpush2.msra.mxu0 0.0
    %1705 = vmatprep.subr.mxu0 0.0
    %1706 = vmatpush2.msra.mxu0 0.0
    %1707 = vmatprep.subr.mxu0 0.0
    %1708 = vmatpush2.msra.mxu0 0.0
    %1709 = vmatprep.mubr.f32.mxu0 0.0
    %1710 = vmatmul.mubr.f32.gmra.mxu0 %v1566
    %v1711 = vpop.f32.mrf.mxu0
    %v1712 = vadd.f32 0.0, %v1711
    %v1713 = vpop.f32.mrf.mxu0
    %v1714 = vadd.f32 0.0, %v1713
    %1715 = vdwg.mxu0
    %v1716 = vadd.f32 %v1570, %v1641
    %v1717 = vadd.f32 %v1571, %v1643
    %v1718 = vadd.f32 %v1572, %v1712
    %v1719 = vadd.f32 %v1573, %v1714
    %v1720 = vxor.u32 %v1716, 2147483648
    %v1721 = vmul.f32 %v1720, 1.442695
    %v1722 = vpow.pop %v1721
    %v1723 = vadd.f32 %v1722, 1.0
    %v1724 = vrcp.pop %v1723
    %v1725 = vmul.f32 1.0, %v1724
    %v1726 = vxor.u32 %v1717, 2147483648
    %v1727 = vmul.f32 %v1726, 1.442695
    %v1728 = vpow.pop %v1727
    %v1729 = vadd.f32 %v1728, 1.0
    %v1730 = vrcp.pop %v1729
    %v1731 = vmul.f32 1.0, %v1730
    %v1732 = vtanh.pop %v1718
    %v1733 = vxor.u32 %v1719, 2147483648
    %v1734 = vmul.f32 %v1733, 1.442695
    %v1735 = vpow.pop %v1734
    %v1736 = vadd.f32 %v1735, 1.0
    %v1737 = vrcp.pop %v1736
    %v1738 = vmul.f32 1.0, %v1737
    %v1739 = vld [vmem:[#allocation5] sm:$0xff]
    %v1740 = vmul.f32 %v1731, %v1739
    %v1741 = vmul.f32 %v1725, %v1732
    %v1742 = vadd.f32 %v1740, %v1741
    %v1743 = vtanh.pop %v1742
    %v1744 = vmul.f32 %v1738, %v1743
    %1745 = vst [vmem:[#allocation4] sm:$0xff] %v1744
    %1746 = vst [vmem:[#allocation5] sm:$0xff] %v1742
    %s1747 = scalar_lea.vmem [#allocation2], 48
    %1748 = vst [vmem:[%s1747] sm:$0xff] %v1744
    %v1749 = vld [vmem:[#allocation4] sm:$0xff]
    %s1750 = smul.u32 7, 4
    %s1751 = smul.addr %s1750, 8
    %s1752 = scalar_lea.vmem [#allocation3], %s1751
    %v1753 = vld [vmem:[%s1752] sm:$0xff]
    %v1754 = vld [vmem:[%s1752 + $0x8] sm:$0xff]
    %v1755 = vld [vmem:[%s1752 + $0x10] sm:$0xff]
    %v1756 = vld [vmem:[%s1752 + $0x18] sm:$0xff]
    %1757 = vmatprep.subr.mxu0 %v112
    %1758 = vmatpush1.msra.mxu0 %v111
    %1759 = vmatprep.subr.mxu0 %v108
    %1760 = vmatpush1.msra.mxu0 %v107
    %1761 = vmatprep.subr.mxu0 %v104
    %1762 = vmatpush1.msra.mxu0 %v103
    %1763 = vmatprep.subr.mxu0 %v100
    %1764 = vmatpush1.msra.mxu0 %v99
    %1765 = vmatprep.subr.mxu0 %v96
    %1766 = vmatpush1.msra.mxu0 %v95
    %1767 = vmatprep.subr.mxu0 %v92
    %1768 = vmatpush1.msra.mxu0 %v91
    %1769 = vmatprep.subr.mxu0 %v88
    %1770 = vmatpush1.msra.mxu0 %v87
    %1771 = vmatprep.subr.mxu0 %v84
    %1772 = vmatpush1.msra.mxu0 %v83
    %1773 = vmatprep.subr.mxu0 %v80
    %1774 = vmatpush1.msra.mxu0 %v79
    %1775 = vmatprep.subr.mxu0 %v76
    %1776 = vmatpush1.msra.mxu0 %v75
    %1777 = vmatprep.subr.mxu0 %v72
    %1778 = vmatpush1.msra.mxu0 %v71
    %1779 = vmatprep.subr.mxu0 %v68
    %1780 = vmatpush1.msra.mxu0 %v67
    %1781 = vmatprep.subr.mxu0 %v64
    %1782 = vmatpush1.msra.mxu0 %v63
    %1783 = vmatprep.subr.mxu0 %v60
    %1784 = vmatpush1.msra.mxu0 %v59
    %1785 = vmatprep.subr.mxu0 %v56
    %1786 = vmatpush1.msra.mxu0 %v55
    %1787 = vmatprep.subr.mxu0 %v52
    %1788 = vmatpush1.msra.mxu0 %v51
    %1789 = vmatprep.subr.mxu0 0.0
    %1790 = vmatpush2.msra.mxu0 0.0
    %1791 = vmatprep.subr.mxu0 0.0
    %1792 = vmatpush2.msra.mxu0 0.0
    %1793 = vmatprep.subr.mxu0 0.0
    %1794 = vmatpush2.msra.mxu0 0.0
    %1795 = vmatprep.subr.mxu0 0.0
    %1796 = vmatpush2.msra.mxu0 0.0
    %1797 = vmatprep.subr.mxu0 0.0
    %1798 = vmatpush2.msra.mxu0 0.0
    %1799 = vmatprep.subr.mxu0 0.0
    %1800 = vmatpush2.msra.mxu0 0.0
    %1801 = vmatprep.subr.mxu0 0.0
    %1802 = vmatpush2.msra.mxu0 0.0
    %1803 = vmatprep.subr.mxu0 0.0
    %1804 = vmatpush2.msra.mxu0 0.0
    %1805 = vmatprep.subr.mxu0 0.0
    %1806 = vmatpush2.msra.mxu0 0.0
    %1807 = vmatprep.subr.mxu0 0.0
    %1808 = vmatpush2.msra.mxu0 0.0
    %1809 = vmatprep.subr.mxu0 0.0
    %1810 = vmatpush2.msra.mxu0 0.0
    %1811 = vmatprep.subr.mxu0 0.0
    %1812 = vmatpush2.msra.mxu0 0.0
    %1813 = vmatprep.subr.mxu0 0.0
    %1814 = vmatpush2.msra.mxu0 0.0
    %1815 = vmatprep.subr.mxu0 0.0
    %1816 = vmatpush2.msra.mxu0 0.0
    %1817 = vmatprep.subr.mxu0 0.0
    %1818 = vmatpush2.msra.mxu0 0.0
    %1819 = vmatprep.subr.mxu0 0.0
    %1820 = vmatpush2.msra.mxu0 0.0
    %1821 = vmatprep.mubr.f32.mxu0 0.0
    %1822 = vmatmul.mubr.f32.gmra.mxu0 %v1749
    %v1823 = vpop.f32.mrf.mxu0
    %v1824 = vadd.f32 0.0, %v1823
    %v1825 = vpop.f32.mrf.mxu0
    %v1826 = vadd.f32 0.0, %v1825
    %1827 = vdwg.mxu0
    %1828 = vmatprep.subr.mxu0 %v114
    %1829 = vmatpush1.msra.mxu0 %v113
    %1830 = vmatprep.subr.mxu0 %v110
    %1831 = vmatpush1.msra.mxu0 %v109
    %1832 = vmatprep.subr.mxu0 %v106
    %1833 = vmatpush1.msra.mxu0 %v105
    %1834 = vmatprep.subr.mxu0 %v102
    %1835 = vmatpush1.msra.mxu0 %v101
    %1836 = vmatprep.subr.mxu0 %v98
    %1837 = vmatpush1.msra.mxu0 %v97
    %1838 = vmatprep.subr.mxu0 %v94
    %1839 = vmatpush1.msra.mxu0 %v93
    %1840 = vmatprep.subr.mxu0 %v90
    %1841 = vmatpush1.msra.mxu0 %v89
    %1842 = vmatprep.subr.mxu0 %v86
    %1843 = vmatpush1.msra.mxu0 %v85
    %1844 = vmatprep.subr.mxu0 %v82
    %1845 = vmatpush1.msra.mxu0 %v81
    %1846 = vmatprep.subr.mxu0 %v78
    %1847 = vmatpush1.msra.mxu0 %v77
    %1848 = vmatprep.subr.mxu0 %v74
    %1849 = vmatpush1.msra.mxu0 %v73
    %1850 = vmatprep.subr.mxu0 %v70
    %1851 = vmatpush1.msra.mxu0 %v69
    %1852 = vmatprep.subr.mxu0 %v66
    %1853 = vmatpush1.msra.mxu0 %v65
    %1854 = vmatprep.subr.mxu0 %v62
    %1855 = vmatpush1.msra.mxu0 %v61
    %1856 = vmatprep.subr.mxu0 %v58
    %1857 = vmatpush1.msra.mxu0 %v57
    %1858 = vmatprep.subr.mxu0 %v54
    %1859 = vmatpush1.msra.mxu0 %v53
    %1860 = vmatprep.subr.mxu0 0.0
    %1861 = vmatpush2.msra.mxu0 0.0
    %1862 = vmatprep.subr.mxu0 0.0
    %1863 = vmatpush2.msra.mxu0 0.0
    %1864 = vmatprep.subr.mxu0 0.0
    %1865 = vmatpush2.msra.mxu0 0.0
    %1866 = vmatprep.subr.mxu0 0.0
    %1867 = vmatpush2.msra.mxu0 0.0
    %1868 = vmatprep.subr.mxu0 0.0
    %1869 = vmatpush2.msra.mxu0 0.0
    %1870 = vmatprep.subr.mxu0 0.0
    %1871 = vmatpush2.msra.mxu0 0.0
    %1872 = vmatprep.subr.mxu0 0.0
    %1873 = vmatpush2.msra.mxu0 0.0
    %1874 = vmatprep.subr.mxu0 0.0
    %1875 = vmatpush2.msra.mxu0 0.0
    %1876 = vmatprep.subr.mxu0 0.0
    %1877 = vmatpush2.msra.mxu0 0.0
    %1878 = vmatprep.subr.mxu0 0.0
    %1879 = vmatpush2.msra.mxu0 0.0
    %1880 = vmatprep.subr.mxu0 0.0
    %1881 = vmatpush2.msra.mxu0 0.0
    %1882 = vmatprep.subr.mxu0 0.0
    %1883 = vmatpush2.msra.mxu0 0.0
    %1884 = vmatprep.subr.mxu0 0.0
    %1885 = vmatpush2.msra.mxu0 0.0
    %1886 = vmatprep.subr.mxu0 0.0
    %1887 = vmatpush2.msra.mxu0 0.0
    %1888 = vmatprep.subr.mxu0 0.0
    %1889 = vmatpush2.msra.mxu0 0.0
    %1890 = vmatprep.subr.mxu0 0.0
    %1891 = vmatpush2.msra.mxu0 0.0
    %1892 = vmatprep.mubr.f32.mxu0 0.0
    %1893 = vmatmul.mubr.f32.gmra.mxu0 %v1749
    %v1894 = vpop.f32.mrf.mxu0
    %v1895 = vadd.f32 0.0, %v1894
    %v1896 = vpop.f32.mrf.mxu0
    %v1897 = vadd.f32 0.0, %v1896
    %1898 = vdwg.mxu0
    %v1899 = vadd.f32 %v1753, %v1824
    %v1900 = vadd.f32 %v1754, %v1826
    %v1901 = vadd.f32 %v1755, %v1895
    %v1902 = vadd.f32 %v1756, %v1897
    %v1903 = vxor.u32 %v1899, 2147483648
    %v1904 = vmul.f32 %v1903, 1.442695
    %v1905 = vpow.pop %v1904
    %v1906 = vadd.f32 %v1905, 1.0
    %v1907 = vrcp.pop %v1906
    %v1908 = vmul.f32 1.0, %v1907
    %v1909 = vxor.u32 %v1900, 2147483648
    %v1910 = vmul.f32 %v1909, 1.442695
    %v1911 = vpow.pop %v1910
    %v1912 = vadd.f32 %v1911, 1.0
    %v1913 = vrcp.pop %v1912
    %v1914 = vmul.f32 1.0, %v1913
    %v1915 = vtanh.pop %v1901
    %v1916 = vxor.u32 %v1902, 2147483648
    %v1917 = vmul.f32 %v1916, 1.442695
    %v1918 = vpow.pop %v1917
    %v1919 = vadd.f32 %v1918, 1.0
    %v1920 = vrcp.pop %v1919
    %v1921 = vmul.f32 1.0, %v1920
    %v1922 = vld [vmem:[#allocation5] sm:$0xff]
    %v1923 = vmul.f32 %v1914, %v1922
    %v1924 = vmul.f32 %v1908, %v1915
    %v1925 = vadd.f32 %v1923, %v1924
    %v1926 = vtanh.pop %v1925
    %v1927 = vmul.f32 %v1921, %v1926
    %1928 = vst [vmem:[#allocation4] sm:$0xff] %v1927
    %1929 = vst [vmem:[#allocation5] sm:$0xff] %v1925
    %s1930 = scalar_lea.vmem [#allocation2], 56
    %1931 = vst [vmem:[%s1930] sm:$0xff] %v1927
    %s1932 = scalar_lea.vmem [#allocation8], 512
    %v1933 = vld [vmem:[%s1932] sm:$0xff]
    %v1934 = vld [vmem:[%s1932 + $0x8] sm:$0xff]
    %v1935 = vld [vmem:[%s1932 + $0x10] sm:$0xff]
    %v1936 = vld [vmem:[%s1932 + $0x18] sm:$0xff]
    %v1937 = vld [vmem:[%s1932 + $0x20] sm:$0xff]
    %v1938 = vld [vmem:[%s1932 + $0x28] sm:$0xff]
    %v1939 = vld [vmem:[%s1932 + $0x30] sm:$0xff]
    %v1940 = vld [vmem:[%s1932 + $0x38] sm:$0xff]
    %v1941 = vld [vmem:[%s1932 + $0x40] sm:$0xff]
    %v1942 = vld [vmem:[%s1932 + $0x48] sm:$0xff]
    %v1943 = vld [vmem:[%s1932 + $0x50] sm:$0xff]
    %v1944 = vld [vmem:[%s1932 + $0x58] sm:$0xff]
    %v1945 = vld [vmem:[%s1932 + $0x60] sm:$0xff]
    %v1946 = vld [vmem:[%s1932 + $0x68] sm:$0xff]
    %v1947 = vld [vmem:[%s1932 + $0x70] sm:$0xff]
    %v1948 = vld [vmem:[%s1932 + $0x78] sm:$0xff]
    %v1949 = vld [vmem:[%s1932 + $0x80] sm:$0xff]
    %v1950 = vld [vmem:[%s1932 + $0x88] sm:$0xff]
    %v1951 = vld [vmem:[%s1932 + $0x90] sm:$0xff]
    %v1952 = vld [vmem:[%s1932 + $0x98] sm:$0xff]
    %v1953 = vld [vmem:[%s1932 + $0xa0] sm:$0xff]
    %v1954 = vld [vmem:[%s1932 + $0xa8] sm:$0xff]
    %v1955 = vld [vmem:[%s1932 + $0xb0] sm:$0xff]
    %v1956 = vld [vmem:[%s1932 + $0xb8] sm:$0xff]
    %v1957 = vld [vmem:[%s1932 + $0xc0] sm:$0xff]
    %v1958 = vld [vmem:[%s1932 + $0xc8] sm:$0xff]
    %v1959 = vld [vmem:[%s1932 + $0xd0] sm:$0xff]
    %v1960 = vld [vmem:[%s1932 + $0xd8] sm:$0xff]
    %v1961 = vld [vmem:[%s1932 + $0xe0] sm:$0xff]
    %v1962 = vld [vmem:[%s1932 + $0xe8] sm:$0xff]
    %v1963 = vld [vmem:[%s1932 + $0xf0] sm:$0xff]
    %v1964 = vld [vmem:[%s1932 + $0xf8] sm:$0xff]
    %v1965 = vld [vmem:[%s1932 + $0x100] sm:$0xff]
    %v1966 = vld [vmem:[%s1932 + $0x108] sm:$0xff]
    %v1967 = vld [vmem:[%s1932 + $0x110] sm:$0xff]
    %v1968 = vld [vmem:[%s1932 + $0x118] sm:$0xff]
    %v1969 = vld [vmem:[%s1932 + $0x120] sm:$0xff]
    %v1970 = vld [vmem:[%s1932 + $0x128] sm:$0xff]
    %v1971 = vld [vmem:[%s1932 + $0x130] sm:$0xff]
    %v1972 = vld [vmem:[%s1932 + $0x138] sm:$0xff]
    %v1973 = vld [vmem:[%s1932 + $0x140] sm:$0xff]
    %v1974 = vld [vmem:[%s1932 + $0x148] sm:$0xff]
    %v1975 = vld [vmem:[%s1932 + $0x150] sm:$0xff]
    %v1976 = vld [vmem:[%s1932 + $0x158] sm:$0xff]
    %v1977 = vld [vmem:[%s1932 + $0x160] sm:$0xff]
    %v1978 = vld [vmem:[%s1932 + $0x168] sm:$0xff]
    %v1979 = vld [vmem:[%s1932 + $0x170] sm:$0xff]
    %v1980 = vld [vmem:[%s1932 + $0x178] sm:$0xff]
    %v1981 = vld [vmem:[%s1932 + $0x180] sm:$0xff]
    %v1982 = vld [vmem:[%s1932 + $0x188] sm:$0xff]
    %v1983 = vld [vmem:[%s1932 + $0x190] sm:$0xff]
    %v1984 = vld [vmem:[%s1932 + $0x198] sm:$0xff]
    %v1985 = vld [vmem:[%s1932 + $0x1a0] sm:$0xff]
    %v1986 = vld [vmem:[%s1932 + $0x1a8] sm:$0xff]
    %v1987 = vld [vmem:[%s1932 + $0x1b0] sm:$0xff]
    %v1988 = vld [vmem:[%s1932 + $0x1b8] sm:$0xff]
    %v1989 = vld [vmem:[%s1932 + $0x1c0] sm:$0xff]
    %v1990 = vld [vmem:[%s1932 + $0x1c8] sm:$0xff]
    %v1991 = vld [vmem:[%s1932 + $0x1d0] sm:$0xff]
    %v1992 = vld [vmem:[%s1932 + $0x1d8] sm:$0xff]
    %v1993 = vld [vmem:[%s1932 + $0x1e0] sm:$0xff]
    %v1994 = vld [vmem:[%s1932 + $0x1e8] sm:$0xff]
    %v1995 = vld [vmem:[%s1932 + $0x1f0] sm:$0xff]
    %v1996 = vld [vmem:[%s1932 + $0x1f8] sm:$0xff]
    %v1997 = vld [vmem:[#allocation2] sm:$0xff]
    %v1998 = vld [vmem:[#allocation2 + $0x8] sm:$0xff]
    %v1999 = vld [vmem:[#allocation2 + $0x10] sm:$0xff]
    %v2000 = vld [vmem:[#allocation2 + $0x18] sm:$0xff]
    %v2001 = vld [vmem:[#allocation2 + $0x20] sm:$0xff]
    %v2002 = vld [vmem:[#allocation2 + $0x28] sm:$0xff]
    %v2003 = vld [vmem:[#allocation2 + $0x30] sm:$0xff]
    %v2004 = vld [vmem:[#allocation2 + $0x38] sm:$0xff]
    %s2005 = scalar_lea.vmem [#allocation6], 512
    %v2006 = vld [vmem:[%s2005] sm:$0xff]
    %v2007 = vld [vmem:[%s2005 + $0x8] sm:$0xff]
    %v2008 = vld [vmem:[%s2005 + $0x10] sm:$0xff]
    %v2009 = vld [vmem:[%s2005 + $0x18] sm:$0xff]
    %v2010 = vld [vmem:[%s2005 + $0x20] sm:$0xff]
    %v2011 = vld [vmem:[%s2005 + $0x28] sm:$0xff]
    %v2012 = vld [vmem:[%s2005 + $0x30] sm:$0xff]
    %v2013 = vld [vmem:[%s2005 + $0x38] sm:$0xff]
    %v2014 = vld [vmem:[%s2005 + $0x40] sm:$0xff]
    %v2015 = vld [vmem:[%s2005 + $0x48] sm:$0xff]
    %v2016 = vld [vmem:[%s2005 + $0x50] sm:$0xff]
    %v2017 = vld [vmem:[%s2005 + $0x58] sm:$0xff]
    %v2018 = vld [vmem:[%s2005 + $0x60] sm:$0xff]
    %v2019 = vld [vmem:[%s2005 + $0x68] sm:$0xff]
    %v2020 = vld [vmem:[%s2005 + $0x70] sm:$0xff]
    %v2021 = vld [vmem:[%s2005 + $0x78] sm:$0xff]
    %v2022 = vld [vmem:[%s2005 + $0x80] sm:$0xff]
    %v2023 = vld [vmem:[%s2005 + $0x88] sm:$0xff]
    %v2024 = vld [vmem:[%s2005 + $0x90] sm:$0xff]
    %v2025 = vld [vmem:[%s2005 + $0x98] sm:$0xff]
    %v2026 = vld [vmem:[%s2005 + $0xa0] sm:$0xff]
    %v2027 = vld [vmem:[%s2005 + $0xa8] sm:$0xff]
    %v2028 = vld [vmem:[%s2005 + $0xb0] sm:$0xff]
    %v2029 = vld [vmem:[%s2005 + $0xb8] sm:$0xff]
    %v2030 = vld [vmem:[%s2005 + $0xc0] sm:$0xff]
    %v2031 = vld [vmem:[%s2005 + $0xc8] sm:$0xff]
    %v2032 = vld [vmem:[%s2005 + $0xd0] sm:$0xff]
    %v2033 = vld [vmem:[%s2005 + $0xd8] sm:$0xff]
    %v2034 = vld [vmem:[%s2005 + $0xe0] sm:$0xff]
    %v2035 = vld [vmem:[%s2005 + $0xe8] sm:$0xff]
    %v2036 = vld [vmem:[%s2005 + $0xf0] sm:$0xff]
    %v2037 = vld [vmem:[%s2005 + $0xf8] sm:$0xff]
    %v2038 = vld [vmem:[%s2005 + $0x100] sm:$0xff]
    %v2039 = vld [vmem:[%s2005 + $0x108] sm:$0xff]
    %v2040 = vld [vmem:[%s2005 + $0x110] sm:$0xff]
    %v2041 = vld [vmem:[%s2005 + $0x118] sm:$0xff]
    %v2042 = vld [vmem:[%s2005 + $0x120] sm:$0xff]
    %v2043 = vld [vmem:[%s2005 + $0x128] sm:$0xff]
    %v2044 = vld [vmem:[%s2005 + $0x130] sm:$0xff]
    %v2045 = vld [vmem:[%s2005 + $0x138] sm:$0xff]
    %v2046 = vld [vmem:[%s2005 + $0x140] sm:$0xff]
    %v2047 = vld [vmem:[%s2005 + $0x148] sm:$0xff]
    %v2048 = vld [vmem:[%s2005 + $0x150] sm:$0xff]
    %v2049 = vld [vmem:[%s2005 + $0x158] sm:$0xff]
    %v2050 = vld [vmem:[%s2005 + $0x160] sm:$0xff]
    %v2051 = vld [vmem:[%s2005 + $0x168] sm:$0xff]
    %v2052 = vld [vmem:[%s2005 + $0x170] sm:$0xff]
    %v2053 = vld [vmem:[%s2005 + $0x178] sm:$0xff]
    %v2054 = vld [vmem:[%s2005 + $0x180] sm:$0xff]
    %v2055 = vld [vmem:[%s2005 + $0x188] sm:$0xff]
    %v2056 = vld [vmem:[%s2005 + $0x190] sm:$0xff]
    %v2057 = vld [vmem:[%s2005 + $0x198] sm:$0xff]
    %v2058 = vld [vmem:[%s2005 + $0x1a0] sm:$0xff]
    %v2059 = vld [vmem:[%s2005 + $0x1a8] sm:$0xff]
    %v2060 = vld [vmem:[%s2005 + $0x1b0] sm:$0xff]
    %v2061 = vld [vmem:[%s2005 + $0x1b8] sm:$0xff]
    %v2062 = vld [vmem:[%s2005 + $0x1c0] sm:$0xff]
    %v2063 = vld [vmem:[%s2005 + $0x1c8] sm:$0xff]
    %v2064 = vld [vmem:[%s2005 + $0x1d0] sm:$0xff]
    %v2065 = vld [vmem:[%s2005 + $0x1d8] sm:$0xff]
    %v2066 = vld [vmem:[%s2005 + $0x1e0] sm:$0xff]
    %v2067 = vld [vmem:[%s2005 + $0x1e8] sm:$0xff]
    %v2068 = vld [vmem:[%s2005 + $0x1f0] sm:$0xff]
    %v2069 = vld [vmem:[%s2005 + $0x1f8] sm:$0xff]
    %s2070 = scalar_lea.vmem %s3, 4
    %v2071 = vld [vmem:[%s2070] sm:$0xf]
    %v2073 = vlaneseq
    %v2074 = vshrl.u32 %v2073, 7
    %v2075 = vsub.s32 0, %v2074
    %v2076 = vrot.slane %v2071, %v2075
    %v2077 = vlaneseq
    %v2078 = vshrl.u32 %v2077, 7
    %v2079 = vsub.s32 1, %v2078
    %v2080 = vrot.slane %v2071, %v2079
    %v2081 = vlaneseq
    %v2082 = vshrl.u32 %v2081, 7
    %v2083 = vsub.s32 2, %v2082
    %v2084 = vrot.slane %v2071, %v2083
    %v2085 = vlaneseq
    %v2086 = vshrl.u32 %v2085, 7
    %v2087 = vsub.s32 3, %v2086
    %v2088 = vrot.slane %v2071, %v2087
    %2093 = vmatprep.subr.mxu0 %v2067
    %2094 = vmatpush1.msra.mxu0 %v2066
    %2095 = vmatprep.subr.mxu0 %v2063
    %2096 = vmatpush1.msra.mxu0 %v2062
    %2097 = vmatprep.subr.mxu0 %v2059
    %2098 = vmatpush1.msra.mxu0 %v2058
    %2099 = vmatprep.subr.mxu0 %v2055
    %2100 = vmatpush1.msra.mxu0 %v2054
    %2101 = vmatprep.subr.mxu0 %v2051
    %2102 = vmatpush1.msra.mxu0 %v2050
    %2103 = vmatprep.subr.mxu0 %v2047
    %2104 = vmatpush1.msra.mxu0 %v2046
    %2105 = vmatprep.subr.mxu0 %v2043
    %2106 = vmatpush1.msra.mxu0 %v2042
    %2107 = vmatprep.subr.mxu0 %v2039
    %2108 = vmatpush1.msra.mxu0 %v2038
    %2109 = vmatprep.subr.mxu0 %v2035
    %2110 = vmatpush1.msra.mxu0 %v2034
    %2111 = vmatprep.subr.mxu0 %v2031
    %2112 = vmatpush1.msra.mxu0 %v2030
    %2113 = vmatprep.subr.mxu0 %v2027
    %2114 = vmatpush1.msra.mxu0 %v2026
    %2115 = vmatprep.subr.mxu0 %v2023
    %2116 = vmatpush1.msra.mxu0 %v2022
    %2117 = vmatprep.subr.mxu0 %v2019
    %2118 = vmatpush1.msra.mxu0 %v2018
    %2119 = vmatprep.subr.mxu0 %v2015
    %2120 = vmatpush1.msra.mxu0 %v2014
    %2121 = vmatprep.subr.mxu0 %v2011
    %2122 = vmatpush1.msra.mxu0 %v2010
    %2123 = vmatprep.subr.mxu0 %v2007
    %2124 = vmatpush1.msra.mxu0 %v2006
    %2125 = vmatprep.subr.mxu0 0.0
    %2126 = vmatpush2.msra.mxu0 0.0
    %2127 = vmatprep.subr.mxu0 0.0
    %2128 = vmatpush2.msra.mxu0 0.0
    %2129 = vmatprep.subr.mxu0 0.0
    %2130 = vmatpush2.msra.mxu0 0.0
    %2131 = vmatprep.subr.mxu0 0.0
    %2132 = vmatpush2.msra.mxu0 0.0
    %2133 = vmatprep.subr.mxu0 0.0
    %2134 = vmatpush2.msra.mxu0 0.0
    %2135 = vmatprep.subr.mxu0 0.0
    %2136 = vmatpush2.msra.mxu0 0.0
    %2137 = vmatprep.subr.mxu0 0.0
    %2138 = vmatpush2.msra.mxu0 0.0
    %2139 = vmatprep.subr.mxu0 0.0
    %2140 = vmatpush2.msra.mxu0 0.0
    %2141 = vmatprep.subr.mxu0 0.0
    %2142 = vmatpush2.msra.mxu0 0.0
    %2143 = vmatprep.subr.mxu0 0.0
    %2144 = vmatpush2.msra.mxu0 0.0
    %2145 = vmatprep.subr.mxu0 0.0
    %2146 = vmatpush2.msra.mxu0 0.0
    %2147 = vmatprep.subr.mxu0 0.0
    %2148 = vmatpush2.msra.mxu0 0.0
    %2149 = vmatprep.subr.mxu0 0.0
    %2150 = vmatpush2.msra.mxu0 0.0
    %2151 = vmatprep.subr.mxu0 0.0
    %2152 = vmatpush2.msra.mxu0 0.0
    %2153 = vmatprep.subr.mxu0 0.0
    %2154 = vmatpush2.msra.mxu0 0.0
    %2155 = vmatprep.subr.mxu0 0.0
    %2156 = vmatpush2.msra.mxu0 0.0
    %2157 = vmatprep.mubr.f32.mxu0 0.0
    %2158 = vmatmul.mubr.f32.gmra.mxu0 %v1997
    %v2159 = vpop.f32.mrf.mxu0
    %v2160 = vadd.f32 %v2076, %v2159
    %v2161 = vpop.f32.mrf.mxu0
    %v2162 = vadd.f32 %v2080, %v2161
    %2163 = vmatprep.mubr.f32.mxu0 0.0
    %2164 = vmatmul.mubr.f32.gmra.mxu0 %v1998
    %v2165 = vpop.f32.mrf.mxu0
    %v2166 = vadd.f32 %v2076, %v2165
    %v2167 = vpop.f32.mrf.mxu0
    %v2168 = vadd.f32 %v2080, %v2167
    %2169 = vmatprep.mubr.f32.mxu0 0.0
    %2170 = vmatmul.mubr.f32.gmra.mxu0 %v1999
    %v2171 = vpop.f32.mrf.mxu0
    %v2172 = vadd.f32 %v2076, %v2171
    %v2173 = vpop.f32.mrf.mxu0
    %v2174 = vadd.f32 %v2080, %v2173
    %2175 = vmatprep.mubr.f32.mxu0 0.0
    %2176 = vmatmul.mubr.f32.gmra.mxu0 %v2000
    %v2177 = vpop.f32.mrf.mxu0
    %v2178 = vadd.f32 %v2076, %v2177
    %v2179 = vpop.f32.mrf.mxu0
    %v2180 = vadd.f32 %v2080, %v2179
    %2181 = vmatprep.mubr.f32.mxu0 0.0
    %2182 = vmatmul.mubr.f32.gmra.mxu0 %v2001
    %v2183 = vpop.f32.mrf.mxu0
    %v2184 = vadd.f32 %v2076, %v2183
    %v2185 = vpop.f32.mrf.mxu0
    %v2186 = vadd.f32 %v2080, %v2185
    %2187 = vmatprep.mubr.f32.mxu0 0.0
    %2188 = vmatmul.mubr.f32.gmra.mxu0 %v2002
    %v2189 = vpop.f32.mrf.mxu0
    %v2190 = vadd.f32 %v2076, %v2189
    %v2191 = vpop.f32.mrf.mxu0
    %v2192 = vadd.f32 %v2080, %v2191
    %2193 = vmatprep.mubr.f32.mxu0 0.0
    %2194 = vmatmul.mubr.f32.gmra.mxu0 %v2003
    %v2195 = vpop.f32.mrf.mxu0
    %v2196 = vadd.f32 %v2076, %v2195
    %v2197 = vpop.f32.mrf.mxu0
    %v2198 = vadd.f32 %v2080, %v2197
    %2199 = vmatprep.mubr.f32.mxu0 0.0
    %2200 = vmatmul.mubr.f32.gmra.mxu0 %v2004
    %v2201 = vpop.f32.mrf.mxu0
    %v2202 = vadd.f32 %v2076, %v2201
    %v2203 = vpop.f32.mrf.mxu0
    %v2204 = vadd.f32 %v2080, %v2203
    %2205 = vdwg.mxu0
    %2206 = vmatprep.subr.mxu0 %v2069
    %2207 = vmatpush1.msra.mxu0 %v2068
    %2208 = vmatprep.subr.mxu0 %v2065
    %2209 = vmatpush1.msra.mxu0 %v2064
    %2210 = vmatprep.subr.mxu0 %v2061
    %2211 = vmatpush1.msra.mxu0 %v2060
    %2212 = vmatprep.subr.mxu0 %v2057
    %2213 = vmatpush1.msra.mxu0 %v2056
    %2214 = vmatprep.subr.mxu0 %v2053
    %2215 = vmatpush1.msra.mxu0 %v2052
    %2216 = vmatprep.subr.mxu0 %v2049
    %2217 = vmatpush1.msra.mxu0 %v2048
    %2218 = vmatprep.subr.mxu0 %v2045
    %2219 = vmatpush1.msra.mxu0 %v2044
    %2220 = vmatprep.subr.mxu0 %v2041
    %2221 = vmatpush1.msra.mxu0 %v2040
    %2222 = vmatprep.subr.mxu0 %v2037
    %2223 = vmatpush1.msra.mxu0 %v2036
    %2224 = vmatprep.subr.mxu0 %v2033
    %2225 = vmatpush1.msra.mxu0 %v2032
    %2226 = vmatprep.subr.mxu0 %v2029
    %2227 = vmatpush1.msra.mxu0 %v2028
    %2228 = vmatprep.subr.mxu0 %v2025
    %2229 = vmatpush1.msra.mxu0 %v2024
    %2230 = vmatprep.subr.mxu0 %v2021
    %2231 = vmatpush1.msra.mxu0 %v2020
    %2232 = vmatprep.subr.mxu0 %v2017
    %2233 = vmatpush1.msra.mxu0 %v2016
    %2234 = vmatprep.subr.mxu0 %v2013
    %2235 = vmatpush1.msra.mxu0 %v2012
    %2236 = vmatprep.subr.mxu0 %v2009
    %2237 = vmatpush1.msra.mxu0 %v2008
    %2238 = vmatprep.subr.mxu0 0.0
    %2239 = vmatpush2.msra.mxu0 0.0
    %2240 = vmatprep.subr.mxu0 0.0
    %2241 = vmatpush2.msra.mxu0 0.0
    %2242 = vmatprep.subr.mxu0 0.0
    %2243 = vmatpush2.msra.mxu0 0.0
    %2244 = vmatprep.subr.mxu0 0.0
    %2245 = vmatpush2.msra.mxu0 0.0
    %2246 = vmatprep.subr.mxu0 0.0
    %2247 = vmatpush2.msra.mxu0 0.0
    %2248 = vmatprep.subr.mxu0 0.0
    %2249 = vmatpush2.msra.mxu0 0.0
    %2250 = vmatprep.subr.mxu0 0.0
    %2251 = vmatpush2.msra.mxu0 0.0
    %2252 = vmatprep.subr.mxu0 0.0
    %2253 = vmatpush2.msra.mxu0 0.0
    %2254 = vmatprep.subr.mxu0 0.0
    %2255 = vmatpush2.msra.mxu0 0.0
    %2256 = vmatprep.subr.mxu0 0.0
    %2257 = vmatpush2.msra.mxu0 0.0
    %2258 = vmatprep.subr.mxu0 0.0
    %2259 = vmatpush2.msra.mxu0 0.0
    %2260 = vmatprep.subr.mxu0 0.0
    %2261 = vmatpush2.msra.mxu0 0.0
    %2262 = vmatprep.subr.mxu0 0.0
    %2263 = vmatpush2.msra.mxu0 0.0
    %2264 = vmatprep.subr.mxu0 0.0
    %2265 = vmatpush2.msra.mxu0 0.0
    %2266 = vmatprep.subr.mxu0 0.0
    %2267 = vmatpush2.msra.mxu0 0.0
    %2268 = vmatprep.subr.mxu0 0.0
    %2269 = vmatpush2.msra.mxu0 0.0
    %2270 = vmatprep.mubr.f32.mxu0 0.0
    %2271 = vmatmul.mubr.f32.gmra.mxu0 %v1997
    %v2272 = vpop.f32.mrf.mxu0
    %v2273 = vadd.f32 %v2084, %v2272
    %v2274 = vpop.f32.mrf.mxu0
    %v2275 = vadd.f32 %v2088, %v2274
    %2276 = vmatprep.mubr.f32.mxu0 0.0
    %2277 = vmatmul.mubr.f32.gmra.mxu0 %v1998
    %v2278 = vpop.f32.mrf.mxu0
    %v2279 = vadd.f32 %v2084, %v2278
    %v2280 = vpop.f32.mrf.mxu0
    %v2281 = vadd.f32 %v2088, %v2280
    %2282 = vmatprep.mubr.f32.mxu0 0.0
    %2283 = vmatmul.mubr.f32.gmra.mxu0 %v1999
    %v2284 = vpop.f32.mrf.mxu0
    %v2285 = vadd.f32 %v2084, %v2284
    %v2286 = vpop.f32.mrf.mxu0
    %v2287 = vadd.f32 %v2088, %v2286
    %2288 = vmatprep.mubr.f32.mxu0 0.0
    %2289 = vmatmul.mubr.f32.gmra.mxu0 %v2000
    %v2290 = vpop.f32.mrf.mxu0
    %v2291 = vadd.f32 %v2084, %v2290
    %v2292 = vpop.f32.mrf.mxu0
    %v2293 = vadd.f32 %v2088, %v2292
    %2294 = vmatprep.mubr.f32.mxu0 0.0
    %2295 = vmatmul.mubr.f32.gmra.mxu0 %v2001
    %v2296 = vpop.f32.mrf.mxu0
    %v2297 = vadd.f32 %v2084, %v2296
    %v2298 = vpop.f32.mrf.mxu0
    %v2299 = vadd.f32 %v2088, %v2298
    %2300 = vmatprep.mubr.f32.mxu0 0.0
    %2301 = vmatmul.mubr.f32.gmra.mxu0 %v2002
    %v2302 = vpop.f32.mrf.mxu0
    %v2303 = vadd.f32 %v2084, %v2302
    %v2304 = vpop.f32.mrf.mxu0
    %v2305 = vadd.f32 %v2088, %v2304
    %2306 = vmatprep.mubr.f32.mxu0 0.0
    %2307 = vmatmul.mubr.f32.gmra.mxu0 %v2003
    %v2308 = vpop.f32.mrf.mxu0
    %v2309 = vadd.f32 %v2084, %v2308
    %v2310 = vpop.f32.mrf.mxu0
    %v2311 = vadd.f32 %v2088, %v2310
    %2312 = vmatprep.mubr.f32.mxu0 0.0
    %2313 = vmatmul.mubr.f32.gmra.mxu0 %v2004
    %v2314 = vpop.f32.mrf.mxu0
    %v2315 = vadd.f32 %v2084, %v2314
    %v2316 = vpop.f32.mrf.mxu0
    %v2317 = vadd.f32 %v2088, %v2316
    %2318 = vdwg.mxu0
    %2319 = vst [vmem:[#allocation3] sm:$0xff] %v2160
    %2320 = vst [vmem:[#allocation3 + $0x8] sm:$0xff] %v2162
    %2321 = vst [vmem:[#allocation3 + $0x10] sm:$0xff] %v2273
    %2322 = vst [vmem:[#allocation3 + $0x18] sm:$0xff] %v2275
    %2323 = vst [vmem:[#allocation3 + $0x20] sm:$0xff] %v2166
    %2324 = vst [vmem:[#allocation3 + $0x28] sm:$0xff] %v2168
    %2325 = vst [vmem:[#allocation3 + $0x30] sm:$0xff] %v2279
    %2326 = vst [vmem:[#allocation3 + $0x38] sm:$0xff] %v2281
    %2327 = vst [vmem:[#allocation3 + $0x40] sm:$0xff] %v2172
    %2328 = vst [vmem:[#allocation3 + $0x48] sm:$0xff] %v2174
    %2329 = vst [vmem:[#allocation3 + $0x50] sm:$0xff] %v2285
    %2330 = vst [vmem:[#allocation3 + $0x58] sm:$0xff] %v2287
    %2331 = vst [vmem:[#allocation3 + $0x60] sm:$0xff] %v2178
    %2332 = vst [vmem:[#allocation3 + $0x68] sm:$0xff] %v2180
    %2333 = vst [vmem:[#allocation3 + $0x70] sm:$0xff] %v2291
    %2334 = vst [vmem:[#allocation3 + $0x78] sm:$0xff] %v2293
    %2335 = vst [vmem:[#allocation3 + $0x80] sm:$0xff] %v2184
    %2336 = vst [vmem:[#allocation3 + $0x88] sm:$0xff] %v2186
    %2337 = vst [vmem:[#allocation3 + $0x90] sm:$0xff] %v2297
    %2338 = vst [vmem:[#allocation3 + $0x98] sm:$0xff] %v2299
    %2339 = vst [vmem:[#allocation3 + $0xa0] sm:$0xff] %v2190
    %2340 = vst [vmem:[#allocation3 + $0xa8] sm:$0xff] %v2192
    %2341 = vst [vmem:[#allocation3 + $0xb0] sm:$0xff] %v2303
    %2342 = vst [vmem:[#allocation3 + $0xb8] sm:$0xff] %v2305
    %2343 = vst [vmem:[#allocation3 + $0xc0] sm:$0xff] %v2196
    %2344 = vst [vmem:[#allocation3 + $0xc8] sm:$0xff] %v2198
    %2345 = vst [vmem:[#allocation3 + $0xd0] sm:$0xff] %v2309
    %2346 = vst [vmem:[#allocation3 + $0xd8] sm:$0xff] %v2311
    %2347 = vst [vmem:[#allocation3 + $0xe0] sm:$0xff] %v2202
    %2348 = vst [vmem:[#allocation3 + $0xe8] sm:$0xff] %v2204
    %2349 = vst [vmem:[#allocation3 + $0xf0] sm:$0xff] %v2315
    %2350 = vst [vmem:[#allocation3 + $0xf8] sm:$0xff] %v2317
    %2351 = vst [vmem:[#allocation4] sm:$0xff] 0.0
    %2352 = vst [vmem:[#allocation5] sm:$0xff] 0.0
    %v2353 = vld [vmem:[#allocation4] sm:$0xff]
    %v2354 = vld [vmem:[%s472] sm:$0xff]
    %v2355 = vld [vmem:[%s472 + $0x8] sm:$0xff]
    %v2356 = vld [vmem:[%s472 + $0x10] sm:$0xff]
    %v2357 = vld [vmem:[%s472 + $0x18] sm:$0xff]
    %2358 = vmatprep.subr.mxu0 %v1994
    %2359 = vmatpush1.msra.mxu0 %v1993
    %2360 = vmatprep.subr.mxu0 %v1990
    %2361 = vmatpush1.msra.mxu0 %v1989
    %2362 = vmatprep.subr.mxu0 %v1986
    %2363 = vmatpush1.msra.mxu0 %v1985
    %2364 = vmatprep.subr.mxu0 %v1982
    %2365 = vmatpush1.msra.mxu0 %v1981
    %2366 = vmatprep.subr.mxu0 %v1978
    %2367 = vmatpush1.msra.mxu0 %v1977
    %2368 = vmatprep.subr.mxu0 %v1974
    %2369 = vmatpush1.msra.mxu0 %v1973
    %2370 = vmatprep.subr.mxu0 %v1970
    %2371 = vmatpush1.msra.mxu0 %v1969
    %2372 = vmatprep.subr.mxu0 %v1966
    %2373 = vmatpush1.msra.mxu0 %v1965
    %2374 = vmatprep.subr.mxu0 %v1962
    %2375 = vmatpush1.msra.mxu0 %v1961
    %2376 = vmatprep.subr.mxu0 %v1958
    %2377 = vmatpush1.msra.mxu0 %v1957
    %2378 = vmatprep.subr.mxu0 %v1954
    %2379 = vmatpush1.msra.mxu0 %v1953
    %2380 = vmatprep.subr.mxu0 %v1950
    %2381 = vmatpush1.msra.mxu0 %v1949
    %2382 = vmatprep.subr.mxu0 %v1946
    %2383 = vmatpush1.msra.mxu0 %v1945
    %2384 = vmatprep.subr.mxu0 %v1942
    %2385 = vmatpush1.msra.mxu0 %v1941
    %2386 = vmatprep.subr.mxu0 %v1938
    %2387 = vmatpush1.msra.mxu0 %v1937
    %2388 = vmatprep.subr.mxu0 %v1934
    %2389 = vmatpush1.msra.mxu0 %v1933
    %2390 = vmatprep.subr.mxu0 0.0
    %2391 = vmatpush2.msra.mxu0 0.0
    %2392 = vmatprep.subr.mxu0 0.0
    %2393 = vmatpush2.msra.mxu0 0.0
    %2394 = vmatprep.subr.mxu0 0.0
    %2395 = vmatpush2.msra.mxu0 0.0
    %2396 = vmatprep.subr.mxu0 0.0
    %2397 = vmatpush2.msra.mxu0 0.0
    %2398 = vmatprep.subr.mxu0 0.0
    %2399 = vmatpush2.msra.mxu0 0.0
    %2400 = vmatprep.subr.mxu0 0.0
    %2401 = vmatpush2.msra.mxu0 0.0
    %2402 = vmatprep.subr.mxu0 0.0
    %2403 = vmatpush2.msra.mxu0 0.0
    %2404 = vmatprep.subr.mxu0 0.0
    %2405 = vmatpush2.msra.mxu0 0.0
    %2406 = vmatprep.subr.mxu0 0.0
    %2407 = vmatpush2.msra.mxu0 0.0
    %2408 = vmatprep.subr.mxu0 0.0
    %2409 = vmatpush2.msra.mxu0 0.0
    %2410 = vmatprep.subr.mxu0 0.0
    %2411 = vmatpush2.msra.mxu0 0.0
    %2412 = vmatprep.subr.mxu0 0.0
    %2413 = vmatpush2.msra.mxu0 0.0
    %2414 = vmatprep.subr.mxu0 0.0
    %2415 = vmatpush2.msra.mxu0 0.0
    %2416 = vmatprep.subr.mxu0 0.0
    %2417 = vmatpush2.msra.mxu0 0.0
    %2418 = vmatprep.subr.mxu0 0.0
    %2419 = vmatpush2.msra.mxu0 0.0
    %2420 = vmatprep.subr.mxu0 0.0
    %2421 = vmatpush2.msra.mxu0 0.0
    %2422 = vmatprep.mubr.f32.mxu0 0.0
    %2423 = vmatmul.mubr.f32.gmra.mxu0 %v2353
    %v2424 = vpop.f32.mrf.mxu0
    %v2425 = vadd.f32 0.0, %v2424
    %v2426 = vpop.f32.mrf.mxu0
    %v2427 = vadd.f32 0.0, %v2426
    %2428 = vdwg.mxu0
    %2429 = vmatprep.subr.mxu0 %v1996
    %2430 = vmatpush1.msra.mxu0 %v1995
    %2431 = vmatprep.subr.mxu0 %v1992
    %2432 = vmatpush1.msra.mxu0 %v1991
    %2433 = vmatprep.subr.mxu0 %v1988
    %2434 = vmatpush1.msra.mxu0 %v1987
    %2435 = vmatprep.subr.mxu0 %v1984
    %2436 = vmatpush1.msra.mxu0 %v1983
    %2437 = vmatprep.subr.mxu0 %v1980
    %2438 = vmatpush1.msra.mxu0 %v1979
    %2439 = vmatprep.subr.mxu0 %v1976
    %2440 = vmatpush1.msra.mxu0 %v1975
    %2441 = vmatprep.subr.mxu0 %v1972
    %2442 = vmatpush1.msra.mxu0 %v1971
    %2443 = vmatprep.subr.mxu0 %v1968
    %2444 = vmatpush1.msra.mxu0 %v1967
    %2445 = vmatprep.subr.mxu0 %v1964
    %2446 = vmatpush1.msra.mxu0 %v1963
    %2447 = vmatprep.subr.mxu0 %v1960
    %2448 = vmatpush1.msra.mxu0 %v1959
    %2449 = vmatprep.subr.mxu0 %v1956
    %2450 = vmatpush1.msra.mxu0 %v1955
    %2451 = vmatprep.subr.mxu0 %v1952
    %2452 = vmatpush1.msra.mxu0 %v1951
    %2453 = vmatprep.subr.mxu0 %v1948
    %2454 = vmatpush1.msra.mxu0 %v1947
    %2455 = vmatprep.subr.mxu0 %v1944
    %2456 = vmatpush1.msra.mxu0 %v1943
    %2457 = vmatprep.subr.mxu0 %v1940
    %2458 = vmatpush1.msra.mxu0 %v1939
    %2459 = vmatprep.subr.mxu0 %v1936
    %2460 = vmatpush1.msra.mxu0 %v1935
    %2461 = vmatprep.subr.mxu0 0.0
    %2462 = vmatpush2.msra.mxu0 0.0
    %2463 = vmatprep.subr.mxu0 0.0
    %2464 = vmatpush2.msra.mxu0 0.0
    %2465 = vmatprep.subr.mxu0 0.0
    %2466 = vmatpush2.msra.mxu0 0.0
    %2467 = vmatprep.subr.mxu0 0.0
    %2468 = vmatpush2.msra.mxu0 0.0
    %2469 = vmatprep.subr.mxu0 0.0
    %2470 = vmatpush2.msra.mxu0 0.0
    %2471 = vmatprep.subr.mxu0 0.0
    %2472 = vmatpush2.msra.mxu0 0.0
    %2473 = vmatprep.subr.mxu0 0.0
    %2474 = vmatpush2.msra.mxu0 0.0
    %2475 = vmatprep.subr.mxu0 0.0
    %2476 = vmatpush2.msra.mxu0 0.0
    %2477 = vmatprep.subr.mxu0 0.0
    %2478 = vmatpush2.msra.mxu0 0.0
    %2479 = vmatprep.subr.mxu0 0.0
    %2480 = vmatpush2.msra.mxu0 0.0
    %2481 = vmatprep.subr.mxu0 0.0
    %2482 = vmatpush2.msra.mxu0 0.0
    %2483 = vmatprep.subr.mxu0 0.0
    %2484 = vmatpush2.msra.mxu0 0.0
    %2485 = vmatprep.subr.mxu0 0.0
    %2486 = vmatpush2.msra.mxu0 0.0
    %2487 = vmatprep.subr.mxu0 0.0
    %2488 = vmatpush2.msra.mxu0 0.0
    %2489 = vmatprep.subr.mxu0 0.0
    %2490 = vmatpush2.msra.mxu0 0.0
    %2491 = vmatprep.subr.mxu0 0.0
    %2492 = vmatpush2.msra.mxu0 0.0
    %2493 = vmatprep.mubr.f32.mxu0 0.0
    %2494 = vmatmul.mubr.f32.gmra.mxu0 %v2353
    %v2495 = vpop.f32.mrf.mxu0
    %v2496 = vadd.f32 0.0, %v2495
    %v2497 = vpop.f32.mrf.mxu0
    %v2498 = vadd.f32 0.0, %v2497
    %2499 = vdwg.mxu0
    %v2500 = vadd.f32 %v2354, %v2425
    %v2501 = vadd.f32 %v2355, %v2427
    %v2502 = vadd.f32 %v2356, %v2496
    %v2503 = vadd.f32 %v2357, %v2498
    %v2504 = vxor.u32 %v2500, 2147483648
    %v2505 = vmul.f32 %v2504, 1.442695
    %v2506 = vpow.pop %v2505
    %v2507 = vadd.f32 %v2506, 1.0
    %v2508 = vrcp.pop %v2507
    %v2509 = vmul.f32 1.0, %v2508
    %v2510 = vxor.u32 %v2501, 2147483648
    %v2511 = vmul.f32 %v2510, 1.442695
    %v2512 = vpow.pop %v2511
    %v2513 = vadd.f32 %v2512, 1.0
    %v2514 = vrcp.pop %v2513
    %v2515 = vmul.f32 1.0, %v2514
    %v2516 = vtanh.pop %v2502
    %v2517 = vxor.u32 %v2503, 2147483648
    %v2518 = vmul.f32 %v2517, 1.442695
    %v2519 = vpow.pop %v2518
    %v2520 = vadd.f32 %v2519, 1.0
    %v2521 = vrcp.pop %v2520
    %v2522 = vmul.f32 1.0, %v2521
    %v2523 = vld [vmem:[#allocation5] sm:$0xff]
    %v2524 = vmul.f32 %v2515, %v2523
    %v2525 = vmul.f32 %v2509, %v2516
    %v2526 = vadd.f32 %v2524, %v2525
    %v2527 = vtanh.pop %v2526
    %v2528 = vmul.f32 %v2522, %v2527
    %2529 = vst [vmem:[#allocation4] sm:$0xff] %v2528
    %2530 = vst [vmem:[#allocation5] sm:$0xff] %v2526
    %v2531 = vld [vmem:[#allocation4] sm:$0xff]
    %v2532 = vld [vmem:[%s654] sm:$0xff]
    %v2533 = vld [vmem:[%s654 + $0x8] sm:$0xff]
    %v2534 = vld [vmem:[%s654 + $0x10] sm:$0xff]
    %v2535 = vld [vmem:[%s654 + $0x18] sm:$0xff]
    %2536 = vmatprep.subr.mxu0 %v1994
    %2537 = vmatpush1.msra.mxu0 %v1993
    %2538 = vmatprep.subr.mxu0 %v1990
    %2539 = vmatpush1.msra.mxu0 %v1989
    %2540 = vmatprep.subr.mxu0 %v1986
    %2541 = vmatpush1.msra.mxu0 %v1985
    %2542 = vmatprep.subr.mxu0 %v1982
    %2543 = vmatpush1.msra.mxu0 %v1981
    %2544 = vmatprep.subr.mxu0 %v1978
    %2545 = vmatpush1.msra.mxu0 %v1977
    %2546 = vmatprep.subr.mxu0 %v1974
    %2547 = vmatpush1.msra.mxu0 %v1973
    %2548 = vmatprep.subr.mxu0 %v1970
    %2549 = vmatpush1.msra.mxu0 %v1969
    %2550 = vmatprep.subr.mxu0 %v1966
    %2551 = vmatpush1.msra.mxu0 %v1965
    %2552 = vmatprep.subr.mxu0 %v1962
    %2553 = vmatpush1.msra.mxu0 %v1961
    %2554 = vmatprep.subr.mxu0 %v1958
    %2555 = vmatpush1.msra.mxu0 %v1957
    %2556 = vmatprep.subr.mxu0 %v1954
    %2557 = vmatpush1.msra.mxu0 %v1953
    %2558 = vmatprep.subr.mxu0 %v1950
    %2559 = vmatpush1.msra.mxu0 %v1949
    %2560 = vmatprep.subr.mxu0 %v1946
    %2561 = vmatpush1.msra.mxu0 %v1945
    %2562 = vmatprep.subr.mxu0 %v1942
    %2563 = vmatpush1.msra.mxu0 %v1941
    %2564 = vmatprep.subr.mxu0 %v1938
    %2565 = vmatpush1.msra.mxu0 %v1937
    %2566 = vmatprep.subr.mxu0 %v1934
    %2567 = vmatpush1.msra.mxu0 %v1933
    %2568 = vmatprep.subr.mxu0 0.0
    %2569 = vmatpush2.msra.mxu0 0.0
    %2570 = vmatprep.subr.mxu0 0.0
    %2571 = vmatpush2.msra.mxu0 0.0
    %2572 = vmatprep.subr.mxu0 0.0
    %2573 = vmatpush2.msra.mxu0 0.0
    %2574 = vmatprep.subr.mxu0 0.0
    %2575 = vmatpush2.msra.mxu0 0.0
    %2576 = vmatprep.subr.mxu0 0.0
    %2577 = vmatpush2.msra.mxu0 0.0
    %2578 = vmatprep.subr.mxu0 0.0
    %2579 = vmatpush2.msra.mxu0 0.0
    %2580 = vmatprep.subr.mxu0 0.0
    %2581 = vmatpush2.msra.mxu0 0.0
    %2582 = vmatprep.subr.mxu0 0.0
    %2583 = vmatpush2.msra.mxu0 0.0
    %2584 = vmatprep.subr.mxu0 0.0
    %2585 = vmatpush2.msra.mxu0 0.0
    %2586 = vmatprep.subr.mxu0 0.0
    %2587 = vmatpush2.msra.mxu0 0.0
    %2588 = vmatprep.subr.mxu0 0.0
    %2589 = vmatpush2.msra.mxu0 0.0
    %2590 = vmatprep.subr.mxu0 0.0
    %2591 = vmatpush2.msra.mxu0 0.0
    %2592 = vmatprep.subr.mxu0 0.0
    %2593 = vmatpush2.msra.mxu0 0.0
    %2594 = vmatprep.subr.mxu0 0.0
    %2595 = vmatpush2.msra.mxu0 0.0
    %2596 = vmatprep.subr.mxu0 0.0
    %2597 = vmatpush2.msra.mxu0 0.0
    %2598 = vmatprep.subr.mxu0 0.0
    %2599 = vmatpush2.msra.mxu0 0.0
    %2600 = vmatprep.mubr.f32.mxu0 0.0
    %2601 = vmatmul.mubr.f32.gmra.mxu0 %v2531
    %v2602 = vpop.f32.mrf.mxu0
    %v2603 = vadd.f32 0.0, %v2602
    %v2604 = vpop.f32.mrf.mxu0
    %v2605 = vadd.f32 0.0, %v2604
    %2606 = vdwg.mxu0
    %2607 = vmatprep.subr.mxu0 %v1996
    %2608 = vmatpush1.msra.mxu0 %v1995
    %2609 = vmatprep.subr.mxu0 %v1992
    %2610 = vmatpush1.msra.mxu0 %v1991
    %2611 = vmatprep.subr.mxu0 %v1988
    %2612 = vmatpush1.msra.mxu0 %v1987
    %2613 = vmatprep.subr.mxu0 %v1984
    %2614 = vmatpush1.msra.mxu0 %v1983
    %2615 = vmatprep.subr.mxu0 %v1980
    %2616 = vmatpush1.msra.mxu0 %v1979
    %2617 = vmatprep.subr.mxu0 %v1976
    %2618 = vmatpush1.msra.mxu0 %v1975
    %2619 = vmatprep.subr.mxu0 %v1972
    %2620 = vmatpush1.msra.mxu0 %v1971
    %2621 = vmatprep.subr.mxu0 %v1968
    %2622 = vmatpush1.msra.mxu0 %v1967
    %2623 = vmatprep.subr.mxu0 %v1964
    %2624 = vmatpush1.msra.mxu0 %v1963
    %2625 = vmatprep.subr.mxu0 %v1960
    %2626 = vmatpush1.msra.mxu0 %v1959
    %2627 = vmatprep.subr.mxu0 %v1956
    %2628 = vmatpush1.msra.mxu0 %v1955
    %2629 = vmatprep.subr.mxu0 %v1952
    %2630 = vmatpush1.msra.mxu0 %v1951
    %2631 = vmatprep.subr.mxu0 %v1948
    %2632 = vmatpush1.msra.mxu0 %v1947
    %2633 = vmatprep.subr.mxu0 %v1944
    %2634 = vmatpush1.msra.mxu0 %v1943
    %2635 = vmatprep.subr.mxu0 %v1940
    %2636 = vmatpush1.msra.mxu0 %v1939
    %2637 = vmatprep.subr.mxu0 %v1936
    %2638 = vmatpush1.msra.mxu0 %v1935
    %2639 = vmatprep.subr.mxu0 0.0
    %2640 = vmatpush2.msra.mxu0 0.0
    %2641 = vmatprep.subr.mxu0 0.0
    %2642 = vmatpush2.msra.mxu0 0.0
    %2643 = vmatprep.subr.mxu0 0.0
    %2644 = vmatpush2.msra.mxu0 0.0
    %2645 = vmatprep.subr.mxu0 0.0
    %2646 = vmatpush2.msra.mxu0 0.0
    %2647 = vmatprep.subr.mxu0 0.0
    %2648 = vmatpush2.msra.mxu0 0.0
    %2649 = vmatprep.subr.mxu0 0.0
    %2650 = vmatpush2.msra.mxu0 0.0
    %2651 = vmatprep.subr.mxu0 0.0
    %2652 = vmatpush2.msra.mxu0 0.0
    %2653 = vmatprep.subr.mxu0 0.0
    %2654 = vmatpush2.msra.mxu0 0.0
    %2655 = vmatprep.subr.mxu0 0.0
    %2656 = vmatpush2.msra.mxu0 0.0
    %2657 = vmatprep.subr.mxu0 0.0
    %2658 = vmatpush2.msra.mxu0 0.0
    %2659 = vmatprep.subr.mxu0 0.0
    %2660 = vmatpush2.msra.mxu0 0.0
    %2661 = vmatprep.subr.mxu0 0.0
    %2662 = vmatpush2.msra.mxu0 0.0
    %2663 = vmatprep.subr.mxu0 0.0
    %2664 = vmatpush2.msra.mxu0 0.0
    %2665 = vmatprep.subr.mxu0 0.0
    %2666 = vmatpush2.msra.mxu0 0.0
    %2667 = vmatprep.subr.mxu0 0.0
    %2668 = vmatpush2.msra.mxu0 0.0
    %2669 = vmatprep.subr.mxu0 0.0
    %2670 = vmatpush2.msra.mxu0 0.0
    %2671 = vmatprep.mubr.f32.mxu0 0.0
    %2672 = vmatmul.mubr.f32.gmra.mxu0 %v2531
    %v2673 = vpop.f32.mrf.mxu0
    %v2674 = vadd.f32 0.0, %v2673
    %v2675 = vpop.f32.mrf.mxu0
    %v2676 = vadd.f32 0.0, %v2675
    %2677 = vdwg.mxu0
    %v2678 = vadd.f32 %v2532, %v2603
    %v2679 = vadd.f32 %v2533, %v2605
    %v2680 = vadd.f32 %v2534, %v2674
    %v2681 = vadd.f32 %v2535, %v2676
    %v2682 = vxor.u32 %v2678, 2147483648
    %v2683 = vmul.f32 %v2682, 1.442695
    %v2684 = vpow.pop %v2683
    %v2685 = vadd.f32 %v2684, 1.0
    %v2686 = vrcp.pop %v2685
    %v2687 = vmul.f32 1.0, %v2686
    %v2688 = vxor.u32 %v2679, 2147483648
    %v2689 = vmul.f32 %v2688, 1.442695
    %v2690 = vpow.pop %v2689
    %v2691 = vadd.f32 %v2690, 1.0
    %v2692 = vrcp.pop %v2691
    %v2693 = vmul.f32 1.0, %v2692
    %v2694 = vtanh.pop %v2680
    %v2695 = vxor.u32 %v2681, 2147483648
    %v2696 = vmul.f32 %v2695, 1.442695
    %v2697 = vpow.pop %v2696
    %v2698 = vadd.f32 %v2697, 1.0
    %v2699 = vrcp.pop %v2698
    %v2700 = vmul.f32 1.0, %v2699
    %v2701 = vld [vmem:[#allocation5] sm:$0xff]
    %v2702 = vmul.f32 %v2693, %v2701
    %v2703 = vmul.f32 %v2687, %v2694
    %v2704 = vadd.f32 %v2702, %v2703
    %v2705 = vtanh.pop %v2704
    %v2706 = vmul.f32 %v2700, %v2705
    %2707 = vst [vmem:[#allocation4] sm:$0xff] %v2706
    %2708 = vst [vmem:[#allocation5] sm:$0xff] %v2704
    %v2709 = vld [vmem:[#allocation4] sm:$0xff]
    %v2710 = vld [vmem:[%s837] sm:$0xff]
    %v2711 = vld [vmem:[%s837 + $0x8] sm:$0xff]
    %v2712 = vld [vmem:[%s837 + $0x10] sm:$0xff]
    %v2713 = vld [vmem:[%s837 + $0x18] sm:$0xff]
    %2714 = vmatprep.subr.mxu0 %v1994
    %2715 = vmatpush1.msra.mxu0 %v1993
    %2716 = vmatprep.subr.mxu0 %v1990
    %2717 = vmatpush1.msra.mxu0 %v1989
    %2718 = vmatprep.subr.mxu0 %v1986
    %2719 = vmatpush1.msra.mxu0 %v1985
    %2720 = vmatprep.subr.mxu0 %v1982
    %2721 = vmatpush1.msra.mxu0 %v1981
    %2722 = vmatprep.subr.mxu0 %v1978
    %2723 = vmatpush1.msra.mxu0 %v1977
    %2724 = vmatprep.subr.mxu0 %v1974
    %2725 = vmatpush1.msra.mxu0 %v1973
    %2726 = vmatprep.subr.mxu0 %v1970
    %2727 = vmatpush1.msra.mxu0 %v1969
    %2728 = vmatprep.subr.mxu0 %v1966
    %2729 = vmatpush1.msra.mxu0 %v1965
    %2730 = vmatprep.subr.mxu0 %v1962
    %2731 = vmatpush1.msra.mxu0 %v1961
    %2732 = vmatprep.subr.mxu0 %v1958
    %2733 = vmatpush1.msra.mxu0 %v1957
    %2734 = vmatprep.subr.mxu0 %v1954
    %2735 = vmatpush1.msra.mxu0 %v1953
    %2736 = vmatprep.subr.mxu0 %v1950
    %2737 = vmatpush1.msra.mxu0 %v1949
    %2738 = vmatprep.subr.mxu0 %v1946
    %2739 = vmatpush1.msra.mxu0 %v1945
    %2740 = vmatprep.subr.mxu0 %v1942
    %2741 = vmatpush1.msra.mxu0 %v1941
    %2742 = vmatprep.subr.mxu0 %v1938
    %2743 = vmatpush1.msra.mxu0 %v1937
    %2744 = vmatprep.subr.mxu0 %v1934
    %2745 = vmatpush1.msra.mxu0 %v1933
    %2746 = vmatprep.subr.mxu0 0.0
    %2747 = vmatpush2.msra.mxu0 0.0
    %2748 = vmatprep.subr.mxu0 0.0
    %2749 = vmatpush2.msra.mxu0 0.0
    %2750 = vmatprep.subr.mxu0 0.0
    %2751 = vmatpush2.msra.mxu0 0.0
    %2752 = vmatprep.subr.mxu0 0.0
    %2753 = vmatpush2.msra.mxu0 0.0
    %2754 = vmatprep.subr.mxu0 0.0
    %2755 = vmatpush2.msra.mxu0 0.0
    %2756 = vmatprep.subr.mxu0 0.0
    %2757 = vmatpush2.msra.mxu0 0.0
    %2758 = vmatprep.subr.mxu0 0.0
    %2759 = vmatpush2.msra.mxu0 0.0
    %2760 = vmatprep.subr.mxu0 0.0
    %2761 = vmatpush2.msra.mxu0 0.0
    %2762 = vmatprep.subr.mxu0 0.0
    %2763 = vmatpush2.msra.mxu0 0.0
    %2764 = vmatprep.subr.mxu0 0.0
    %2765 = vmatpush2.msra.mxu0 0.0
    %2766 = vmatprep.subr.mxu0 0.0
    %2767 = vmatpush2.msra.mxu0 0.0
    %2768 = vmatprep.subr.mxu0 0.0
    %2769 = vmatpush2.msra.mxu0 0.0
    %2770 = vmatprep.subr.mxu0 0.0
    %2771 = vmatpush2.msra.mxu0 0.0
    %2772 = vmatprep.subr.mxu0 0.0
    %2773 = vmatpush2.msra.mxu0 0.0
    %2774 = vmatprep.subr.mxu0 0.0
    %2775 = vmatpush2.msra.mxu0 0.0
    %2776 = vmatprep.subr.mxu0 0.0
    %2777 = vmatpush2.msra.mxu0 0.0
    %2778 = vmatprep.mubr.f32.mxu0 0.0
    %2779 = vmatmul.mubr.f32.gmra.mxu0 %v2709
    %v2780 = vpop.f32.mrf.mxu0
    %v2781 = vadd.f32 0.0, %v2780
    %v2782 = vpop.f32.mrf.mxu0
    %v2783 = vadd.f32 0.0, %v2782
    %2784 = vdwg.mxu0
    %2785 = vmatprep.subr.mxu0 %v1996
    %2786 = vmatpush1.msra.mxu0 %v1995
    %2787 = vmatprep.subr.mxu0 %v1992
    %2788 = vmatpush1.msra.mxu0 %v1991
    %2789 = vmatprep.subr.mxu0 %v1988
    %2790 = vmatpush1.msra.mxu0 %v1987
    %2791 = vmatprep.subr.mxu0 %v1984
    %2792 = vmatpush1.msra.mxu0 %v1983
    %2793 = vmatprep.subr.mxu0 %v1980
    %2794 = vmatpush1.msra.mxu0 %v1979
    %2795 = vmatprep.subr.mxu0 %v1976
    %2796 = vmatpush1.msra.mxu0 %v1975
    %2797 = vmatprep.subr.mxu0 %v1972
    %2798 = vmatpush1.msra.mxu0 %v1971
    %2799 = vmatprep.subr.mxu0 %v1968
    %2800 = vmatpush1.msra.mxu0 %v1967
    %2801 = vmatprep.subr.mxu0 %v1964
    %2802 = vmatpush1.msra.mxu0 %v1963
    %2803 = vmatprep.subr.mxu0 %v1960
    %2804 = vmatpush1.msra.mxu0 %v1959
    %2805 = vmatprep.subr.mxu0 %v1956
    %2806 = vmatpush1.msra.mxu0 %v1955
    %2807 = vmatprep.subr.mxu0 %v1952
    %2808 = vmatpush1.msra.mxu0 %v1951
    %2809 = vmatprep.subr.mxu0 %v1948
    %2810 = vmatpush1.msra.mxu0 %v1947
    %2811 = vmatprep.subr.mxu0 %v1944
    %2812 = vmatpush1.msra.mxu0 %v1943
    %2813 = vmatprep.subr.mxu0 %v1940
    %2814 = vmatpush1.msra.mxu0 %v1939
    %2815 = vmatprep.subr.mxu0 %v1936
    %2816 = vmatpush1.msra.mxu0 %v1935
    %2817 = vmatprep.subr.mxu0 0.0
    %2818 = vmatpush2.msra.mxu0 0.0
    %2819 = vmatprep.subr.mxu0 0.0
    %2820 = vmatpush2.msra.mxu0 0.0
    %2821 = vmatprep.subr.mxu0 0.0
    %2822 = vmatpush2.msra.mxu0 0.0
    %2823 = vmatprep.subr.mxu0 0.0
    %2824 = vmatpush2.msra.mxu0 0.0
    %2825 = vmatprep.subr.mxu0 0.0
    %2826 = vmatpush2.msra.mxu0 0.0
    %2827 = vmatprep.subr.mxu0 0.0
    %2828 = vmatpush2.msra.mxu0 0.0
    %2829 = vmatprep.subr.mxu0 0.0
    %2830 = vmatpush2.msra.mxu0 0.0
    %2831 = vmatprep.subr.mxu0 0.0
    %2832 = vmatpush2.msra.mxu0 0.0
    %2833 = vmatprep.subr.mxu0 0.0
    %2834 = vmatpush2.msra.mxu0 0.0
    %2835 = vmatprep.subr.mxu0 0.0
    %2836 = vmatpush2.msra.mxu0 0.0
    %2837 = vmatprep.subr.mxu0 0.0
    %2838 = vmatpush2.msra.mxu0 0.0
    %2839 = vmatprep.subr.mxu0 0.0
    %2840 = vmatpush2.msra.mxu0 0.0
    %2841 = vmatprep.subr.mxu0 0.0
    %2842 = vmatpush2.msra.mxu0 0.0
    %2843 = vmatprep.subr.mxu0 0.0
    %2844 = vmatpush2.msra.mxu0 0.0
    %2845 = vmatprep.subr.mxu0 0.0
    %2846 = vmatpush2.msra.mxu0 0.0
    %2847 = vmatprep.subr.mxu0 0.0
    %2848 = vmatpush2.msra.mxu0 0.0
    %2849 = vmatprep.mubr.f32.mxu0 0.0
    %2850 = vmatmul.mubr.f32.gmra.mxu0 %v2709
    %v2851 = vpop.f32.mrf.mxu0
    %v2852 = vadd.f32 0.0, %v2851
    %v2853 = vpop.f32.mrf.mxu0
    %v2854 = vadd.f32 0.0, %v2853
    %2855 = vdwg.mxu0
    %v2856 = vadd.f32 %v2710, %v2781
    %v2857 = vadd.f32 %v2711, %v2783
    %v2858 = vadd.f32 %v2712, %v2852
    %v2859 = vadd.f32 %v2713, %v2854
    %v2860 = vxor.u32 %v2856, 2147483648
    %v2861 = vmul.f32 %v2860, 1.442695
    %v2862 = vpow.pop %v2861
    %v2863 = vadd.f32 %v2862, 1.0
    %v2864 = vrcp.pop %v2863
    %v2865 = vmul.f32 1.0, %v2864
    %v2866 = vxor.u32 %v2857, 2147483648
    %v2867 = vmul.f32 %v2866, 1.442695
    %v2868 = vpow.pop %v2867
    %v2869 = vadd.f32 %v2868, 1.0
    %v2870 = vrcp.pop %v2869
    %v2871 = vmul.f32 1.0, %v2870
    %v2872 = vtanh.pop %v2858
    %v2873 = vxor.u32 %v2859, 2147483648
    %v2874 = vmul.f32 %v2873, 1.442695
    %v2875 = vpow.pop %v2874
    %v2876 = vadd.f32 %v2875, 1.0
    %v2877 = vrcp.pop %v2876
    %v2878 = vmul.f32 1.0, %v2877
    %v2879 = vld [vmem:[#allocation5] sm:$0xff]
    %v2880 = vmul.f32 %v2871, %v2879
    %v2881 = vmul.f32 %v2865, %v2872
    %v2882 = vadd.f32 %v2880, %v2881
    %v2883 = vtanh.pop %v2882
    %v2884 = vmul.f32 %v2878, %v2883
    %2885 = vst [vmem:[#allocation4] sm:$0xff] %v2884
    %2886 = vst [vmem:[#allocation5] sm:$0xff] %v2882
    %v2887 = vld [vmem:[#allocation4] sm:$0xff]
    %v2888 = vld [vmem:[%s1020] sm:$0xff]
    %v2889 = vld [vmem:[%s1020 + $0x8] sm:$0xff]
    %v2890 = vld [vmem:[%s1020 + $0x10] sm:$0xff]
    %v2891 = vld [vmem:[%s1020 + $0x18] sm:$0xff]
    %2892 = vmatprep.subr.mxu0 %v1994
    %2893 = vmatpush1.msra.mxu0 %v1993
    %2894 = vmatprep.subr.mxu0 %v1990
    %2895 = vmatpush1.msra.mxu0 %v1989
    %2896 = vmatprep.subr.mxu0 %v1986
    %2897 = vmatpush1.msra.mxu0 %v1985
    %2898 = vmatprep.subr.mxu0 %v1982
    %2899 = vmatpush1.msra.mxu0 %v1981
    %2900 = vmatprep.subr.mxu0 %v1978
    %2901 = vmatpush1.msra.mxu0 %v1977
    %2902 = vmatprep.subr.mxu0 %v1974
    %2903 = vmatpush1.msra.mxu0 %v1973
    %2904 = vmatprep.subr.mxu0 %v1970
    %2905 = vmatpush1.msra.mxu0 %v1969
    %2906 = vmatprep.subr.mxu0 %v1966
    %2907 = vmatpush1.msra.mxu0 %v1965
    %2908 = vmatprep.subr.mxu0 %v1962
    %2909 = vmatpush1.msra.mxu0 %v1961
    %2910 = vmatprep.subr.mxu0 %v1958
    %2911 = vmatpush1.msra.mxu0 %v1957
    %2912 = vmatprep.subr.mxu0 %v1954
    %2913 = vmatpush1.msra.mxu0 %v1953
    %2914 = vmatprep.subr.mxu0 %v1950
    %2915 = vmatpush1.msra.mxu0 %v1949
    %2916 = vmatprep.subr.mxu0 %v1946
    %2917 = vmatpush1.msra.mxu0 %v1945
    %2918 = vmatprep.subr.mxu0 %v1942
    %2919 = vmatpush1.msra.mxu0 %v1941
    %2920 = vmatprep.subr.mxu0 %v1938
    %2921 = vmatpush1.msra.mxu0 %v1937
    %2922 = vmatprep.subr.mxu0 %v1934
    %2923 = vmatpush1.msra.mxu0 %v1933
    %2924 = vmatprep.subr.mxu0 0.0
    %2925 = vmatpush2.msra.mxu0 0.0
    %2926 = vmatprep.subr.mxu0 0.0
    %2927 = vmatpush2.msra.mxu0 0.0
    %2928 = vmatprep.subr.mxu0 0.0
    %2929 = vmatpush2.msra.mxu0 0.0
    %2930 = vmatprep.subr.mxu0 0.0
    %2931 = vmatpush2.msra.mxu0 0.0
    %2932 = vmatprep.subr.mxu0 0.0
    %2933 = vmatpush2.msra.mxu0 0.0
    %2934 = vmatprep.subr.mxu0 0.0
    %2935 = vmatpush2.msra.mxu0 0.0
    %2936 = vmatprep.subr.mxu0 0.0
    %2937 = vmatpush2.msra.mxu0 0.0
    %2938 = vmatprep.subr.mxu0 0.0
    %2939 = vmatpush2.msra.mxu0 0.0
    %2940 = vmatprep.subr.mxu0 0.0
    %2941 = vmatpush2.msra.mxu0 0.0
    %2942 = vmatprep.subr.mxu0 0.0
    %2943 = vmatpush2.msra.mxu0 0.0
    %2944 = vmatprep.subr.mxu0 0.0
    %2945 = vmatpush2.msra.mxu0 0.0
    %2946 = vmatprep.subr.mxu0 0.0
    %2947 = vmatpush2.msra.mxu0 0.0
    %2948 = vmatprep.subr.mxu0 0.0
    %2949 = vmatpush2.msra.mxu0 0.0
    %2950 = vmatprep.subr.mxu0 0.0
    %2951 = vmatpush2.msra.mxu0 0.0
    %2952 = vmatprep.subr.mxu0 0.0
    %2953 = vmatpush2.msra.mxu0 0.0
    %2954 = vmatprep.subr.mxu0 0.0
    %2955 = vmatpush2.msra.mxu0 0.0
    %2956 = vmatprep.mubr.f32.mxu0 0.0
    %2957 = vmatmul.mubr.f32.gmra.mxu0 %v2887
    %v2958 = vpop.f32.mrf.mxu0
    %v2959 = vadd.f32 0.0, %v2958
    %v2960 = vpop.f32.mrf.mxu0
    %v2961 = vadd.f32 0.0, %v2960
    %2962 = vdwg.mxu0
    %2963 = vmatprep.subr.mxu0 %v1996
    %2964 = vmatpush1.msra.mxu0 %v1995
    %2965 = vmatprep.subr.mxu0 %v1992
    %2966 = vmatpush1.msra.mxu0 %v1991
    %2967 = vmatprep.subr.mxu0 %v1988
    %2968 = vmatpush1.msra.mxu0 %v1987
    %2969 = vmatprep.subr.mxu0 %v1984
    %2970 = vmatpush1.msra.mxu0 %v1983
    %2971 = vmatprep.subr.mxu0 %v1980
    %2972 = vmatpush1.msra.mxu0 %v1979
    %2973 = vmatprep.subr.mxu0 %v1976
    %2974 = vmatpush1.msra.mxu0 %v1975
    %2975 = vmatprep.subr.mxu0 %v1972
    %2976 = vmatpush1.msra.mxu0 %v1971
    %2977 = vmatprep.subr.mxu0 %v1968
    %2978 = vmatpush1.msra.mxu0 %v1967
    %2979 = vmatprep.subr.mxu0 %v1964
    %2980 = vmatpush1.msra.mxu0 %v1963
    %2981 = vmatprep.subr.mxu0 %v1960
    %2982 = vmatpush1.msra.mxu0 %v1959
    %2983 = vmatprep.subr.mxu0 %v1956
    %2984 = vmatpush1.msra.mxu0 %v1955
    %2985 = vmatprep.subr.mxu0 %v1952
    %2986 = vmatpush1.msra.mxu0 %v1951
    %2987 = vmatprep.subr.mxu0 %v1948
    %2988 = vmatpush1.msra.mxu0 %v1947
    %2989 = vmatprep.subr.mxu0 %v1944
    %2990 = vmatpush1.msra.mxu0 %v1943
    %2991 = vmatprep.subr.mxu0 %v1940
    %2992 = vmatpush1.msra.mxu0 %v1939
    %2993 = vmatprep.subr.mxu0 %v1936
    %2994 = vmatpush1.msra.mxu0 %v1935
    %2995 = vmatprep.subr.mxu0 0.0
    %2996 = vmatpush2.msra.mxu0 0.0
    %2997 = vmatprep.subr.mxu0 0.0
    %2998 = vmatpush2.msra.mxu0 0.0
    %2999 = vmatprep.subr.mxu0 0.0
    %3000 = vmatpush2.msra.mxu0 0.0
    %3001 = vmatprep.subr.mxu0 0.0
    %3002 = vmatpush2.msra.mxu0 0.0
    %3003 = vmatprep.subr.mxu0 0.0
    %3004 = vmatpush2.msra.mxu0 0.0
    %3005 = vmatprep.subr.mxu0 0.0
    %3006 = vmatpush2.msra.mxu0 0.0
    %3007 = vmatprep.subr.mxu0 0.0
    %3008 = vmatpush2.msra.mxu0 0.0
    %3009 = vmatprep.subr.mxu0 0.0
    %3010 = vmatpush2.msra.mxu0 0.0
    %3011 = vmatprep.subr.mxu0 0.0
    %3012 = vmatpush2.msra.mxu0 0.0
    %3013 = vmatprep.subr.mxu0 0.0
    %3014 = vmatpush2.msra.mxu0 0.0
    %3015 = vmatprep.subr.mxu0 0.0
    %3016 = vmatpush2.msra.mxu0 0.0
    %3017 = vmatprep.subr.mxu0 0.0
    %3018 = vmatpush2.msra.mxu0 0.0
    %3019 = vmatprep.subr.mxu0 0.0
    %3020 = vmatpush2.msra.mxu0 0.0
    %3021 = vmatprep.subr.mxu0 0.0
    %3022 = vmatpush2.msra.mxu0 0.0
    %3023 = vmatprep.subr.mxu0 0.0
    %3024 = vmatpush2.msra.mxu0 0.0
    %3025 = vmatprep.subr.mxu0 0.0
    %3026 = vmatpush2.msra.mxu0 0.0
    %3027 = vmatprep.mubr.f32.mxu0 0.0
    %3028 = vmatmul.mubr.f32.gmra.mxu0 %v2887
    %v3029 = vpop.f32.mrf.mxu0
    %v3030 = vadd.f32 0.0, %v3029
    %v3031 = vpop.f32.mrf.mxu0
    %v3032 = vadd.f32 0.0, %v3031
    %3033 = vdwg.mxu0
    %v3034 = vadd.f32 %v2888, %v2959
    %v3035 = vadd.f32 %v2889, %v2961
    %v3036 = vadd.f32 %v2890, %v3030
    %v3037 = vadd.f32 %v2891, %v3032
    %v3038 = vxor.u32 %v3034, 2147483648
    %v3039 = vmul.f32 %v3038, 1.442695
    %v3040 = vpow.pop %v3039
    %v3041 = vadd.f32 %v3040, 1.0
    %v3042 = vrcp.pop %v3041
    %v3043 = vmul.f32 1.0, %v3042
    %v3044 = vxor.u32 %v3035, 2147483648
    %v3045 = vmul.f32 %v3044, 1.442695
    %v3046 = vpow.pop %v3045
    %v3047 = vadd.f32 %v3046, 1.0
    %v3048 = vrcp.pop %v3047
    %v3049 = vmul.f32 1.0, %v3048
    %v3050 = vtanh.pop %v3036
    %v3051 = vxor.u32 %v3037, 2147483648
    %v3052 = vmul.f32 %v3051, 1.442695
    %v3053 = vpow.pop %v3052
    %v3054 = vadd.f32 %v3053, 1.0
    %v3055 = vrcp.pop %v3054
    %v3056 = vmul.f32 1.0, %v3055
    %v3057 = vld [vmem:[#allocation5] sm:$0xff]
    %v3058 = vmul.f32 %v3049, %v3057
    %v3059 = vmul.f32 %v3043, %v3050
    %v3060 = vadd.f32 %v3058, %v3059
    %v3061 = vtanh.pop %v3060
    %v3062 = vmul.f32 %v3056, %v3061
    %3063 = vst [vmem:[#allocation4] sm:$0xff] %v3062
    %3064 = vst [vmem:[#allocation5] sm:$0xff] %v3060
    %v3065 = vld [vmem:[#allocation4] sm:$0xff]
    %v3066 = vld [vmem:[%s1203] sm:$0xff]
    %v3067 = vld [vmem:[%s1203 + $0x8] sm:$0xff]
    %v3068 = vld [vmem:[%s1203 + $0x10] sm:$0xff]
    %v3069 = vld [vmem:[%s1203 + $0x18] sm:$0xff]
    %3070 = vmatprep.subr.mxu0 %v1994
    %3071 = vmatpush1.msra.mxu0 %v1993
    %3072 = vmatprep.subr.mxu0 %v1990
    %3073 = vmatpush1.msra.mxu0 %v1989
    %3074 = vmatprep.subr.mxu0 %v1986
    %3075 = vmatpush1.msra.mxu0 %v1985
    %3076 = vmatprep.subr.mxu0 %v1982
    %3077 = vmatpush1.msra.mxu0 %v1981
    %3078 = vmatprep.subr.mxu0 %v1978
    %3079 = vmatpush1.msra.mxu0 %v1977
    %3080 = vmatprep.subr.mxu0 %v1974
    %3081 = vmatpush1.msra.mxu0 %v1973
    %3082 = vmatprep.subr.mxu0 %v1970
    %3083 = vmatpush1.msra.mxu0 %v1969
    %3084 = vmatprep.subr.mxu0 %v1966
    %3085 = vmatpush1.msra.mxu0 %v1965
    %3086 = vmatprep.subr.mxu0 %v1962
    %3087 = vmatpush1.msra.mxu0 %v1961
    %3088 = vmatprep.subr.mxu0 %v1958
    %3089 = vmatpush1.msra.mxu0 %v1957
    %3090 = vmatprep.subr.mxu0 %v1954
    %3091 = vmatpush1.msra.mxu0 %v1953
    %3092 = vmatprep.subr.mxu0 %v1950
    %3093 = vmatpush1.msra.mxu0 %v1949
    %3094 = vmatprep.subr.mxu0 %v1946
    %3095 = vmatpush1.msra.mxu0 %v1945
    %3096 = vmatprep.subr.mxu0 %v1942
    %3097 = vmatpush1.msra.mxu0 %v1941
    %3098 = vmatprep.subr.mxu0 %v1938
    %3099 = vmatpush1.msra.mxu0 %v1937
    %3100 = vmatprep.subr.mxu0 %v1934
    %3101 = vmatpush1.msra.mxu0 %v1933
    %3102 = vmatprep.subr.mxu0 0.0
    %3103 = vmatpush2.msra.mxu0 0.0
    %3104 = vmatprep.subr.mxu0 0.0
    %3105 = vmatpush2.msra.mxu0 0.0
    %3106 = vmatprep.subr.mxu0 0.0
    %3107 = vmatpush2.msra.mxu0 0.0
    %3108 = vmatprep.subr.mxu0 0.0
    %3109 = vmatpush2.msra.mxu0 0.0
    %3110 = vmatprep.subr.mxu0 0.0
    %3111 = vmatpush2.msra.mxu0 0.0
    %3112 = vmatprep.subr.mxu0 0.0
    %3113 = vmatpush2.msra.mxu0 0.0
    %3114 = vmatprep.subr.mxu0 0.0
    %3115 = vmatpush2.msra.mxu0 0.0
    %3116 = vmatprep.subr.mxu0 0.0
    %3117 = vmatpush2.msra.mxu0 0.0
    %3118 = vmatprep.subr.mxu0 0.0
    %3119 = vmatpush2.msra.mxu0 0.0
    %3120 = vmatprep.subr.mxu0 0.0
    %3121 = vmatpush2.msra.mxu0 0.0
    %3122 = vmatprep.subr.mxu0 0.0
    %3123 = vmatpush2.msra.mxu0 0.0
    %3124 = vmatprep.subr.mxu0 0.0
    %3125 = vmatpush2.msra.mxu0 0.0
    %3126 = vmatprep.subr.mxu0 0.0
    %3127 = vmatpush2.msra.mxu0 0.0
    %3128 = vmatprep.subr.mxu0 0.0
    %3129 = vmatpush2.msra.mxu0 0.0
    %3130 = vmatprep.subr.mxu0 0.0
    %3131 = vmatpush2.msra.mxu0 0.0
    %3132 = vmatprep.subr.mxu0 0.0
    %3133 = vmatpush2.msra.mxu0 0.0
    %3134 = vmatprep.mubr.f32.mxu0 0.0
    %3135 = vmatmul.mubr.f32.gmra.mxu0 %v3065
    %v3136 = vpop.f32.mrf.mxu0
    %v3137 = vadd.f32 0.0, %v3136
    %v3138 = vpop.f32.mrf.mxu0
    %v3139 = vadd.f32 0.0, %v3138
    %3140 = vdwg.mxu0
    %3141 = vmatprep.subr.mxu0 %v1996
    %3142 = vmatpush1.msra.mxu0 %v1995
    %3143 = vmatprep.subr.mxu0 %v1992
    %3144 = vmatpush1.msra.mxu0 %v1991
    %3145 = vmatprep.subr.mxu0 %v1988
    %3146 = vmatpush1.msra.mxu0 %v1987
    %3147 = vmatprep.subr.mxu0 %v1984
    %3148 = vmatpush1.msra.mxu0 %v1983
    %3149 = vmatprep.subr.mxu0 %v1980
    %3150 = vmatpush1.msra.mxu0 %v1979
    %3151 = vmatprep.subr.mxu0 %v1976
    %3152 = vmatpush1.msra.mxu0 %v1975
    %3153 = vmatprep.subr.mxu0 %v1972
    %3154 = vmatpush1.msra.mxu0 %v1971
    %3155 = vmatprep.subr.mxu0 %v1968
    %3156 = vmatpush1.msra.mxu0 %v1967
    %3157 = vmatprep.subr.mxu0 %v1964
    %3158 = vmatpush1.msra.mxu0 %v1963
    %3159 = vmatprep.subr.mxu0 %v1960
    %3160 = vmatpush1.msra.mxu0 %v1959
    %3161 = vmatprep.subr.mxu0 %v1956
    %3162 = vmatpush1.msra.mxu0 %v1955
    %3163 = vmatprep.subr.mxu0 %v1952
    %3164 = vmatpush1.msra.mxu0 %v1951
    %3165 = vmatprep.subr.mxu0 %v1948
    %3166 = vmatpush1.msra.mxu0 %v1947
    %3167 = vmatprep.subr.mxu0 %v1944
    %3168 = vmatpush1.msra.mxu0 %v1943
    %3169 = vmatprep.subr.mxu0 %v1940
    %3170 = vmatpush1.msra.mxu0 %v1939
    %3171 = vmatprep.subr.mxu0 %v1936
    %3172 = vmatpush1.msra.mxu0 %v1935
    %3173 = vmatprep.subr.mxu0 0.0
    %3174 = vmatpush2.msra.mxu0 0.0
    %3175 = vmatprep.subr.mxu0 0.0
    %3176 = vmatpush2.msra.mxu0 0.0
    %3177 = vmatprep.subr.mxu0 0.0
    %3178 = vmatpush2.msra.mxu0 0.0
    %3179 = vmatprep.subr.mxu0 0.0
    %3180 = vmatpush2.msra.mxu0 0.0
    %3181 = vmatprep.subr.mxu0 0.0
    %3182 = vmatpush2.msra.mxu0 0.0
    %3183 = vmatprep.subr.mxu0 0.0
    %3184 = vmatpush2.msra.mxu0 0.0
    %3185 = vmatprep.subr.mxu0 0.0
    %3186 = vmatpush2.msra.mxu0 0.0
    %3187 = vmatprep.subr.mxu0 0.0
    %3188 = vmatpush2.msra.mxu0 0.0
    %3189 = vmatprep.subr.mxu0 0.0
    %3190 = vmatpush2.msra.mxu0 0.0
    %3191 = vmatprep.subr.mxu0 0.0
    %3192 = vmatpush2.msra.mxu0 0.0
    %3193 = vmatprep.subr.mxu0 0.0
    %3194 = vmatpush2.msra.mxu0 0.0
    %3195 = vmatprep.subr.mxu0 0.0
    %3196 = vmatpush2.msra.mxu0 0.0
    %3197 = vmatprep.subr.mxu0 0.0
    %3198 = vmatpush2.msra.mxu0 0.0
    %3199 = vmatprep.subr.mxu0 0.0
    %3200 = vmatpush2.msra.mxu0 0.0
    %3201 = vmatprep.subr.mxu0 0.0
    %3202 = vmatpush2.msra.mxu0 0.0
    %3203 = vmatprep.subr.mxu0 0.0
    %3204 = vmatpush2.msra.mxu0 0.0
    %3205 = vmatprep.mubr.f32.mxu0 0.0
    %3206 = vmatmul.mubr.f32.gmra.mxu0 %v3065
    %v3207 = vpop.f32.mrf.mxu0
    %v3208 = vadd.f32 0.0, %v3207
    %v3209 = vpop.f32.mrf.mxu0
    %v3210 = vadd.f32 0.0, %v3209
    %3211 = vdwg.mxu0
    %v3212 = vadd.f32 %v3066, %v3137
    %v3213 = vadd.f32 %v3067, %v3139
    %v3214 = vadd.f32 %v3068, %v3208
    %v3215 = vadd.f32 %v3069, %v3210
    %v3216 = vxor.u32 %v3212, 2147483648
    %v3217 = vmul.f32 %v3216, 1.442695
    %v3218 = vpow.pop %v3217
    %v3219 = vadd.f32 %v3218, 1.0
    %v3220 = vrcp.pop %v3219
    %v3221 = vmul.f32 1.0, %v3220
    %v3222 = vxor.u32 %v3213, 2147483648
    %v3223 = vmul.f32 %v3222, 1.442695
    %v3224 = vpow.pop %v3223
    %v3225 = vadd.f32 %v3224, 1.0
    %v3226 = vrcp.pop %v3225
    %v3227 = vmul.f32 1.0, %v3226
    %v3228 = vtanh.pop %v3214
    %v3229 = vxor.u32 %v3215, 2147483648
    %v3230 = vmul.f32 %v3229, 1.442695
    %v3231 = vpow.pop %v3230
    %v3232 = vadd.f32 %v3231, 1.0
    %v3233 = vrcp.pop %v3232
    %v3234 = vmul.f32 1.0, %v3233
    %v3235 = vld [vmem:[#allocation5] sm:$0xff]
    %v3236 = vmul.f32 %v3227, %v3235
    %v3237 = vmul.f32 %v3221, %v3228
    %v3238 = vadd.f32 %v3236, %v3237
    %v3239 = vtanh.pop %v3238
    %v3240 = vmul.f32 %v3234, %v3239
    %3241 = vst [vmem:[#allocation4] sm:$0xff] %v3240
    %3242 = vst [vmem:[#allocation5] sm:$0xff] %v3238
    %v3243 = vld [vmem:[#allocation4] sm:$0xff]
    %v3244 = vld [vmem:[%s1386] sm:$0xff]
    %v3245 = vld [vmem:[%s1386 + $0x8] sm:$0xff]
    %v3246 = vld [vmem:[%s1386 + $0x10] sm:$0xff]
    %v3247 = vld [vmem:[%s1386 + $0x18] sm:$0xff]
    %3248 = vmatprep.subr.mxu0 %v1994
    %3249 = vmatpush1.msra.mxu0 %v1993
    %3250 = vmatprep.subr.mxu0 %v1990
    %3251 = vmatpush1.msra.mxu0 %v1989
    %3252 = vmatprep.subr.mxu0 %v1986
    %3253 = vmatpush1.msra.mxu0 %v1985
    %3254 = vmatprep.subr.mxu0 %v1982
    %3255 = vmatpush1.msra.mxu0 %v1981
    %3256 = vmatprep.subr.mxu0 %v1978
    %3257 = vmatpush1.msra.mxu0 %v1977
    %3258 = vmatprep.subr.mxu0 %v1974
    %3259 = vmatpush1.msra.mxu0 %v1973
    %3260 = vmatprep.subr.mxu0 %v1970
    %3261 = vmatpush1.msra.mxu0 %v1969
    %3262 = vmatprep.subr.mxu0 %v1966
    %3263 = vmatpush1.msra.mxu0 %v1965
    %3264 = vmatprep.subr.mxu0 %v1962
    %3265 = vmatpush1.msra.mxu0 %v1961
    %3266 = vmatprep.subr.mxu0 %v1958
    %3267 = vmatpush1.msra.mxu0 %v1957
    %3268 = vmatprep.subr.mxu0 %v1954
    %3269 = vmatpush1.msra.mxu0 %v1953
    %3270 = vmatprep.subr.mxu0 %v1950
    %3271 = vmatpush1.msra.mxu0 %v1949
    %3272 = vmatprep.subr.mxu0 %v1946
    %3273 = vmatpush1.msra.mxu0 %v1945
    %3274 = vmatprep.subr.mxu0 %v1942
    %3275 = vmatpush1.msra.mxu0 %v1941
    %3276 = vmatprep.subr.mxu0 %v1938
    %3277 = vmatpush1.msra.mxu0 %v1937
    %3278 = vmatprep.subr.mxu0 %v1934
    %3279 = vmatpush1.msra.mxu0 %v1933
    %3280 = vmatprep.subr.mxu0 0.0
    %3281 = vmatpush2.msra.mxu0 0.0
    %3282 = vmatprep.subr.mxu0 0.0
    %3283 = vmatpush2.msra.mxu0 0.0
    %3284 = vmatprep.subr.mxu0 0.0
    %3285 = vmatpush2.msra.mxu0 0.0
    %3286 = vmatprep.subr.mxu0 0.0
    %3287 = vmatpush2.msra.mxu0 0.0
    %3288 = vmatprep.subr.mxu0 0.0
    %3289 = vmatpush2.msra.mxu0 0.0
    %3290 = vmatprep.subr.mxu0 0.0
    %3291 = vmatpush2.msra.mxu0 0.0
    %3292 = vmatprep.subr.mxu0 0.0
    %3293 = vmatpush2.msra.mxu0 0.0
    %3294 = vmatprep.subr.mxu0 0.0
    %3295 = vmatpush2.msra.mxu0 0.0
    %3296 = vmatprep.subr.mxu0 0.0
    %3297 = vmatpush2.msra.mxu0 0.0
    %3298 = vmatprep.subr.mxu0 0.0
    %3299 = vmatpush2.msra.mxu0 0.0
    %3300 = vmatprep.subr.mxu0 0.0
    %3301 = vmatpush2.msra.mxu0 0.0
    %3302 = vmatprep.subr.mxu0 0.0
    %3303 = vmatpush2.msra.mxu0 0.0
    %3304 = vmatprep.subr.mxu0 0.0
    %3305 = vmatpush2.msra.mxu0 0.0
    %3306 = vmatprep.subr.mxu0 0.0
    %3307 = vmatpush2.msra.mxu0 0.0
    %3308 = vmatprep.subr.mxu0 0.0
    %3309 = vmatpush2.msra.mxu0 0.0
    %3310 = vmatprep.subr.mxu0 0.0
    %3311 = vmatpush2.msra.mxu0 0.0
    %3312 = vmatprep.mubr.f32.mxu0 0.0
    %3313 = vmatmul.mubr.f32.gmra.mxu0 %v3243
    %v3314 = vpop.f32.mrf.mxu0
    %v3315 = vadd.f32 0.0, %v3314
    %v3316 = vpop.f32.mrf.mxu0
    %v3317 = vadd.f32 0.0, %v3316
    %3318 = vdwg.mxu0
    %3319 = vmatprep.subr.mxu0 %v1996
    %3320 = vmatpush1.msra.mxu0 %v1995
    %3321 = vmatprep.subr.mxu0 %v1992
    %3322 = vmatpush1.msra.mxu0 %v1991
    %3323 = vmatprep.subr.mxu0 %v1988
    %3324 = vmatpush1.msra.mxu0 %v1987
    %3325 = vmatprep.subr.mxu0 %v1984
    %3326 = vmatpush1.msra.mxu0 %v1983
    %3327 = vmatprep.subr.mxu0 %v1980
    %3328 = vmatpush1.msra.mxu0 %v1979
    %3329 = vmatprep.subr.mxu0 %v1976
    %3330 = vmatpush1.msra.mxu0 %v1975
    %3331 = vmatprep.subr.mxu0 %v1972
    %3332 = vmatpush1.msra.mxu0 %v1971
    %3333 = vmatprep.subr.mxu0 %v1968
    %3334 = vmatpush1.msra.mxu0 %v1967
    %3335 = vmatprep.subr.mxu0 %v1964
    %3336 = vmatpush1.msra.mxu0 %v1963
    %3337 = vmatprep.subr.mxu0 %v1960
    %3338 = vmatpush1.msra.mxu0 %v1959
    %3339 = vmatprep.subr.mxu0 %v1956
    %3340 = vmatpush1.msra.mxu0 %v1955
    %3341 = vmatprep.subr.mxu0 %v1952
    %3342 = vmatpush1.msra.mxu0 %v1951
    %3343 = vmatprep.subr.mxu0 %v1948
    %3344 = vmatpush1.msra.mxu0 %v1947
    %3345 = vmatprep.subr.mxu0 %v1944
    %3346 = vmatpush1.msra.mxu0 %v1943
    %3347 = vmatprep.subr.mxu0 %v1940
    %3348 = vmatpush1.msra.mxu0 %v1939
    %3349 = vmatprep.subr.mxu0 %v1936
    %3350 = vmatpush1.msra.mxu0 %v1935
    %3351 = vmatprep.subr.mxu0 0.0
    %3352 = vmatpush2.msra.mxu0 0.0
    %3353 = vmatprep.subr.mxu0 0.0
    %3354 = vmatpush2.msra.mxu0 0.0
    %3355 = vmatprep.subr.mxu0 0.0
    %3356 = vmatpush2.msra.mxu0 0.0
    %3357 = vmatprep.subr.mxu0 0.0
    %3358 = vmatpush2.msra.mxu0 0.0
    %3359 = vmatprep.subr.mxu0 0.0
    %3360 = vmatpush2.msra.mxu0 0.0
    %3361 = vmatprep.subr.mxu0 0.0
    %3362 = vmatpush2.msra.mxu0 0.0
    %3363 = vmatprep.subr.mxu0 0.0
    %3364 = vmatpush2.msra.mxu0 0.0
    %3365 = vmatprep.subr.mxu0 0.0
    %3366 = vmatpush2.msra.mxu0 0.0
    %3367 = vmatprep.subr.mxu0 0.0
    %3368 = vmatpush2.msra.mxu0 0.0
    %3369 = vmatprep.subr.mxu0 0.0
    %3370 = vmatpush2.msra.mxu0 0.0
    %3371 = vmatprep.subr.mxu0 0.0
    %3372 = vmatpush2.msra.mxu0 0.0
    %3373 = vmatprep.subr.mxu0 0.0
    %3374 = vmatpush2.msra.mxu0 0.0
    %3375 = vmatprep.subr.mxu0 0.0
    %3376 = vmatpush2.msra.mxu0 0.0
    %3377 = vmatprep.subr.mxu0 0.0
    %3378 = vmatpush2.msra.mxu0 0.0
    %3379 = vmatprep.subr.mxu0 0.0
    %3380 = vmatpush2.msra.mxu0 0.0
    %3381 = vmatprep.subr.mxu0 0.0
    %3382 = vmatpush2.msra.mxu0 0.0
    %3383 = vmatprep.mubr.f32.mxu0 0.0
    %3384 = vmatmul.mubr.f32.gmra.mxu0 %v3243
    %v3385 = vpop.f32.mrf.mxu0
    %v3386 = vadd.f32 0.0, %v3385
    %v3387 = vpop.f32.mrf.mxu0
    %v3388 = vadd.f32 0.0, %v3387
    %3389 = vdwg.mxu0
    %v3390 = vadd.f32 %v3244, %v3315
    %v3391 = vadd.f32 %v3245, %v3317
    %v3392 = vadd.f32 %v3246, %v3386
    %v3393 = vadd.f32 %v3247, %v3388
    %v3394 = vxor.u32 %v3390, 2147483648
    %v3395 = vmul.f32 %v3394, 1.442695
    %v3396 = vpow.pop %v3395
    %v3397 = vadd.f32 %v3396, 1.0
    %v3398 = vrcp.pop %v3397
    %v3399 = vmul.f32 1.0, %v3398
    %v3400 = vxor.u32 %v3391, 2147483648
    %v3401 = vmul.f32 %v3400, 1.442695
    %v3402 = vpow.pop %v3401
    %v3403 = vadd.f32 %v3402, 1.0
    %v3404 = vrcp.pop %v3403
    %v3405 = vmul.f32 1.0, %v3404
    %v3406 = vtanh.pop %v3392
    %v3407 = vxor.u32 %v3393, 2147483648
    %v3408 = vmul.f32 %v3407, 1.442695
    %v3409 = vpow.pop %v3408
    %v3410 = vadd.f32 %v3409, 1.0
    %v3411 = vrcp.pop %v3410
    %v3412 = vmul.f32 1.0, %v3411
    %v3413 = vld [vmem:[#allocation5] sm:$0xff]
    %v3414 = vmul.f32 %v3405, %v3413
    %v3415 = vmul.f32 %v3399, %v3406
    %v3416 = vadd.f32 %v3414, %v3415
    %v3417 = vtanh.pop %v3416
    %v3418 = vmul.f32 %v3412, %v3417
    %3419 = vst [vmem:[#allocation4] sm:$0xff] %v3418
    %3420 = vst [vmem:[#allocation5] sm:$0xff] %v3416
    %v3421 = vld [vmem:[#allocation4] sm:$0xff]
    %v3422 = vld [vmem:[%s1569] sm:$0xff]
    %v3423 = vld [vmem:[%s1569 + $0x8] sm:$0xff]
    %v3424 = vld [vmem:[%s1569 + $0x10] sm:$0xff]
    %v3425 = vld [vmem:[%s1569 + $0x18] sm:$0xff]
    %3426 = vmatprep.subr.mxu0 %v1994
    %3427 = vmatpush1.msra.mxu0 %v1993
    %3428 = vmatprep.subr.mxu0 %v1990
    %3429 = vmatpush1.msra.mxu0 %v1989
    %3430 = vmatprep.subr.mxu0 %v1986
    %3431 = vmatpush1.msra.mxu0 %v1985
    %3432 = vmatprep.subr.mxu0 %v1982
    %3433 = vmatpush1.msra.mxu0 %v1981
    %3434 = vmatprep.subr.mxu0 %v1978
    %3435 = vmatpush1.msra.mxu0 %v1977
    %3436 = vmatprep.subr.mxu0 %v1974
    %3437 = vmatpush1.msra.mxu0 %v1973
    %3438 = vmatprep.subr.mxu0 %v1970
    %3439 = vmatpush1.msra.mxu0 %v1969
    %3440 = vmatprep.subr.mxu0 %v1966
    %3441 = vmatpush1.msra.mxu0 %v1965
    %3442 = vmatprep.subr.mxu0 %v1962
    %3443 = vmatpush1.msra.mxu0 %v1961
    %3444 = vmatprep.subr.mxu0 %v1958
    %3445 = vmatpush1.msra.mxu0 %v1957
    %3446 = vmatprep.subr.mxu0 %v1954
    %3447 = vmatpush1.msra.mxu0 %v1953
    %3448 = vmatprep.subr.mxu0 %v1950
    %3449 = vmatpush1.msra.mxu0 %v1949
    %3450 = vmatprep.subr.mxu0 %v1946
    %3451 = vmatpush1.msra.mxu0 %v1945
    %3452 = vmatprep.subr.mxu0 %v1942
    %3453 = vmatpush1.msra.mxu0 %v1941
    %3454 = vmatprep.subr.mxu0 %v1938
    %3455 = vmatpush1.msra.mxu0 %v1937
    %3456 = vmatprep.subr.mxu0 %v1934
    %3457 = vmatpush1.msra.mxu0 %v1933
    %3458 = vmatprep.subr.mxu0 0.0
    %3459 = vmatpush2.msra.mxu0 0.0
    %3460 = vmatprep.subr.mxu0 0.0
    %3461 = vmatpush2.msra.mxu0 0.0
    %3462 = vmatprep.subr.mxu0 0.0
    %3463 = vmatpush2.msra.mxu0 0.0
    %3464 = vmatprep.subr.mxu0 0.0
    %3465 = vmatpush2.msra.mxu0 0.0
    %3466 = vmatprep.subr.mxu0 0.0
    %3467 = vmatpush2.msra.mxu0 0.0
    %3468 = vmatprep.subr.mxu0 0.0
    %3469 = vmatpush2.msra.mxu0 0.0
    %3470 = vmatprep.subr.mxu0 0.0
    %3471 = vmatpush2.msra.mxu0 0.0
    %3472 = vmatprep.subr.mxu0 0.0
    %3473 = vmatpush2.msra.mxu0 0.0
    %3474 = vmatprep.subr.mxu0 0.0
    %3475 = vmatpush2.msra.mxu0 0.0
    %3476 = vmatprep.subr.mxu0 0.0
    %3477 = vmatpush2.msra.mxu0 0.0
    %3478 = vmatprep.subr.mxu0 0.0
    %3479 = vmatpush2.msra.mxu0 0.0
    %3480 = vmatprep.subr.mxu0 0.0
    %3481 = vmatpush2.msra.mxu0 0.0
    %3482 = vmatprep.subr.mxu0 0.0
    %3483 = vmatpush2.msra.mxu0 0.0
    %3484 = vmatprep.subr.mxu0 0.0
    %3485 = vmatpush2.msra.mxu0 0.0
    %3486 = vmatprep.subr.mxu0 0.0
    %3487 = vmatpush2.msra.mxu0 0.0
    %3488 = vmatprep.subr.mxu0 0.0
    %3489 = vmatpush2.msra.mxu0 0.0
    %3490 = vmatprep.mubr.f32.mxu0 0.0
    %3491 = vmatmul.mubr.f32.gmra.mxu0 %v3421
    %v3492 = vpop.f32.mrf.mxu0
    %v3493 = vadd.f32 0.0, %v3492
    %v3494 = vpop.f32.mrf.mxu0
    %v3495 = vadd.f32 0.0, %v3494
    %3496 = vdwg.mxu0
    %3497 = vmatprep.subr.mxu0 %v1996
    %3498 = vmatpush1.msra.mxu0 %v1995
    %3499 = vmatprep.subr.mxu0 %v1992
    %3500 = vmatpush1.msra.mxu0 %v1991
    %3501 = vmatprep.subr.mxu0 %v1988
    %3502 = vmatpush1.msra.mxu0 %v1987
    %3503 = vmatprep.subr.mxu0 %v1984
    %3504 = vmatpush1.msra.mxu0 %v1983
    %3505 = vmatprep.subr.mxu0 %v1980
    %3506 = vmatpush1.msra.mxu0 %v1979
    %3507 = vmatprep.subr.mxu0 %v1976
    %3508 = vmatpush1.msra.mxu0 %v1975
    %3509 = vmatprep.subr.mxu0 %v1972
    %3510 = vmatpush1.msra.mxu0 %v1971
    %3511 = vmatprep.subr.mxu0 %v1968
    %3512 = vmatpush1.msra.mxu0 %v1967
    %3513 = vmatprep.subr.mxu0 %v1964
    %3514 = vmatpush1.msra.mxu0 %v1963
    %3515 = vmatprep.subr.mxu0 %v1960
    %3516 = vmatpush1.msra.mxu0 %v1959
    %3517 = vmatprep.subr.mxu0 %v1956
    %3518 = vmatpush1.msra.mxu0 %v1955
    %3519 = vmatprep.subr.mxu0 %v1952
    %3520 = vmatpush1.msra.mxu0 %v1951
    %3521 = vmatprep.subr.mxu0 %v1948
    %3522 = vmatpush1.msra.mxu0 %v1947
    %3523 = vmatprep.subr.mxu0 %v1944
    %3524 = vmatpush1.msra.mxu0 %v1943
    %3525 = vmatprep.subr.mxu0 %v1940
    %3526 = vmatpush1.msra.mxu0 %v1939
    %3527 = vmatprep.subr.mxu0 %v1936
    %3528 = vmatpush1.msra.mxu0 %v1935
    %3529 = vmatprep.subr.mxu0 0.0
    %3530 = vmatpush2.msra.mxu0 0.0
    %3531 = vmatprep.subr.mxu0 0.0
    %3532 = vmatpush2.msra.mxu0 0.0
    %3533 = vmatprep.subr.mxu0 0.0
    %3534 = vmatpush2.msra.mxu0 0.0
    %3535 = vmatprep.subr.mxu0 0.0
    %3536 = vmatpush2.msra.mxu0 0.0
    %3537 = vmatprep.subr.mxu0 0.0
    %3538 = vmatpush2.msra.mxu0 0.0
    %3539 = vmatprep.subr.mxu0 0.0
    %3540 = vmatpush2.msra.mxu0 0.0
    %3541 = vmatprep.subr.mxu0 0.0
    %3542 = vmatpush2.msra.mxu0 0.0
    %3543 = vmatprep.subr.mxu0 0.0
    %3544 = vmatpush2.msra.mxu0 0.0
    %3545 = vmatprep.subr.mxu0 0.0
    %3546 = vmatpush2.msra.mxu0 0.0
    %3547 = vmatprep.subr.mxu0 0.0
    %3548 = vmatpush2.msra.mxu0 0.0
    %3549 = vmatprep.subr.mxu0 0.0
    %3550 = vmatpush2.msra.mxu0 0.0
    %3551 = vmatprep.subr.mxu0 0.0
    %3552 = vmatpush2.msra.mxu0 0.0
    %3553 = vmatprep.subr.mxu0 0.0
    %3554 = vmatpush2.msra.mxu0 0.0
    %3555 = vmatprep.subr.mxu0 0.0
    %3556 = vmatpush2.msra.mxu0 0.0
    %3557 = vmatprep.subr.mxu0 0.0
    %3558 = vmatpush2.msra.mxu0 0.0
    %3559 = vmatprep.subr.mxu0 0.0
    %3560 = vmatpush2.msra.mxu0 0.0
    %3561 = vmatprep.mubr.f32.mxu0 0.0
    %3562 = vmatmul.mubr.f32.gmra.mxu0 %v3421
    %v3563 = vpop.f32.mrf.mxu0
    %v3564 = vadd.f32 0.0, %v3563
    %v3565 = vpop.f32.mrf.mxu0
    %v3566 = vadd.f32 0.0, %v3565
    %3567 = vdwg.mxu0
    %v3568 = vadd.f32 %v3422, %v3493
    %v3569 = vadd.f32 %v3423, %v3495
    %v3570 = vadd.f32 %v3424, %v3564
    %v3571 = vadd.f32 %v3425, %v3566
    %v3572 = vxor.u32 %v3568, 2147483648
    %v3573 = vmul.f32 %v3572, 1.442695
    %v3574 = vpow.pop %v3573
    %v3575 = vadd.f32 %v3574, 1.0
    %v3576 = vrcp.pop %v3575
    %v3577 = vmul.f32 1.0, %v3576
    %v3578 = vxor.u32 %v3569, 2147483648
    %v3579 = vmul.f32 %v3578, 1.442695
    %v3580 = vpow.pop %v3579
    %v3581 = vadd.f32 %v3580, 1.0
    %v3582 = vrcp.pop %v3581
    %v3583 = vmul.f32 1.0, %v3582
    %v3584 = vtanh.pop %v3570
    %v3585 = vxor.u32 %v3571, 2147483648
    %v3586 = vmul.f32 %v3585, 1.442695
    %v3587 = vpow.pop %v3586
    %v3588 = vadd.f32 %v3587, 1.0
    %v3589 = vrcp.pop %v3588
    %v3590 = vmul.f32 1.0, %v3589
    %v3591 = vld [vmem:[#allocation5] sm:$0xff]
    %v3592 = vmul.f32 %v3583, %v3591
    %v3593 = vmul.f32 %v3577, %v3584
    %v3594 = vadd.f32 %v3592, %v3593
    %v3595 = vtanh.pop %v3594
    %v3596 = vmul.f32 %v3590, %v3595
    %3597 = vst [vmem:[#allocation4] sm:$0xff] %v3596
    %3598 = vst [vmem:[#allocation5] sm:$0xff] %v3594
    %v3599 = vld [vmem:[#allocation4] sm:$0xff]
    %v3600 = vld [vmem:[%s1752] sm:$0xff]
    %v3601 = vld [vmem:[%s1752 + $0x8] sm:$0xff]
    %v3602 = vld [vmem:[%s1752 + $0x10] sm:$0xff]
    %v3603 = vld [vmem:[%s1752 + $0x18] sm:$0xff]
    %3604 = vmatprep.subr.mxu0 %v1994
    %3605 = vmatpush1.msra.mxu0 %v1993
    %3606 = vmatprep.subr.mxu0 %v1990
    %3607 = vmatpush1.msra.mxu0 %v1989
    %3608 = vmatprep.subr.mxu0 %v1986
    %3609 = vmatpush1.msra.mxu0 %v1985
    %3610 = vmatprep.subr.mxu0 %v1982
    %3611 = vmatpush1.msra.mxu0 %v1981
    %3612 = vmatprep.subr.mxu0 %v1978
    %3613 = vmatpush1.msra.mxu0 %v1977
    %3614 = vmatprep.subr.mxu0 %v1974
    %3615 = vmatpush1.msra.mxu0 %v1973
    %3616 = vmatprep.subr.mxu0 %v1970
    %3617 = vmatpush1.msra.mxu0 %v1969
    %3618 = vmatprep.subr.mxu0 %v1966
    %3619 = vmatpush1.msra.mxu0 %v1965
    %3620 = vmatprep.subr.mxu0 %v1962
    %3621 = vmatpush1.msra.mxu0 %v1961
    %3622 = vmatprep.subr.mxu0 %v1958
    %3623 = vmatpush1.msra.mxu0 %v1957
    %3624 = vmatprep.subr.mxu0 %v1954
    %3625 = vmatpush1.msra.mxu0 %v1953
    %3626 = vmatprep.subr.mxu0 %v1950
    %3627 = vmatpush1.msra.mxu0 %v1949
    %3628 = vmatprep.subr.mxu0 %v1946
    %3629 = vmatpush1.msra.mxu0 %v1945
    %3630 = vmatprep.subr.mxu0 %v1942
    %3631 = vmatpush1.msra.mxu0 %v1941
    %3632 = vmatprep.subr.mxu0 %v1938
    %3633 = vmatpush1.msra.mxu0 %v1937
    %3634 = vmatprep.subr.mxu0 %v1934
    %3635 = vmatpush1.msra.mxu0 %v1933
    %3636 = vmatprep.subr.mxu0 0.0
    %3637 = vmatpush2.msra.mxu0 0.0
    %3638 = vmatprep.subr.mxu0 0.0
    %3639 = vmatpush2.msra.mxu0 0.0
    %3640 = vmatprep.subr.mxu0 0.0
    %3641 = vmatpush2.msra.mxu0 0.0
    %3642 = vmatprep.subr.mxu0 0.0
    %3643 = vmatpush2.msra.mxu0 0.0
    %3644 = vmatprep.subr.mxu0 0.0
    %3645 = vmatpush2.msra.mxu0 0.0
    %3646 = vmatprep.subr.mxu0 0.0
    %3647 = vmatpush2.msra.mxu0 0.0
    %3648 = vmatprep.subr.mxu0 0.0
    %3649 = vmatpush2.msra.mxu0 0.0
    %3650 = vmatprep.subr.mxu0 0.0
    %3651 = vmatpush2.msra.mxu0 0.0
    %3652 = vmatprep.subr.mxu0 0.0
    %3653 = vmatpush2.msra.mxu0 0.0
    %3654 = vmatprep.subr.mxu0 0.0
    %3655 = vmatpush2.msra.mxu0 0.0
    %3656 = vmatprep.subr.mxu0 0.0
    %3657 = vmatpush2.msra.mxu0 0.0
    %3658 = vmatprep.subr.mxu0 0.0
    %3659 = vmatpush2.msra.mxu0 0.0
    %3660 = vmatprep.subr.mxu0 0.0
    %3661 = vmatpush2.msra.mxu0 0.0
    %3662 = vmatprep.subr.mxu0 0.0
    %3663 = vmatpush2.msra.mxu0 0.0
    %3664 = vmatprep.subr.mxu0 0.0
    %3665 = vmatpush2.msra.mxu0 0.0
    %3666 = vmatprep.subr.mxu0 0.0
    %3667 = vmatpush2.msra.mxu0 0.0
    %3668 = vmatprep.mubr.f32.mxu0 0.0
    %3669 = vmatmul.mubr.f32.gmra.mxu0 %v3599
    %v3670 = vpop.f32.mrf.mxu0
    %v3671 = vadd.f32 0.0, %v3670
    %v3672 = vpop.f32.mrf.mxu0
    %v3673 = vadd.f32 0.0, %v3672
    %3674 = vdwg.mxu0
    %3675 = vmatprep.subr.mxu0 %v1996
    %3676 = vmatpush1.msra.mxu0 %v1995
    %3677 = vmatprep.subr.mxu0 %v1992
    %3678 = vmatpush1.msra.mxu0 %v1991
    %3679 = vmatprep.subr.mxu0 %v1988
    %3680 = vmatpush1.msra.mxu0 %v1987
    %3681 = vmatprep.subr.mxu0 %v1984
    %3682 = vmatpush1.msra.mxu0 %v1983
    %3683 = vmatprep.subr.mxu0 %v1980
    %3684 = vmatpush1.msra.mxu0 %v1979
    %3685 = vmatprep.subr.mxu0 %v1976
    %3686 = vmatpush1.msra.mxu0 %v1975
    %3687 = vmatprep.subr.mxu0 %v1972
    %3688 = vmatpush1.msra.mxu0 %v1971
    %3689 = vmatprep.subr.mxu0 %v1968
    %3690 = vmatpush1.msra.mxu0 %v1967
    %3691 = vmatprep.subr.mxu0 %v1964
    %3692 = vmatpush1.msra.mxu0 %v1963
    %3693 = vmatprep.subr.mxu0 %v1960
    %3694 = vmatpush1.msra.mxu0 %v1959
    %3695 = vmatprep.subr.mxu0 %v1956
    %3696 = vmatpush1.msra.mxu0 %v1955
    %3697 = vmatprep.subr.mxu0 %v1952
    %3698 = vmatpush1.msra.mxu0 %v1951
    %3699 = vmatprep.subr.mxu0 %v1948
    %3700 = vmatpush1.msra.mxu0 %v1947
    %3701 = vmatprep.subr.mxu0 %v1944
    %3702 = vmatpush1.msra.mxu0 %v1943
    %3703 = vmatprep.subr.mxu0 %v1940
    %3704 = vmatpush1.msra.mxu0 %v1939
    %3705 = vmatprep.subr.mxu0 %v1936
    %3706 = vmatpush1.msra.mxu0 %v1935
    %3707 = vmatprep.subr.mxu0 0.0
    %3708 = vmatpush2.msra.mxu0 0.0
    %3709 = vmatprep.subr.mxu0 0.0
    %3710 = vmatpush2.msra.mxu0 0.0
    %3711 = vmatprep.subr.mxu0 0.0
    %3712 = vmatpush2.msra.mxu0 0.0
    %3713 = vmatprep.subr.mxu0 0.0
    %3714 = vmatpush2.msra.mxu0 0.0
    %3715 = vmatprep.subr.mxu0 0.0
    %3716 = vmatpush2.msra.mxu0 0.0
    %3717 = vmatprep.subr.mxu0 0.0
    %3718 = vmatpush2.msra.mxu0 0.0
    %3719 = vmatprep.subr.mxu0 0.0
    %3720 = vmatpush2.msra.mxu0 0.0
    %3721 = vmatprep.subr.mxu0 0.0
    %3722 = vmatpush2.msra.mxu0 0.0
    %3723 = vmatprep.subr.mxu0 0.0
    %3724 = vmatpush2.msra.mxu0 0.0
    %3725 = vmatprep.subr.mxu0 0.0
    %3726 = vmatpush2.msra.mxu0 0.0
    %3727 = vmatprep.subr.mxu0 0.0
    %3728 = vmatpush2.msra.mxu0 0.0
    %3729 = vmatprep.subr.mxu0 0.0
    %3730 = vmatpush2.msra.mxu0 0.0
    %3731 = vmatprep.subr.mxu0 0.0
    %3732 = vmatpush2.msra.mxu0 0.0
    %3733 = vmatprep.subr.mxu0 0.0
    %3734 = vmatpush2.msra.mxu0 0.0
    %3735 = vmatprep.subr.mxu0 0.0
    %3736 = vmatpush2.msra.mxu0 0.0
    %3737 = vmatprep.subr.mxu0 0.0
    %3738 = vmatpush2.msra.mxu0 0.0
    %3739 = vmatprep.mubr.f32.mxu0 0.0
    %3740 = vmatmul.mubr.f32.gmra.mxu0 %v3599
    %v3741 = vpop.f32.mrf.mxu0
    %v3742 = vadd.f32 0.0, %v3741
    %v3743 = vpop.f32.mrf.mxu0
    %v3744 = vadd.f32 0.0, %v3743
    %3745 = vdwg.mxu0
    %v3746 = vadd.f32 %v3600, %v3671
    %v3747 = vadd.f32 %v3601, %v3673
    %v3748 = vadd.f32 %v3602, %v3742
    %v3749 = vadd.f32 %v3603, %v3744
    %v3750 = vxor.u32 %v3746, 2147483648
    %v3751 = vmul.f32 %v3750, 1.442695
    %v3752 = vpow.pop %v3751
    %v3753 = vadd.f32 %v3752, 1.0
    %v3754 = vrcp.pop %v3753
    %v3755 = vmul.f32 1.0, %v3754
    %v3756 = vxor.u32 %v3747, 2147483648
    %v3757 = vmul.f32 %v3756, 1.442695
    %v3758 = vpow.pop %v3757
    %v3759 = vadd.f32 %v3758, 1.0
    %v3760 = vrcp.pop %v3759
    %v3761 = vmul.f32 1.0, %v3760
    %v3762 = vtanh.pop %v3748
    %v3763 = vxor.u32 %v3749, 2147483648
    %v3764 = vmul.f32 %v3763, 1.442695
    %v3765 = vpow.pop %v3764
    %v3766 = vadd.f32 %v3765, 1.0
    %v3767 = vrcp.pop %v3766
    %v3768 = vmul.f32 1.0, %v3767
    %v3769 = vld [vmem:[#allocation5] sm:$0xff]
    %v3770 = vmul.f32 %v3761, %v3769
    %v3771 = vmul.f32 %v3755, %v3762
    %v3772 = vadd.f32 %v3770, %v3771
    %v3773 = vtanh.pop %v3772
    %v3774 = vmul.f32 %v3768, %v3773
    %3775 = vst [vmem:[#allocation4] sm:$0xff] %v3774
    %3776 = vst [vmem:[#allocation5] sm:$0xff] %v3772
    %v3777 = vld [vmem:[#allocation4] sm:$0xff]
    %v3778 = vld [vmem:[%s4] sm:$0xff]
    %v3779 = vld [vmem:[%s4 + $0x8] sm:$0xff]
    %v3780 = vld [vmem:[%s4 + $0x10] sm:$0xff]
    %v3781 = vld [vmem:[%s4 + $0x18] sm:$0xff]
    %v3782 = vld [vmem:[%s4 + $0x20] sm:$0xff]
    %v3783 = vld [vmem:[%s4 + $0x28] sm:$0xff]
    %v3784 = vld [vmem:[%s4 + $0x30] sm:$0xff]
    %v3785 = vld [vmem:[%s4 + $0x38] sm:$0xff]
    %v3786 = vld [vmem:[%s4 + $0x40] sm:$0xff]
    %v3787 = vld [vmem:[%s4 + $0x48] sm:$0xff]
    %v3788 = vld [vmem:[%s4 + $0x50] sm:$0xff]
    %v3789 = vld [vmem:[%s4 + $0x58] sm:$0xff]
    %v3790 = vld [vmem:[%s4 + $0x60] sm:$0xff]
    %v3791 = vld [vmem:[%s4 + $0x68] sm:$0xff]
    %v3792 = vld [vmem:[%s4 + $0x70] sm:$0xff]
    %v3793 = vld [vmem:[%s4 + $0x78] sm:$0xff]
    %v3794 = vld [vmem:[%s5] sm:$0x1]
    %v3796 = vlaneseq
    %v3797 = vshrl.u32 %v3796, 7
    %v3798 = vsub.s32 0, %v3797
    %v3799 = vrot.slane %v3794, %v3798
    %3801 = vmatprep.subr.mxu0 0.0
    %3802 = vmatpush1.msra.mxu0 %v3793
    %3803 = vmatprep.subr.mxu0 0.0
    %3804 = vmatpush1.msra.mxu0 %v3792
    %3805 = vmatprep.subr.mxu0 0.0
    %3806 = vmatpush1.msra.mxu0 %v3791
    %3807 = vmatprep.subr.mxu0 0.0
    %3808 = vmatpush1.msra.mxu0 %v3790
    %3809 = vmatprep.subr.mxu0 0.0
    %3810 = vmatpush1.msra.mxu0 %v3789
    %3811 = vmatprep.subr.mxu0 0.0
    %3812 = vmatpush1.msra.mxu0 %v3788
    %3813 = vmatprep.subr.mxu0 0.0
    %3814 = vmatpush1.msra.mxu0 %v3787
    %3815 = vmatprep.subr.mxu0 0.0
    %3816 = vmatpush1.msra.mxu0 %v3786
    %3817 = vmatprep.subr.mxu0 0.0
    %3818 = vmatpush1.msra.mxu0 %v3785
    %3819 = vmatprep.subr.mxu0 0.0
    %3820 = vmatpush1.msra.mxu0 %v3784
    %3821 = vmatprep.subr.mxu0 0.0
    %3822 = vmatpush1.msra.mxu0 %v3783
    %3823 = vmatprep.subr.mxu0 0.0
    %3824 = vmatpush1.msra.mxu0 %v3782
    %3825 = vmatprep.subr.mxu0 0.0
    %3826 = vmatpush1.msra.mxu0 %v3781
    %3827 = vmatprep.subr.mxu0 0.0
    %3828 = vmatpush1.msra.mxu0 %v3780
    %3829 = vmatprep.subr.mxu0 0.0
    %3830 = vmatpush1.msra.mxu0 %v3779
    %3831 = vmatprep.subr.mxu0 0.0
    %3832 = vmatpush1.msra.mxu0 %v3778
    %3833 = vmatprep.subr.mxu0 0.0
    %3834 = vmatpush2.msra.mxu0 0.0
    %3835 = vmatprep.subr.mxu0 0.0
    %3836 = vmatpush2.msra.mxu0 0.0
    %3837 = vmatprep.subr.mxu0 0.0
    %3838 = vmatpush2.msra.mxu0 0.0
    %3839 = vmatprep.subr.mxu0 0.0
    %3840 = vmatpush2.msra.mxu0 0.0
    %3841 = vmatprep.subr.mxu0 0.0
    %3842 = vmatpush2.msra.mxu0 0.0
    %3843 = vmatprep.subr.mxu0 0.0
    %3844 = vmatpush2.msra.mxu0 0.0
    %3845 = vmatprep.subr.mxu0 0.0
    %3846 = vmatpush2.msra.mxu0 0.0
    %3847 = vmatprep.subr.mxu0 0.0
    %3848 = vmatpush2.msra.mxu0 0.0
    %3849 = vmatprep.subr.mxu0 0.0
    %3850 = vmatpush2.msra.mxu0 0.0
    %3851 = vmatprep.subr.mxu0 0.0
    %3852 = vmatpush2.msra.mxu0 0.0
    %3853 = vmatprep.subr.mxu0 0.0
    %3854 = vmatpush2.msra.mxu0 0.0
    %3855 = vmatprep.subr.mxu0 0.0
    %3856 = vmatpush2.msra.mxu0 0.0
    %3857 = vmatprep.subr.mxu0 0.0
    %3858 = vmatpush2.msra.mxu0 0.0
    %3859 = vmatprep.subr.mxu0 0.0
    %3860 = vmatpush2.msra.mxu0 0.0
    %3861 = vmatprep.subr.mxu0 0.0
    %3862 = vmatpush2.msra.mxu0 0.0
    %3863 = vmatprep.subr.mxu0 0.0
    %3864 = vmatpush2.msra.mxu0 0.0
    %3865 = vmatprep.mubr.f32.mxu0 0.0
    %3866 = vmatmul.mubr.f32.gmra.mxu0 %v3777
    %v3867 = vpop.f32.mrf.mxu0
    %v3868 = vadd.f32 %v3799, %v3867
    %v3869 = vpop.f32.mrf.mxu0
    %3870 = vdwg.mxu0
    %vm3871 = vcmask 31744
    %3872 = vst.msk [vmem:[%s6] sm:$0xff] %vm3871, %v3868
    // Predicated region
    $region34: #{tpu_custom_call.1} parent=1 // pred_check
      _
    $region35: #{tpu_custom_call.1} parent=1 // pred_check_branch
      %3874 = sbr.rel (0) target = $region37
    $region36: #{tpu_custom_call.1} parent=1 // pred_region
      _
    $region37: #{tpu_custom_call.1} parent=1 // pred_fallthru
      _
    // Predicated region
    $region38: #{tpu_custom_call.1} parent=1 // pred_check
      _
    $region39: #{tpu_custom_call.1} parent=1 // pred_check_branch
      %3876 = sbr.rel (0) target = $region41
    $region40: #{tpu_custom_call.1} parent=1 // pred_region
      _
    $region41: #{tpu_custom_call.1} parent=1 // pred_fallthru
      _
    %3877 = vsyncpa [#allocation7], 1
    %3878 = vsyncpa [#allocation9], 1

</llo_original>
